<compile_context>
chip_gen: v7x
topology: tpu7x:2x2x1
jax: 0.10.0
libtpu: 0.0.40
codegen_flags: <defaults>
</compile_context>

<pallas_src>
import jax
import jax.numpy as jnp
import numpy as np
from jax import lax
from jax.experimental import pallas as pl
from jax.experimental.pallas import tpu as pltpu

# ---- small, module-consistent shapes -------------------------------------
B = 2        # batch
T_SRC = 8    # source sequence length
T_TGT = 8    # target sequence length
H = 32       # hidden size (== embedding size)
V_SRC = 16   # source vocab
V_TGT = 16   # target vocab
V_PAD = 128  # lane-dense padded logits width


# ---------------------------------------------------------------------------
# Single fused kernel: embedding lookup -> encoder RNN -> decoder RNN ->
# hoisted dot-product attention -> lane-dense output projection.
# ---------------------------------------------------------------------------
def seq2seq_kernel(x_tok_ref, y_tok_ref, emb_src_ref, emb_tgt_ref,
                   enc_wih_ref, enc_whh_ref, enc_bias_ref,
                   dec_wih_ref, dec_whh_ref, dec_bias_ref,
                   wout_ref, bout_ref,
                   logits_ref):
    f32 = jnp.float32

    # ---- in-kernel embedding gather: one-hot @ table (MXU) ----------------
    oh_x = (x_tok_ref[...] == lax.broadcasted_iota(
        jnp.int32, (B * T_SRC, V_SRC), 1)).astype(f32)        # (B*T_SRC, V_SRC)
    x_emb = jnp.dot(oh_x, emb_src_ref[...],
                    preferred_element_type=f32)               # (B*T_SRC, H)

    oh_y = (y_tok_ref[...] == lax.broadcasted_iota(
        jnp.int32, (B * T_TGT, V_TGT), 1)).astype(f32)        # (B*T_TGT, V_TGT)
    y_emb = jnp.dot(oh_y, emb_tgt_ref[...],
                    preferred_element_type=f32)               # (B*T_TGT, H)

    # ---- hoisted, batched input projections (bias added once) -------------
    xW = jnp.dot(x_emb, enc_wih_ref[...],
                 preferred_element_type=f32) + enc_bias_ref[...]   # (B*T_SRC, H)
    yW = jnp.dot(y_emb, dec_wih_ref[...],
                 preferred_element_type=f32) + dec_bias_ref[...]   # (B*T_TGT, H)

    enc_whh = enc_whh_ref[...]       # (H, H)
    dec_whh = dec_whh_ref[...]       # (H, H)
    wout = wout_ref[...]             # (2H, V_PAD)
    bout = bout_ref[...]             # (1,  V_PAD)

    # ---- per-batch serial chains (independent -> scheduler interleaves) ---
    for b in range(B):
        xW_b = xW[b * T_SRC:(b + 1) * T_SRC, :]               # (T_SRC, H) slab
        yW_b = yW[b * T_TGT:(b + 1) * T_TGT, :]                # (T_TGT, H) slab

        # encoder recurrence (only h @ W_hh + tanh is serial)
        h = jnp.zeros((1, H), f32)
        enc_rows = []
        for t in range(T_SRC):
            h = jnp.tanh(xW_b[t:t + 1, :]
                         + jnp.dot(h, enc_whh, preferred_element_type=f32))
            enc_rows.append(h)
        enc = jnp.concatenate(enc_rows, axis=0)                # (T_SRC, H)

        # decoder recurrence, PURE tanh (attention hoisted out of the loop)
        dec_rows = []
        for t in range(T_TGT):
            h = jnp.tanh(yW_b[t:t + 1, :]
                         + jnp.dot(h, dec_whh, preferred_element_type=f32))
            dec_rows.append(h)
        hdec = jnp.concatenate(dec_rows, axis=0)               # (T_TGT, H)

        # ---- hoisted attention for all decoder steps at once (MXU) --------
        # scores[tq, ts] = <hdec[tq], enc[ts]>   (contract H, no transpose op)
        scores = lax.dot_general(hdec, enc, (((1,), (1,)), ((), ())),
                                 preferred_element_type=f32)   # (T_TGT, T_SRC)
        m = jnp.max(scores, axis=1, keepdims=True)
        p = jnp.exp(scores - m)
        attn = p / jnp.sum(p, axis=1, keepdims=True)           # exact divide
        ctx = jnp.dot(attn, enc, preferred_element_type=f32)   # (T_TGT, H)

        # ---- lane-dense output projection: split W_out instead of concat --
        logits_b = (jnp.dot(hdec, wout[:H, :], preferred_element_type=f32)
                    + jnp.dot(ctx, wout[H:, :], preferred_element_type=f32)
                    + bout)                                    # (T_TGT, V_PAD)

        # one full (8, 128) unmasked tile store per batch row
        logits_ref[b * T_TGT:(b + 1) * T_TGT, :] = logits_b.astype(logits_ref.dtype)


# ---------------------------------------------------------------------------
# Full model forward (mirrors RnnMachineTranslate.forward):
#   result_time_steps, encoder_final_hidden = encoder(x)
#   decoder_outputs = decoder(result_time_steps, encoder_final_hidden, y)
# ---------------------------------------------------------------------------
def rnn_machine_translate(params, x_tokens, y_tokens):
    # batch-major flatten of the token ids: a FREE row-major reshape (no transpose)
    x_tok = x_tokens.reshape(B * T_SRC, 1).astype(jnp.int32)
    y_tok = y_tokens.reshape(B * T_TGT, 1).astype(jnp.int32)

    # lane-dense padding of the output projection (zeros beyond V_TGT)
    wout_pad = jnp.pad(params['dec_w_out'], ((0, 0), (0, V_PAD - V_TGT)))
    bout_pad = jnp.pad(params['dec_b_out'], ((0, 0), (0, V_PAD - V_TGT)))

    vmem = lambda: pl.BlockSpec(memory_space=pltpu.MemorySpace.VMEM)
    logits_pad = pl.pallas_call(
        seq2seq_kernel,
        out_shape=jax.ShapeDtypeStruct((B * T_TGT, V_PAD), jnp.float32),
        in_specs=[vmem() for _ in range(12)],
        out_specs=vmem(),
    )(x_tok, y_tok,
      params['emb_src'], params['emb_tgt'],
      params['enc_w_ih'], params['enc_w_hh'], params['enc_b'],
      params['dec_w_ih'], params['dec_w_hh'], params['dec_b'],
      wout_pad, bout_pad)

    # (B*T, V_PAD) batch-major -> (T, B, V_TGT)
    return jnp.transpose(
        logits_pad.reshape(B, T_TGT, V_PAD)[:, :, :V_TGT], (1, 0, 2))


# ---------------------------------------------------------------------------
# Pure-JAX reference (for correctness check).
# ---------------------------------------------------------------------------
def reference(params, x_tokens, y_tokens):
    x_emb = jnp.transpose(jnp.take(params['emb_src'], x_tokens, axis=0), (1, 0, 2))
    y_emb = jnp.transpose(jnp.take(params['emb_tgt'], y_tokens, axis=0), (1, 0, 2))

    def enc_step(h, x_t):
        h_new = jnp.tanh(x_t @ params['enc_w_ih'] + h @ params['enc_w_hh']
                         + params['enc_b'][0])
        return h_new, h_new

    h_fin, enc_out = lax.scan(enc_step, jnp.zeros((B, H), jnp.float32), x_emb)
    enc_bth = jnp.transpose(enc_out, (1, 0, 2))

    def dec_step(h, y_t):
        h_new = jnp.tanh(y_t @ params['dec_w_ih'] + h @ params['dec_w_hh']
                         + params['dec_b'][0])
        scores = jnp.einsum('bh,bth->bt', h_new, enc_bth)
        attn = jax.nn.softmax(scores, axis=-1)
        ctx = jnp.einsum('bt,bth->bh', attn, enc_bth)
        logits = jnp.concatenate([h_new, ctx], -1) @ params['dec_w_out'] \
            + params['dec_b_out'][0]
        return h_new, logits

    _, logits = lax.scan(dec_step, h_fin, y_emb)
    return logits


# ---------------------------------------------------------------------------
def init_params(key):
    k = 1.0 / np.sqrt(H)
    keys = jax.random.split(key, 10)

    def u(kk, shape, scale=k):
        return jax.random.uniform(kk, shape, jnp.float32, -scale, scale)

    return {
        'emb_src': u(keys[0], (V_SRC, H), 1.0),
        'emb_tgt': u(keys[1], (V_TGT, H), 1.0),
        # weights stored pre-transposed (in_dim, out_dim) so kernels do x @ W
        'enc_w_ih': u(keys[2], (H, H)),
        'enc_w_hh': u(keys[3], (H, H)),
        'enc_b':    u(keys[4], (1, H)),
        'dec_w_ih': u(keys[5], (H, H)),
        'dec_w_hh': u(keys[6], (H, H)),
        'dec_b':    u(keys[7], (1, H)),
        'dec_w_out': u(keys[8], (2 * H, V_TGT)),
        'dec_b_out': u(keys[9], (1, V_TGT)),
    }


if __name__ == "__main__":
    key = jax.random.PRNGKey(0)
    k_p, k_x, k_y = jax.random.split(key, 3)
    params = init_params(k_p)

    x_tokens = jax.random.randint(k_x, (B, T_SRC), 0, V_SRC, dtype=jnp.int32)
    y_tokens = jax.random.randint(k_y, (B, T_TGT), 0, V_TGT, dtype=jnp.int32)

    out = jax.jit(rnn_machine_translate)(params, x_tokens, y_tokens)
    out = jax.block_until_ready(out)

    ref = jax.block_until_ready(jax.jit(reference)(params, x_tokens, y_tokens))
    # exact softmax divide -> tight tolerance
    np.testing.assert_allclose(np.asarray(out), np.asarray(ref),
                               rtol=1e-4, atol=1e-5)

    print("KERNEL_OK")
</pallas_src>

<mosaic_0001>
module attributes {stable_mosaic.version = 11 : i64} {
  func.func @seq2seq_kernel(%arg0: memref<16x1xi32, #tpu.memory_space<vmem>>, %arg1: memref<16x1xi32, #tpu.memory_space<vmem>>, %arg2: memref<16x32xf32, #tpu.memory_space<vmem>>, %arg3: memref<16x32xf32, #tpu.memory_space<vmem>>, %arg4: memref<32x32xf32, #tpu.memory_space<vmem>>, %arg5: memref<32x32xf32, #tpu.memory_space<vmem>>, %arg6: memref<1x32xf32, #tpu.memory_space<vmem>>, %arg7: memref<32x32xf32, #tpu.memory_space<vmem>>, %arg8: memref<32x32xf32, #tpu.memory_space<vmem>>, %arg9: memref<1x32xf32, #tpu.memory_space<vmem>>, %arg10: memref<64x128xf32, #tpu.memory_space<vmem>>, %arg11: memref<1x128xf32, #tpu.memory_space<vmem>>, %arg12: memref<16x128xf32, #tpu.memory_space<vmem>>) attributes {dimension_semantics = [], scalar_prefetch = 0 : i64, scratch_operands = 0 : i64, tpu.core_type = #tpu.core_type<tc>} {
    %c0 = arith.constant 0 : index
    %c0_0 = arith.constant 0 : index
    %0 = vector.load %arg0[%c0, %c0_0] : memref<16x1xi32, #tpu.memory_space<vmem>>, vector<16x1xi32>
    %1 = tpu.iota {dimensions = array<i32: 1>} : vector<16x16xi32>
    %2 = vector.broadcast %0 : vector<16x1xi32> to vector<16x16xi32>
    %3 = arith.cmpi eq, %2, %1 : vector<16x16xi32>
    %4 = arith.extui %3 : vector<16x16xi1> to vector<16x16xi32>
    %5 = arith.sitofp %4 : vector<16x16xi32> to vector<16x16xf32>
    %c0_1 = arith.constant 0 : index
    %c0_2 = arith.constant 0 : index
    %6 = vector.load %arg2[%c0_1, %c0_2] : memref<16x32xf32, #tpu.memory_space<vmem>>, vector<16x32xf32>
    %cst = arith.constant dense<0.000000e+00> : vector<16x32xf32>
    %7 = tpu.matmul %5, %6, %cst {dimension_numbers = #tpu.dot_dimension_numbers<[1], [0], [0], [1], [0, 0, 1, 1], [], []>} : vector<16x16xf32>, vector<16x32xf32>, vector<16x32xf32> -> vector<16x32xf32>
    %c0_3 = arith.constant 0 : index
    %c0_4 = arith.constant 0 : index
    %8 = vector.load %arg1[%c0_3, %c0_4] : memref<16x1xi32, #tpu.memory_space<vmem>>, vector<16x1xi32>
    %9 = tpu.iota {dimensions = array<i32: 1>} : vector<16x16xi32>
    %10 = vector.broadcast %8 : vector<16x1xi32> to vector<16x16xi32>
    %11 = arith.cmpi eq, %10, %9 : vector<16x16xi32>
    %12 = arith.extui %11 : vector<16x16xi1> to vector<16x16xi32>
    %13 = arith.sitofp %12 : vector<16x16xi32> to vector<16x16xf32>
    %c0_5 = arith.constant 0 : index
    %c0_6 = arith.constant 0 : index
    %14 = vector.load %arg3[%c0_5, %c0_6] : memref<16x32xf32, #tpu.memory_space<vmem>>, vector<16x32xf32>
    %cst_7 = arith.constant dense<0.000000e+00> : vector<16x32xf32>
    %15 = tpu.matmul %13, %14, %cst_7 {dimension_numbers = #tpu.dot_dimension_numbers<[1], [0], [0], [1], [0, 0, 1, 1], [], []>} : vector<16x16xf32>, vector<16x32xf32>, vector<16x32xf32> -> vector<16x32xf32>
    %c0_8 = arith.constant 0 : index
    %c0_9 = arith.constant 0 : index
    %16 = vector.load %arg4[%c0_8, %c0_9] : memref<32x32xf32, #tpu.memory_space<vmem>>, vector<32x32xf32>
    %cst_10 = arith.constant dense<0.000000e+00> : vector<16x32xf32>
    %17 = tpu.matmul %7, %16, %cst_10 {dimension_numbers = #tpu.dot_dimension_numbers<[1], [0], [0], [1], [0, 0, 1, 1], [], []>} : vector<16x32xf32>, vector<32x32xf32>, vector<16x32xf32> -> vector<16x32xf32>
    %c0_11 = arith.constant 0 : index
    %c0_12 = arith.constant 0 : index
    %18 = vector.load %arg6[%c0_11, %c0_12] : memref<1x32xf32, #tpu.memory_space<vmem>>, vector<1x32xf32>
    %19 = vector.broadcast %18 : vector<1x32xf32> to vector<16x32xf32>
    %20 = arith.addf %17, %19 : vector<16x32xf32>
    %c0_13 = arith.constant 0 : index
    %c0_14 = arith.constant 0 : index
    %21 = vector.load %arg7[%c0_13, %c0_14] : memref<32x32xf32, #tpu.memory_space<vmem>>, vector<32x32xf32>
    %cst_15 = arith.constant dense<0.000000e+00> : vector<16x32xf32>
    %22 = tpu.matmul %15, %21, %cst_15 {dimension_numbers = #tpu.dot_dimension_numbers<[1], [0], [0], [1], [0, 0, 1, 1], [], []>} : vector<16x32xf32>, vector<32x32xf32>, vector<16x32xf32> -> vector<16x32xf32>
    %c0_16 = arith.constant 0 : index
    %c0_17 = arith.constant 0 : index
    %23 = vector.load %arg9[%c0_16, %c0_17] : memref<1x32xf32, #tpu.memory_space<vmem>>, vector<1x32xf32>
    %24 = vector.broadcast %23 : vector<1x32xf32> to vector<16x32xf32>
    %25 = arith.addf %22, %24 : vector<16x32xf32>
    %c0_18 = arith.constant 0 : index
    %c0_19 = arith.constant 0 : index
    %26 = vector.load %arg5[%c0_18, %c0_19] : memref<32x32xf32, #tpu.memory_space<vmem>>, vector<32x32xf32>
    %c0_20 = arith.constant 0 : index
    %c0_21 = arith.constant 0 : index
    %27 = vector.load %arg8[%c0_20, %c0_21] : memref<32x32xf32, #tpu.memory_space<vmem>>, vector<32x32xf32>
    %c0_22 = arith.constant 0 : index
    %c0_23 = arith.constant 0 : index
    %28 = vector.load %arg10[%c0_22, %c0_23] : memref<64x128xf32, #tpu.memory_space<vmem>>, vector<64x128xf32>
    %c0_24 = arith.constant 0 : index
    %c0_25 = arith.constant 0 : index
    %29 = vector.load %arg11[%c0_24, %c0_25] : memref<1x128xf32, #tpu.memory_space<vmem>>, vector<1x128xf32>
    %30 = vector.extract_strided_slice %20 {offsets = [0, 0], sizes = [8, 32], strides = [1, 1]} : vector<16x32xf32> to vector<8x32xf32>
    %31 = vector.extract_strided_slice %25 {offsets = [0, 0], sizes = [8, 32], strides = [1, 1]} : vector<16x32xf32> to vector<8x32xf32>
    %cst_26 = arith.constant 0.000000e+00 : f32
    %32 = vector.broadcast %cst_26 : f32 to vector<1x32xf32>
    %33 = vector.extract_strided_slice %30 {offsets = [0, 0], sizes = [1, 32], strides = [1, 1]} : vector<8x32xf32> to vector<1x32xf32>
    %cst_27 = arith.constant dense<0.000000e+00> : vector<1x32xf32>
    %34 = tpu.matmul %32, %26, %cst_27 {dimension_numbers = #tpu.dot_dimension_numbers<[1], [0], [0], [1], [0, 0, 1, 1], [], []>} : vector<1x32xf32>, vector<32x32xf32>, vector<1x32xf32> -> vector<1x32xf32>
    %35 = arith.addf %33, %34 : vector<1x32xf32>
    %36 = math.tanh %35 : vector<1x32xf32>
    %37 = vector.extract_strided_slice %30 {offsets = [1, 0], sizes = [1, 32], strides = [1, 1]} : vector<8x32xf32> to vector<1x32xf32>
    %cst_28 = arith.constant dense<0.000000e+00> : vector<1x32xf32>
    %38 = tpu.matmul %36, %26, %cst_28 {dimension_numbers = #tpu.dot_dimension_numbers<[1], [0], [0], [1], [0, 0, 1, 1], [], []>} : vector<1x32xf32>, vector<32x32xf32>, vector<1x32xf32> -> vector<1x32xf32>
    %39 = arith.addf %37, %38 : vector<1x32xf32>
    %40 = math.tanh %39 : vector<1x32xf32>
    %41 = vector.extract_strided_slice %30 {offsets = [2, 0], sizes = [1, 32], strides = [1, 1]} : vector<8x32xf32> to vector<1x32xf32>
    %cst_29 = arith.constant dense<0.000000e+00> : vector<1x32xf32>
    %42 = tpu.matmul %40, %26, %cst_29 {dimension_numbers = #tpu.dot_dimension_numbers<[1], [0], [0], [1], [0, 0, 1, 1], [], []>} : vector<1x32xf32>, vector<32x32xf32>, vector<1x32xf32> -> vector<1x32xf32>
    %43 = arith.addf %41, %42 : vector<1x32xf32>
    %44 = math.tanh %43 : vector<1x32xf32>
    %45 = vector.extract_strided_slice %30 {offsets = [3, 0], sizes = [1, 32], strides = [1, 1]} : vector<8x32xf32> to vector<1x32xf32>
    %cst_30 = arith.constant dense<0.000000e+00> : vector<1x32xf32>
    %46 = tpu.matmul %44, %26, %cst_30 {dimension_numbers = #tpu.dot_dimension_numbers<[1], [0], [0], [1], [0, 0, 1, 1], [], []>} : vector<1x32xf32>, vector<32x32xf32>, vector<1x32xf32> -> vector<1x32xf32>
    %47 = arith.addf %45, %46 : vector<1x32xf32>
    %48 = math.tanh %47 : vector<1x32xf32>
    %49 = vector.extract_strided_slice %30 {offsets = [4, 0], sizes = [1, 32], strides = [1, 1]} : vector<8x32xf32> to vector<1x32xf32>
    %cst_31 = arith.constant dense<0.000000e+00> : vector<1x32xf32>
    %50 = tpu.matmul %48, %26, %cst_31 {dimension_numbers = #tpu.dot_dimension_numbers<[1], [0], [0], [1], [0, 0, 1, 1], [], []>} : vector<1x32xf32>, vector<32x32xf32>, vector<1x32xf32> -> vector<1x32xf32>
    %51 = arith.addf %49, %50 : vector<1x32xf32>
    %52 = math.tanh %51 : vector<1x32xf32>
    %53 = vector.extract_strided_slice %30 {offsets = [5, 0], sizes = [1, 32], strides = [1, 1]} : vector<8x32xf32> to vector<1x32xf32>
    %cst_32 = arith.constant dense<0.000000e+00> : vector<1x32xf32>
    %54 = tpu.matmul %52, %26, %cst_32 {dimension_numbers = #tpu.dot_dimension_numbers<[1], [0], [0], [1], [0, 0, 1, 1], [], []>} : vector<1x32xf32>, vector<32x32xf32>, vector<1x32xf32> -> vector<1x32xf32>
    %55 = arith.addf %53, %54 : vector<1x32xf32>
    %56 = math.tanh %55 : vector<1x32xf32>
    %57 = vector.extract_strided_slice %30 {offsets = [6, 0], sizes = [1, 32], strides = [1, 1]} : vector<8x32xf32> to vector<1x32xf32>
    %cst_33 = arith.constant dense<0.000000e+00> : vector<1x32xf32>
    %58 = tpu.matmul %56, %26, %cst_33 {dimension_numbers = #tpu.dot_dimension_numbers<[1], [0], [0], [1], [0, 0, 1, 1], [], []>} : vector<1x32xf32>, vector<32x32xf32>, vector<1x32xf32> -> vector<1x32xf32>
    %59 = arith.addf %57, %58 : vector<1x32xf32>
    %60 = math.tanh %59 : vector<1x32xf32>
    %61 = vector.extract_strided_slice %30 {offsets = [7, 0], sizes = [1, 32], strides = [1, 1]} : vector<8x32xf32> to vector<1x32xf32>
    %cst_34 = arith.constant dense<0.000000e+00> : vector<1x32xf32>
    %62 = tpu.matmul %60, %26, %cst_34 {dimension_numbers = #tpu.dot_dimension_numbers<[1], [0], [0], [1], [0, 0, 1, 1], [], []>} : vector<1x32xf32>, vector<32x32xf32>, vector<1x32xf32> -> vector<1x32xf32>
    %63 = arith.addf %61, %62 : vector<1x32xf32>
    %64 = math.tanh %63 : vector<1x32xf32>
    %65 = tpu.concatenate %36, %40, %44, %48, %52, %56, %60, %64 in 0 : vector<1x32xf32>, vector<1x32xf32>, vector<1x32xf32>, vector<1x32xf32>, vector<1x32xf32>, vector<1x32xf32>, vector<1x32xf32>, vector<1x32xf32> -> vector<8x32xf32>
    %66 = vector.extract_strided_slice %31 {offsets = [0, 0], sizes = [1, 32], strides = [1, 1]} : vector<8x32xf32> to vector<1x32xf32>
    %cst_35 = arith.constant dense<0.000000e+00> : vector<1x32xf32>
    %67 = tpu.matmul %64, %27, %cst_35 {dimension_numbers = #tpu.dot_dimension_numbers<[1], [0], [0], [1], [0, 0, 1, 1], [], []>} : vector<1x32xf32>, vector<32x32xf32>, vector<1x32xf32> -> vector<1x32xf32>
    %68 = arith.addf %66, %67 : vector<1x32xf32>
    %69 = math.tanh %68 : vector<1x32xf32>
    %70 = vector.extract_strided_slice %31 {offsets = [1, 0], sizes = [1, 32], strides = [1, 1]} : vector<8x32xf32> to vector<1x32xf32>
    %cst_36 = arith.constant dense<0.000000e+00> : vector<1x32xf32>
    %71 = tpu.matmul %69, %27, %cst_36 {dimension_numbers = #tpu.dot_dimension_numbers<[1], [0], [0], [1], [0, 0, 1, 1], [], []>} : vector<1x32xf32>, vector<32x32xf32>, vector<1x32xf32> -> vector<1x32xf32>
    %72 = arith.addf %70, %71 : vector<1x32xf32>
    %73 = math.tanh %72 : vector<1x32xf32>
    %74 = vector.extract_strided_slice %31 {offsets = [2, 0], sizes = [1, 32], strides = [1, 1]} : vector<8x32xf32> to vector<1x32xf32>
    %cst_37 = arith.constant dense<0.000000e+00> : vector<1x32xf32>
    %75 = tpu.matmul %73, %27, %cst_37 {dimension_numbers = #tpu.dot_dimension_numbers<[1], [0], [0], [1], [0, 0, 1, 1], [], []>} : vector<1x32xf32>, vector<32x32xf32>, vector<1x32xf32> -> vector<1x32xf32>
    %76 = arith.addf %74, %75 : vector<1x32xf32>
    %77 = math.tanh %76 : vector<1x32xf32>
    %78 = vector.extract_strided_slice %31 {offsets = [3, 0], sizes = [1, 32], strides = [1, 1]} : vector<8x32xf32> to vector<1x32xf32>
    %cst_38 = arith.constant dense<0.000000e+00> : vector<1x32xf32>
    %79 = tpu.matmul %77, %27, %cst_38 {dimension_numbers = #tpu.dot_dimension_numbers<[1], [0], [0], [1], [0, 0, 1, 1], [], []>} : vector<1x32xf32>, vector<32x32xf32>, vector<1x32xf32> -> vector<1x32xf32>
    %80 = arith.addf %78, %79 : vector<1x32xf32>
    %81 = math.tanh %80 : vector<1x32xf32>
    %82 = vector.extract_strided_slice %31 {offsets = [4, 0], sizes = [1, 32], strides = [1, 1]} : vector<8x32xf32> to vector<1x32xf32>
    %cst_39 = arith.constant dense<0.000000e+00> : vector<1x32xf32>
    %83 = tpu.matmul %81, %27, %cst_39 {dimension_numbers = #tpu.dot_dimension_numbers<[1], [0], [0], [1], [0, 0, 1, 1], [], []>} : vector<1x32xf32>, vector<32x32xf32>, vector<1x32xf32> -> vector<1x32xf32>
    %84 = arith.addf %82, %83 : vector<1x32xf32>
    %85 = math.tanh %84 : vector<1x32xf32>
    %86 = vector.extract_strided_slice %31 {offsets = [5, 0], sizes = [1, 32], strides = [1, 1]} : vector<8x32xf32> to vector<1x32xf32>
    %cst_40 = arith.constant dense<0.000000e+00> : vector<1x32xf32>
    %87 = tpu.matmul %85, %27, %cst_40 {dimension_numbers = #tpu.dot_dimension_numbers<[1], [0], [0], [1], [0, 0, 1, 1], [], []>} : vector<1x32xf32>, vector<32x32xf32>, vector<1x32xf32> -> vector<1x32xf32>
    %88 = arith.addf %86, %87 : vector<1x32xf32>
    %89 = math.tanh %88 : vector<1x32xf32>
    %90 = vector.extract_strided_slice %31 {offsets = [6, 0], sizes = [1, 32], strides = [1, 1]} : vector<8x32xf32> to vector<1x32xf32>
    %cst_41 = arith.constant dense<0.000000e+00> : vector<1x32xf32>
    %91 = tpu.matmul %89, %27, %cst_41 {dimension_numbers = #tpu.dot_dimension_numbers<[1], [0], [0], [1], [0, 0, 1, 1], [], []>} : vector<1x32xf32>, vector<32x32xf32>, vector<1x32xf32> -> vector<1x32xf32>
    %92 = arith.addf %90, %91 : vector<1x32xf32>
    %93 = math.tanh %92 : vector<1x32xf32>
    %94 = vector.extract_strided_slice %31 {offsets = [7, 0], sizes = [1, 32], strides = [1, 1]} : vector<8x32xf32> to vector<1x32xf32>
    %cst_42 = arith.constant dense<0.000000e+00> : vector<1x32xf32>
    %95 = tpu.matmul %93, %27, %cst_42 {dimension_numbers = #tpu.dot_dimension_numbers<[1], [0], [0], [1], [0, 0, 1, 1], [], []>} : vector<1x32xf32>, vector<32x32xf32>, vector<1x32xf32> -> vector<1x32xf32>
    %96 = arith.addf %94, %95 : vector<1x32xf32>
    %97 = math.tanh %96 : vector<1x32xf32>
    %98 = tpu.concatenate %69, %73, %77, %81, %85, %89, %93, %97 in 0 : vector<1x32xf32>, vector<1x32xf32>, vector<1x32xf32>, vector<1x32xf32>, vector<1x32xf32>, vector<1x32xf32>, vector<1x32xf32>, vector<1x32xf32> -> vector<8x32xf32>
    %cst_43 = arith.constant dense<0.000000e+00> : vector<8x8xf32>
    %99 = tpu.matmul %98, %65, %cst_43 {dimension_numbers = #tpu.dot_dimension_numbers<[1], [1], [0], [0], [0, 0, 1, 0], [], []>} : vector<8x32xf32>, vector<8x32xf32>, vector<8x8xf32> -> vector<8x8xf32>
    %cst_44 = arith.constant dense<0xFF800000> : vector<8xf32>
    %100 = vector.multi_reduction <maximumf>, %99, %cst_44 [1] : vector<8x8xf32> to vector<8xf32>
    %101 = vector.shape_cast %100 : vector<8xf32> to vector<8x1xf32>
    %102 = vector.broadcast %101 : vector<8x1xf32> to vector<8x8xf32>
    %103 = arith.subf %99, %102 : vector<8x8xf32>
    %104 = math.exp %103 : vector<8x8xf32>
    %cst_45 = arith.constant dense<0.000000e+00> : vector<8xf32>
    %105 = vector.multi_reduction <add>, %104, %cst_45 [1] : vector<8x8xf32> to vector<8xf32>
    %106 = vector.shape_cast %105 : vector<8xf32> to vector<8x1xf32>
    %107 = vector.broadcast %106 : vector<8x1xf32> to vector<8x8xf32>
    %108 = arith.divf %104, %107 : vector<8x8xf32>
    %cst_46 = arith.constant dense<0.000000e+00> : vector<8x32xf32>
    %109 = tpu.matmul %108, %65, %cst_46 {dimension_numbers = #tpu.dot_dimension_numbers<[1], [0], [0], [1], [0, 0, 1, 1], [], []>} : vector<8x8xf32>, vector<8x32xf32>, vector<8x32xf32> -> vector<8x32xf32>
    %110 = vector.extract_strided_slice %28 {offsets = [0, 0], sizes = [32, 128], strides = [1, 1]} : vector<64x128xf32> to vector<32x128xf32>
    %cst_47 = arith.constant dense<0.000000e+00> : vector<8x128xf32>
    %111 = tpu.matmul %98, %110, %cst_47 {dimension_numbers = #tpu.dot_dimension_numbers<[1], [0], [0], [1], [0, 0, 1, 1], [], []>} : vector<8x32xf32>, vector<32x128xf32>, vector<8x128xf32> -> vector<8x128xf32>
    %112 = vector.extract_strided_slice %28 {offsets = [32, 0], sizes = [32, 128], strides = [1, 1]} : vector<64x128xf32> to vector<32x128xf32>
    %cst_48 = arith.constant dense<0.000000e+00> : vector<8x128xf32>
    %113 = tpu.matmul %109, %112, %cst_48 {dimension_numbers = #tpu.dot_dimension_numbers<[1], [0], [0], [1], [0, 0, 1, 1], [], []>} : vector<8x32xf32>, vector<32x128xf32>, vector<8x128xf32> -> vector<8x128xf32>
    %114 = arith.addf %111, %113 : vector<8x128xf32>
    %115 = vector.broadcast %29 : vector<1x128xf32> to vector<8x128xf32>
    %116 = arith.addf %114, %115 : vector<8x128xf32>
    %c0_49 = arith.constant 0 : index
    %c0_50 = arith.constant 0 : index
    %117 = vector.load %arg12[%c0_49, %c0_50] : memref<16x128xf32, #tpu.memory_space<vmem>>, vector<8x128xf32>
    tpu.vector_store %arg12[%c0_49, %c0_50], %116 {strides = array<i32>} : memref<16x128xf32, #tpu.memory_space<vmem>>, vector<8x128xf32>,
    %118 = vector.extract_strided_slice %20 {offsets = [8, 0], sizes = [8, 32], strides = [1, 1]} : vector<16x32xf32> to vector<8x32xf32>
    %119 = vector.extract_strided_slice %25 {offsets = [8, 0], sizes = [8, 32], strides = [1, 1]} : vector<16x32xf32> to vector<8x32xf32>
    %cst_51 = arith.constant 0.000000e+00 : f32
    %120 = vector.broadcast %cst_51 : f32 to vector<1x32xf32>
    %121 = vector.extract_strided_slice %118 {offsets = [0, 0], sizes = [1, 32], strides = [1, 1]} : vector<8x32xf32> to vector<1x32xf32>
    %cst_52 = arith.constant dense<0.000000e+00> : vector<1x32xf32>
    %122 = tpu.matmul %120, %26, %cst_52 {dimension_numbers = #tpu.dot_dimension_numbers<[1], [0], [0], [1], [0, 0, 1, 1], [], []>} : vector<1x32xf32>, vector<32x32xf32>, vector<1x32xf32> -> vector<1x32xf32>
    %123 = arith.addf %121, %122 : vector<1x32xf32>
    %124 = math.tanh %123 : vector<1x32xf32>
    %125 = vector.extract_strided_slice %118 {offsets = [1, 0], sizes = [1, 32], strides = [1, 1]} : vector<8x32xf32> to vector<1x32xf32>
    %cst_53 = arith.constant dense<0.000000e+00> : vector<1x32xf32>
    %126 = tpu.matmul %124, %26, %cst_53 {dimension_numbers = #tpu.dot_dimension_numbers<[1], [0], [0], [1], [0, 0, 1, 1], [], []>} : vector<1x32xf32>, vector<32x32xf32>, vector<1x32xf32> -> vector<1x32xf32>
    %127 = arith.addf %125, %126 : vector<1x32xf32>
    %128 = math.tanh %127 : vector<1x32xf32>
    %129 = vector.extract_strided_slice %118 {offsets = [2, 0], sizes = [1, 32], strides = [1, 1]} : vector<8x32xf32> to vector<1x32xf32>
    %cst_54 = arith.constant dense<0.000000e+00> : vector<1x32xf32>
    %130 = tpu.matmul %128, %26, %cst_54 {dimension_numbers = #tpu.dot_dimension_numbers<[1], [0], [0], [1], [0, 0, 1, 1], [], []>} : vector<1x32xf32>, vector<32x32xf32>, vector<1x32xf32> -> vector<1x32xf32>
    %131 = arith.addf %129, %130 : vector<1x32xf32>
    %132 = math.tanh %131 : vector<1x32xf32>
    %133 = vector.extract_strided_slice %118 {offsets = [3, 0], sizes = [1, 32], strides = [1, 1]} : vector<8x32xf32> to vector<1x32xf32>
    %cst_55 = arith.constant dense<0.000000e+00> : vector<1x32xf32>
    %134 = tpu.matmul %132, %26, %cst_55 {dimension_numbers = #tpu.dot_dimension_numbers<[1], [0], [0], [1], [0, 0, 1, 1], [], []>} : vector<1x32xf32>, vector<32x32xf32>, vector<1x32xf32> -> vector<1x32xf32>
    %135 = arith.addf %133, %134 : vector<1x32xf32>
    %136 = math.tanh %135 : vector<1x32xf32>
    %137 = vector.extract_strided_slice %118 {offsets = [4, 0], sizes = [1, 32], strides = [1, 1]} : vector<8x32xf32> to vector<1x32xf32>
    %cst_56 = arith.constant dense<0.000000e+00> : vector<1x32xf32>
    %138 = tpu.matmul %136, %26, %cst_56 {dimension_numbers = #tpu.dot_dimension_numbers<[1], [0], [0], [1], [0, 0, 1, 1], [], []>} : vector<1x32xf32>, vector<32x32xf32>, vector<1x32xf32> -> vector<1x32xf32>
    %139 = arith.addf %137, %138 : vector<1x32xf32>
    %140 = math.tanh %139 : vector<1x32xf32>
    %141 = vector.extract_strided_slice %118 {offsets = [5, 0], sizes = [1, 32], strides = [1, 1]} : vector<8x32xf32> to vector<1x32xf32>
    %cst_57 = arith.constant dense<0.000000e+00> : vector<1x32xf32>
    %142 = tpu.matmul %140, %26, %cst_57 {dimension_numbers = #tpu.dot_dimension_numbers<[1], [0], [0], [1], [0, 0, 1, 1], [], []>} : vector<1x32xf32>, vector<32x32xf32>, vector<1x32xf32> -> vector<1x32xf32>
    %143 = arith.addf %141, %142 : vector<1x32xf32>
    %144 = math.tanh %143 : vector<1x32xf32>
    %145 = vector.extract_strided_slice %118 {offsets = [6, 0], sizes = [1, 32], strides = [1, 1]} : vector<8x32xf32> to vector<1x32xf32>
    %cst_58 = arith.constant dense<0.000000e+00> : vector<1x32xf32>
    %146 = tpu.matmul %144, %26, %cst_58 {dimension_numbers = #tpu.dot_dimension_numbers<[1], [0], [0], [1], [0, 0, 1, 1], [], []>} : vector<1x32xf32>, vector<32x32xf32>, vector<1x32xf32> -> vector<1x32xf32>
    %147 = arith.addf %145, %146 : vector<1x32xf32>
    %148 = math.tanh %147 : vector<1x32xf32>
    %149 = vector.extract_strided_slice %118 {offsets = [7, 0], sizes = [1, 32], strides = [1, 1]} : vector<8x32xf32> to vector<1x32xf32>
    %cst_59 = arith.constant dense<0.000000e+00> : vector<1x32xf32>
    %150 = tpu.matmul %148, %26, %cst_59 {dimension_numbers = #tpu.dot_dimension_numbers<[1], [0], [0], [1], [0, 0, 1, 1], [], []>} : vector<1x32xf32>, vector<32x32xf32>, vector<1x32xf32> -> vector<1x32xf32>
    %151 = arith.addf %149, %150 : vector<1x32xf32>
    %152 = math.tanh %151 : vector<1x32xf32>
    %153 = tpu.concatenate %124, %128, %132, %136, %140, %144, %148, %152 in 0 : vector<1x32xf32>, vector<1x32xf32>, vector<1x32xf32>, vector<1x32xf32>, vector<1x32xf32>, vector<1x32xf32>, vector<1x32xf32>, vector<1x32xf32> -> vector<8x32xf32>
    %154 = vector.extract_strided_slice %119 {offsets = [0, 0], sizes = [1, 32], strides = [1, 1]} : vector<8x32xf32> to vector<1x32xf32>
    %cst_60 = arith.constant dense<0.000000e+00> : vector<1x32xf32>
    %155 = tpu.matmul %152, %27, %cst_60 {dimension_numbers = #tpu.dot_dimension_numbers<[1], [0], [0], [1], [0, 0, 1, 1], [], []>} : vector<1x32xf32>, vector<32x32xf32>, vector<1x32xf32> -> vector<1x32xf32>
    %156 = arith.addf %154, %155 : vector<1x32xf32>
    %157 = math.tanh %156 : vector<1x32xf32>
    %158 = vector.extract_strided_slice %119 {offsets = [1, 0], sizes = [1, 32], strides = [1, 1]} : vector<8x32xf32> to vector<1x32xf32>
    %cst_61 = arith.constant dense<0.000000e+00> : vector<1x32xf32>
    %159 = tpu.matmul %157, %27, %cst_61 {dimension_numbers = #tpu.dot_dimension_numbers<[1], [0], [0], [1], [0, 0, 1, 1], [], []>} : vector<1x32xf32>, vector<32x32xf32>, vector<1x32xf32> -> vector<1x32xf32>
    %160 = arith.addf %158, %159 : vector<1x32xf32>
    %161 = math.tanh %160 : vector<1x32xf32>
    %162 = vector.extract_strided_slice %119 {offsets = [2, 0], sizes = [1, 32], strides = [1, 1]} : vector<8x32xf32> to vector<1x32xf32>
    %cst_62 = arith.constant dense<0.000000e+00> : vector<1x32xf32>
    %163 = tpu.matmul %161, %27, %cst_62 {dimension_numbers = #tpu.dot_dimension_numbers<[1], [0], [0], [1], [0, 0, 1, 1], [], []>} : vector<1x32xf32>, vector<32x32xf32>, vector<1x32xf32> -> vector<1x32xf32>
    %164 = arith.addf %162, %163 : vector<1x32xf32>
    %165 = math.tanh %164 : vector<1x32xf32>
    %166 = vector.extract_strided_slice %119 {offsets = [3, 0], sizes = [1, 32], strides = [1, 1]} : vector<8x32xf32> to vector<1x32xf32>
    %cst_63 = arith.constant dense<0.000000e+00> : vector<1x32xf32>
    %167 = tpu.matmul %165, %27, %cst_63 {dimension_numbers = #tpu.dot_dimension_numbers<[1], [0], [0], [1], [0, 0, 1, 1], [], []>} : vector<1x32xf32>, vector<32x32xf32>, vector<1x32xf32> -> vector<1x32xf32>
    %168 = arith.addf %166, %167 : vector<1x32xf32>
    %169 = math.tanh %168 : vector<1x32xf32>
    %170 = vector.extract_strided_slice %119 {offsets = [4, 0], sizes = [1, 32], strides = [1, 1]} : vector<8x32xf32> to vector<1x32xf32>
    %cst_64 = arith.constant dense<0.000000e+00> : vector<1x32xf32>
    %171 = tpu.matmul %169, %27, %cst_64 {dimension_numbers = #tpu.dot_dimension_numbers<[1], [0], [0], [1], [0, 0, 1, 1], [], []>} : vector<1x32xf32>, vector<32x32xf32>, vector<1x32xf32> -> vector<1x32xf32>
    %172 = arith.addf %170, %171 : vector<1x32xf32>
    %173 = math.tanh %172 : vector<1x32xf32>
    %174 = vector.extract_strided_slice %119 {offsets = [5, 0], sizes = [1, 32], strides = [1, 1]} : vector<8x32xf32> to vector<1x32xf32>
    %cst_65 = arith.constant dense<0.000000e+00> : vector<1x32xf32>
    %175 = tpu.matmul %173, %27, %cst_65 {dimension_numbers = #tpu.dot_dimension_numbers<[1], [0], [0], [1], [0, 0, 1, 1], [], []>} : vector<1x32xf32>, vector<32x32xf32>, vector<1x32xf32> -> vector<1x32xf32>
    %176 = arith.addf %174, %175 : vector<1x32xf32>
    %177 = math.tanh %176 : vector<1x32xf32>
    %178 = vector.extract_strided_slice %119 {offsets = [6, 0], sizes = [1, 32], strides = [1, 1]} : vector<8x32xf32> to vector<1x32xf32>
    %cst_66 = arith.constant dense<0.000000e+00> : vector<1x32xf32>
    %179 = tpu.matmul %177, %27, %cst_66 {dimension_numbers = #tpu.dot_dimension_numbers<[1], [0], [0], [1], [0, 0, 1, 1], [], []>} : vector<1x32xf32>, vector<32x32xf32>, vector<1x32xf32> -> vector<1x32xf32>
    %180 = arith.addf %178, %179 : vector<1x32xf32>
    %181 = math.tanh %180 : vector<1x32xf32>
    %182 = vector.extract_strided_slice %119 {offsets = [7, 0], sizes = [1, 32], strides = [1, 1]} : vector<8x32xf32> to vector<1x32xf32>
    %cst_67 = arith.constant dense<0.000000e+00> : vector<1x32xf32>
    %183 = tpu.matmul %181, %27, %cst_67 {dimension_numbers = #tpu.dot_dimension_numbers<[1], [0], [0], [1], [0, 0, 1, 1], [], []>} : vector<1x32xf32>, vector<32x32xf32>, vector<1x32xf32> -> vector<1x32xf32>
    %184 = arith.addf %182, %183 : vector<1x32xf32>
    %185 = math.tanh %184 : vector<1x32xf32>
    %186 = tpu.concatenate %157, %161, %165, %169, %173, %177, %181, %185 in 0 : vector<1x32xf32>, vector<1x32xf32>, vector<1x32xf32>, vector<1x32xf32>, vector<1x32xf32>, vector<1x32xf32>, vector<1x32xf32>, vector<1x32xf32> -> vector<8x32xf32>
    %cst_68 = arith.constant dense<0.000000e+00> : vector<8x8xf32>
    %187 = tpu.matmul %186, %153, %cst_68 {dimension_numbers = #tpu.dot_dimension_numbers<[1], [1], [0], [0], [0, 0, 1, 0], [], []>} : vector<8x32xf32>, vector<8x32xf32>, vector<8x8xf32> -> vector<8x8xf32>
    %cst_69 = arith.constant dense<0xFF800000> : vector<8xf32>
    %188 = vector.multi_reduction <maximumf>, %187, %cst_69 [1] : vector<8x8xf32> to vector<8xf32>
    %189 = vector.shape_cast %188 : vector<8xf32> to vector<8x1xf32>
    %190 = vector.broadcast %189 : vector<8x1xf32> to vector<8x8xf32>
    %191 = arith.subf %187, %190 : vector<8x8xf32>
    %192 = math.exp %191 : vector<8x8xf32>
    %cst_70 = arith.constant dense<0.000000e+00> : vector<8xf32>
    %193 = vector.multi_reduction <add>, %192, %cst_70 [1] : vector<8x8xf32> to vector<8xf32>
    %194 = vector.shape_cast %193 : vector<8xf32> to vector<8x1xf32>
    %195 = vector.broadcast %194 : vector<8x1xf32> to vector<8x8xf32>
    %196 = arith.divf %192, %195 : vector<8x8xf32>
    %cst_71 = arith.constant dense<0.000000e+00> : vector<8x32xf32>
    %197 = tpu.matmul %196, %153, %cst_71 {dimension_numbers = #tpu.dot_dimension_numbers<[1], [0], [0], [1], [0, 0, 1, 1], [], []>} : vector<8x8xf32>, vector<8x32xf32>, vector<8x32xf32> -> vector<8x32xf32>
    %198 = vector.extract_strided_slice %28 {offsets = [0, 0], sizes = [32, 128], strides = [1, 1]} : vector<64x128xf32> to vector<32x128xf32>
    %cst_72 = arith.constant dense<0.000000e+00> : vector<8x128xf32>
    %199 = tpu.matmul %186, %198, %cst_72 {dimension_numbers = #tpu.dot_dimension_numbers<[1], [0], [0], [1], [0, 0, 1, 1], [], []>} : vector<8x32xf32>, vector<32x128xf32>, vector<8x128xf32> -> vector<8x128xf32>
    %200 = vector.extract_strided_slice %28 {offsets = [32, 0], sizes = [32, 128], strides = [1, 1]} : vector<64x128xf32> to vector<32x128xf32>
    %cst_73 = arith.constant dense<0.000000e+00> : vector<8x128xf32>
    %201 = tpu.matmul %197, %200, %cst_73 {dimension_numbers = #tpu.dot_dimension_numbers<[1], [0], [0], [1], [0, 0, 1, 1], [], []>} : vector<8x32xf32>, vector<32x128xf32>, vector<8x128xf32> -> vector<8x128xf32>
    %202 = arith.addf %199, %201 : vector<8x128xf32>
    %203 = vector.broadcast %29 : vector<1x128xf32> to vector<8x128xf32>
    %204 = arith.addf %202, %203 : vector<8x128xf32>
    %c8 = arith.constant 8 : index
    %c0_74 = arith.constant 0 : index
    %205 = vector.load %arg12[%c8, %c0_74] : memref<16x128xf32, #tpu.memory_space<vmem>>, vector<8x128xf32>
    tpu.vector_store %arg12[%c8, %c0_74], %204 {strides = array<i32>} : memref<16x128xf32, #tpu.memory_space<vmem>>, vector<8x128xf32>,
    return
  }
}

</mosaic_0001>

<llo_original>
// kernel: rnn_machine_translate.1
$region0: #{rnn_machine_translate.1}
  #allocation0 [shape = 'u32[]', space=smem, size = 0x4, offset = 0x4, fixed_abs, tag = 'smem constant byte address 0x4 - core index']
  #allocation1 [shape = 'u32[144,128]{1,0:T(1,128)}', space=vmem, size = 0x12000, scoped, tag = 'internal scratch']
  %s0 = inlined_call_operand.vmem [shape: s32[16,1], index: 0, kind: input, shape index: {}]
  %s1 = inlined_call_operand.vmem [shape: s32[16,1], index: 1, kind: input, shape index: {}]
  %s2 = inlined_call_operand.vmem [shape: f32[16,32], index: 2, kind: input, shape index: {}]
  %s3 = inlined_call_operand.vmem [shape: f32[16,32], index: 3, kind: input, shape index: {}]
  %s4 = inlined_call_operand.vmem [shape: f32[32,32], index: 4, kind: input, shape index: {}]
  %s5 = inlined_call_operand.vmem [shape: f32[32,32], index: 5, kind: input, shape index: {}]
  %s6 = inlined_call_operand.vmem [shape: f32[1,32], index: 6, kind: input, shape index: {}]
  %s7 = inlined_call_operand.vmem [shape: f32[32,32], index: 7, kind: input, shape index: {}]
  %s8 = inlined_call_operand.vmem [shape: f32[32,32], index: 8, kind: input, shape index: {}]
  %s9 = inlined_call_operand.vmem [shape: f32[1,32], index: 9, kind: input, shape index: {}]
  %s10 = inlined_call_operand.vmem [shape: f32[64,128], index: 10, kind: input, shape index: {}]
  %s11 = inlined_call_operand.vmem [shape: f32[1,128], index: 11, kind: input, shape index: {}]
  %s12 = inlined_call_operand.vmem [shape: f32[16,128], index: 12, kind: output, shape index: {}]
  %s13 = sld [smem:[#allocation0]]
  $region58: #{rnn_machine_translate.1} parent=0
    _
  %s15 = ssub.s32 1, %s13
  %s16 = scalar_select 0, %s15, %s13
  // Predicated region
  $region2: #{rnn_machine_translate.1} parent=0 // pred_check
    _
  $region3: #{rnn_machine_translate.1} parent=0 // pred_check_branch
    %18 = sbr.rel (0) target = $region5
  $region4: #{rnn_machine_translate.1} parent=0 // pred_region
    _
  $region5: #{rnn_machine_translate.1} parent=0 // pred_fallthru
    _
  // Predicated region
  $region6: #{rnn_machine_translate.1} parent=0 // pred_check
    _
  $region7: #{rnn_machine_translate.1} parent=0 // pred_check_branch
    %20 = sbr.rel (0) target = $region9
  $region8: #{rnn_machine_translate.1} parent=0 // pred_region
    _
  $region9: #{rnn_machine_translate.1} parent=0 // pred_fallthru
    _
  // Predicated region
  $region10: #{rnn_machine_translate.1} parent=0 // pred_check
    _
  $region11: #{rnn_machine_translate.1} parent=0 // pred_check_branch
    %22 = sbr.rel (0) target = $region13
  $region12: #{rnn_machine_translate.1} parent=0 // pred_region
    _
  $region13: #{rnn_machine_translate.1} parent=0 // pred_fallthru
    _
  // Predicated region
  $region14: #{rnn_machine_translate.1} parent=0 // pred_check
    _
  $region15: #{rnn_machine_translate.1} parent=0 // pred_check_branch
    %24 = sbr.rel (0) target = $region17
  $region16: #{rnn_machine_translate.1} parent=0 // pred_region
    _
  $region17: #{rnn_machine_translate.1} parent=0 // pred_fallthru
    _
  // Predicated region
  $region18: #{rnn_machine_translate.1} parent=0 // pred_check
    _
  $region19: #{rnn_machine_translate.1} parent=0 // pred_check_branch
    %26 = sbr.rel (0) target = $region21
  $region20: #{rnn_machine_translate.1} parent=0 // pred_region
    _
  $region21: #{rnn_machine_translate.1} parent=0 // pred_fallthru
    _
  // Predicated region
  $region22: #{rnn_machine_translate.1} parent=0 // pred_check
    _
  $region23: #{rnn_machine_translate.1} parent=0 // pred_check_branch
    %28 = sbr.rel (0) target = $region25
  $region24: #{rnn_machine_translate.1} parent=0 // pred_region
    _
  $region25: #{rnn_machine_translate.1} parent=0 // pred_fallthru
    _
  // Predicated region
  $region26: #{rnn_machine_translate.1} parent=0 // pred_check
    _
  $region27: #{rnn_machine_translate.1} parent=0 // pred_check_branch
    %30 = sbr.rel (0) target = $region29
  $region28: #{rnn_machine_translate.1} parent=0 // pred_region
    _
  $region29: #{rnn_machine_translate.1} parent=0 // pred_fallthru
    _
  // Predicated region
  $region30: #{rnn_machine_translate.1} parent=0 // pred_check
    _
  $region31: #{rnn_machine_translate.1} parent=0 // pred_check_branch
    %32 = sbr.rel (0) target = $region33
  $region32: #{rnn_machine_translate.1} parent=0 // pred_region
    _
  $region33: #{rnn_machine_translate.1} parent=0 // pred_fallthru
    _
  // Predicated region
  $region34: #{rnn_machine_translate.1} parent=0 // pred_check
    _
  $region35: #{rnn_machine_translate.1} parent=0 // pred_check_branch
    %34 = sbr.rel (0) target = $region37
  $region36: #{rnn_machine_translate.1} parent=0 // pred_region
    _
  $region37: #{rnn_machine_translate.1} parent=0 // pred_fallthru
    _
  // Predicated region
  $region38: #{rnn_machine_translate.1} parent=0 // pred_check
    _
  $region39: #{rnn_machine_translate.1} parent=0 // pred_check_branch
    %36 = sbr.rel (0) target = $region41
  $region40: #{rnn_machine_translate.1} parent=0 // pred_region
    _
  $region41: #{rnn_machine_translate.1} parent=0 // pred_fallthru
    _
  // Predicated region
  $region42: #{rnn_machine_translate.1} parent=0 // pred_check
    _
  $region43: #{rnn_machine_translate.1} parent=0 // pred_check_branch
    %38 = sbr.rel (0) target = $region45
  $region44: #{rnn_machine_translate.1} parent=0 // pred_region
    _
  $region45: #{rnn_machine_translate.1} parent=0 // pred_fallthru
    _
  // Predicated region
  $region46: #{rnn_machine_translate.1} parent=0 // pred_check
    _
  $region47: #{rnn_machine_translate.1} parent=0 // pred_check_branch
    %40 = sbr.rel (0) target = $region49
  $region48: #{rnn_machine_translate.1} parent=0 // pred_region
    _
  $region49: #{rnn_machine_translate.1} parent=0 // pred_fallthru
    _
  %v41 = vld [vmem:[%s0] sm:$0xff]
  %v42 = vld [vmem:[%s0 + $0x8] sm:$0xff]
  %v43 = vlaneseq
  %v44 = vand.u32 %v43, 127
  %45 = vset.pattern.permute.xlu0 0
  %46 = vperm.xlu0 %45, %v41
  %v47 = vpop.permute.xlu0 %46
  %48 = vset.pattern.permute.xlu0 0
  %49 = vperm.xlu0 %48, %v42
  %v50 = vpop.permute.xlu0 %49
  %vm51 = vcmp.eq.s32.totalorder %v47, %v44
  %vm52 = vcmp.eq.s32.totalorder %v50, %v44
  %v53 = vsel %vm51, 1, 0
  %v54 = vsel %vm52, 1, 0
  %v55 = vcvt.s32.f32 %v53
  %v56 = vcvt.s32.f32 %v54
  %v57 = vld [vmem:[%s2] sm:$0xff]
  %v58 = vld [vmem:[%s2 + $0x8] sm:$0xff]
  %vm59 = vcmask 130048
  %v61 = vsel %vm59, %v55, 0
  %v64 = vsel %vm59, %v56, 0
  %66 = vmatprep.subr.mxu0 0.0
  %67 = vmatpush1.msra.mxu0 %v57
  %68 = vmatprep.subr.mxu0 0.0
  %69 = vmatpush1.msra.mxu0 %v58
  %70 = vmatprep.subr.mxu0 0.0
  %71 = vmatpush1.msra.mxu0 0.0
  %72 = vmatprep.subr.mxu0 0.0
  %73 = vmatpush1.msra.mxu0 0.0
  %74 = vmatprep.subr.mxu0 0.0
  %75 = vmatpush1.msra.mxu0 0.0
  %76 = vmatprep.subr.mxu0 0.0
  %77 = vmatpush1.msra.mxu0 0.0
  %78 = vmatprep.subr.mxu0 0.0
  %79 = vmatpush1.msra.mxu0 0.0
  %80 = vmatprep.subr.mxu0 0.0
  %81 = vmatpush1.msra.mxu0 0.0
  %82 = vmatprep.subr.mxu0 0.0
  %83 = vmatpush1.msra.mxu0 0.0
  %84 = vmatprep.subr.mxu0 0.0
  %85 = vmatpush1.msra.mxu0 0.0
  %86 = vmatprep.subr.mxu0 0.0
  %87 = vmatpush1.msra.mxu0 0.0
  %88 = vmatprep.subr.mxu0 0.0
  %89 = vmatpush1.msra.mxu0 0.0
  %90 = vmatprep.subr.mxu0 0.0
  %91 = vmatpush1.msra.mxu0 0.0
  %92 = vmatprep.subr.mxu0 0.0
  %93 = vmatpush1.msra.mxu0 0.0
  %94 = vmatprep.subr.mxu0 0.0
  %95 = vmatpush1.msra.mxu0 0.0
  %96 = vmatprep.subr.mxu0 0.0
  %97 = vmatpush1.msra.mxu0 0.0
  %98 = vmatprep.subr.mxu0 0.0
  %99 = vmatpush1.msra.mxu0 0.0
  %100 = vmatprep.subr.mxu0 0.0
  %101 = vmatpush1.msra.mxu0 0.0
  %102 = vmatprep.subr.mxu0 0.0
  %103 = vmatpush1.msra.mxu0 0.0
  %104 = vmatprep.subr.mxu0 0.0
  %105 = vmatpush1.msra.mxu0 0.0
  %106 = vmatprep.subr.mxu0 0.0
  %107 = vmatpush1.msra.mxu0 0.0
  %108 = vmatprep.subr.mxu0 0.0
  %109 = vmatpush1.msra.mxu0 0.0
  %110 = vmatprep.subr.mxu0 0.0
  %111 = vmatpush1.msra.mxu0 0.0
  %112 = vmatprep.subr.mxu0 0.0
  %113 = vmatpush1.msra.mxu0 0.0
  %114 = vmatprep.subr.mxu0 0.0
  %115 = vmatpush1.msra.mxu0 0.0
  %116 = vmatprep.subr.mxu0 0.0
  %117 = vmatpush1.msra.mxu0 0.0
  %118 = vmatprep.subr.mxu0 0.0
  %119 = vmatpush1.msra.mxu0 0.0
  %120 = vmatprep.subr.mxu0 0.0
  %121 = vmatpush1.msra.mxu0 0.0
  %122 = vmatprep.subr.mxu0 0.0
  %123 = vmatpush1.msra.mxu0 0.0
  %124 = vmatprep.subr.mxu0 0.0
  %125 = vmatpush1.msra.mxu0 0.0
  %126 = vmatprep.subr.mxu0 0.0
  %127 = vmatpush1.msra.mxu0 0.0
  %128 = vmatprep.subr.mxu0 0.0
  %129 = vmatpush1.msra.mxu0 0.0
  %130 = vmatprep.mubr.f32.mxu0 0.0
  %131 = vmatmul.mubr.f32.gmra.mrb[0].mxu0 %v61
  %v132 = vpop.f32.mrb[0].mxu0
  %v133 = vadd.f32 0.0, %v132
  %v134 = vpop.f32.mrb[0].mxu0
  %135 = vmatprep.mubr.f32.mxu0 0.0
  %136 = vmatmul.mubr.f32.gmra.mrb[0].mxu0 %v64
  %v137 = vpop.f32.mrb[0].mxu0
  %v138 = vadd.f32 0.0, %v137
  %v139 = vpop.f32.mrb[0].mxu0
  %140 = vdwg.mxu0
  %v141 = vld [vmem:[%s1] sm:$0xff]
  %v142 = vld [vmem:[%s1 + $0x8] sm:$0xff]
  %143 = vset.pattern.permute.xlu0 0
  %144 = vperm.xlu0 %143, %v141
  %v145 = vpop.permute.xlu0 %144
  %146 = vset.pattern.permute.xlu0 0
  %147 = vperm.xlu0 %146, %v142
  %v148 = vpop.permute.xlu0 %147
  %vm149 = vcmp.eq.s32.totalorder %v145, %v44
  %vm150 = vcmp.eq.s32.totalorder %v148, %v44
  %v151 = vsel %vm149, 1, 0
  %v152 = vsel %vm150, 1, 0
  %v153 = vcvt.s32.f32 %v151
  %v154 = vcvt.s32.f32 %v152
  %v155 = vld [vmem:[%s3] sm:$0xff]
  %v156 = vld [vmem:[%s3 + $0x8] sm:$0xff]
  %v158 = vsel %vm59, %v153, 0
  %v161 = vsel %vm59, %v154, 0
  %163 = vmatprep.subr.mxu0 0.0
  %164 = vmatpush1.msra.mxu0 %v155
  %165 = vmatprep.subr.mxu0 0.0
  %166 = vmatpush1.msra.mxu0 %v156
  %167 = vmatprep.subr.mxu0 0.0
  %168 = vmatpush1.msra.mxu0 0.0
  %169 = vmatprep.subr.mxu0 0.0
  %170 = vmatpush1.msra.mxu0 0.0
  %171 = vmatprep.subr.mxu0 0.0
  %172 = vmatpush1.msra.mxu0 0.0
  %173 = vmatprep.subr.mxu0 0.0
  %174 = vmatpush1.msra.mxu0 0.0
  %175 = vmatprep.subr.mxu0 0.0
  %176 = vmatpush1.msra.mxu0 0.0
  %177 = vmatprep.subr.mxu0 0.0
  %178 = vmatpush1.msra.mxu0 0.0
  %179 = vmatprep.subr.mxu0 0.0
  %180 = vmatpush1.msra.mxu0 0.0
  %181 = vmatprep.subr.mxu0 0.0
  %182 = vmatpush1.msra.mxu0 0.0
  %183 = vmatprep.subr.mxu0 0.0
  %184 = vmatpush1.msra.mxu0 0.0
  %185 = vmatprep.subr.mxu0 0.0
  %186 = vmatpush1.msra.mxu0 0.0
  %187 = vmatprep.subr.mxu0 0.0
  %188 = vmatpush1.msra.mxu0 0.0
  %189 = vmatprep.subr.mxu0 0.0
  %190 = vmatpush1.msra.mxu0 0.0
  %191 = vmatprep.subr.mxu0 0.0
  %192 = vmatpush1.msra.mxu0 0.0
  %193 = vmatprep.subr.mxu0 0.0
  %194 = vmatpush1.msra.mxu0 0.0
  %195 = vmatprep.subr.mxu0 0.0
  %196 = vmatpush1.msra.mxu0 0.0
  %197 = vmatprep.subr.mxu0 0.0
  %198 = vmatpush1.msra.mxu0 0.0
  %199 = vmatprep.subr.mxu0 0.0
  %200 = vmatpush1.msra.mxu0 0.0
  %201 = vmatprep.subr.mxu0 0.0
  %202 = vmatpush1.msra.mxu0 0.0
  %203 = vmatprep.subr.mxu0 0.0
  %204 = vmatpush1.msra.mxu0 0.0
  %205 = vmatprep.subr.mxu0 0.0
  %206 = vmatpush1.msra.mxu0 0.0
  %207 = vmatprep.subr.mxu0 0.0
  %208 = vmatpush1.msra.mxu0 0.0
  %209 = vmatprep.subr.mxu0 0.0
  %210 = vmatpush1.msra.mxu0 0.0
  %211 = vmatprep.subr.mxu0 0.0
  %212 = vmatpush1.msra.mxu0 0.0
  %213 = vmatprep.subr.mxu0 0.0
  %214 = vmatpush1.msra.mxu0 0.0
  %215 = vmatprep.subr.mxu0 0.0
  %216 = vmatpush1.msra.mxu0 0.0
  %217 = vmatprep.subr.mxu0 0.0
  %218 = vmatpush1.msra.mxu0 0.0
  %219 = vmatprep.subr.mxu0 0.0
  %220 = vmatpush1.msra.mxu0 0.0
  %221 = vmatprep.subr.mxu0 0.0
  %222 = vmatpush1.msra.mxu0 0.0
  %223 = vmatprep.subr.mxu0 0.0
  %224 = vmatpush1.msra.mxu0 0.0
  %225 = vmatprep.subr.mxu0 0.0
  %226 = vmatpush1.msra.mxu0 0.0
  %227 = vmatprep.mubr.f32.mxu0 0.0
  %228 = vmatmul.mubr.f32.gmra.mrb[0].mxu0 %v158
  %v229 = vpop.f32.mrb[0].mxu0
  %v230 = vadd.f32 0.0, %v229
  %v231 = vpop.f32.mrb[0].mxu0
  %232 = vmatprep.mubr.f32.mxu0 0.0
  %233 = vmatmul.mubr.f32.gmra.mrb[0].mxu0 %v161
  %v234 = vpop.f32.mrb[0].mxu0
  %v235 = vadd.f32 0.0, %v234
  %v236 = vpop.f32.mrb[0].mxu0
  %237 = vdwg.mxu0
  %v238 = vld [vmem:[%s4] sm:$0xff]
  %v239 = vld [vmem:[%s4 + $0x8] sm:$0xff]
  %v240 = vld [vmem:[%s4 + $0x10] sm:$0xff]
  %v241 = vld [vmem:[%s4 + $0x18] sm:$0xff]
  %v242 = vld [vmem:[%s6] sm:$0x1]
  %v244 = vlaneseq
  %v245 = vshrl.u32 %v244, 7
  %v246 = vsub.s32 0, %v245
  %v247 = vrot.slane %v242, %v246
  %vm249 = vcmask 261120
  %v251 = vsel %vm249, %v133, 0
  %v254 = vsel %vm249, %v138, 0
  %256 = vmatprep.subr.mxu0 0.0
  %257 = vmatpush1.msra.mxu0 %v238
  %258 = vmatprep.subr.mxu0 0.0
  %259 = vmatpush1.msra.mxu0 %v239
  %260 = vmatprep.subr.mxu0 0.0
  %261 = vmatpush1.msra.mxu0 %v240
  %262 = vmatprep.subr.mxu0 0.0
  %263 = vmatpush1.msra.mxu0 %v241
  %264 = vmatprep.subr.mxu0 0.0
  %265 = vmatpush1.msra.mxu0 0.0
  %266 = vmatprep.subr.mxu0 0.0
  %267 = vmatpush1.msra.mxu0 0.0
  %268 = vmatprep.subr.mxu0 0.0
  %269 = vmatpush1.msra.mxu0 0.0
  %270 = vmatprep.subr.mxu0 0.0
  %271 = vmatpush1.msra.mxu0 0.0
  %272 = vmatprep.subr.mxu0 0.0
  %273 = vmatpush1.msra.mxu0 0.0
  %274 = vmatprep.subr.mxu0 0.0
  %275 = vmatpush1.msra.mxu0 0.0
  %276 = vmatprep.subr.mxu0 0.0
  %277 = vmatpush1.msra.mxu0 0.0
  %278 = vmatprep.subr.mxu0 0.0
  %279 = vmatpush1.msra.mxu0 0.0
  %280 = vmatprep.subr.mxu0 0.0
  %281 = vmatpush1.msra.mxu0 0.0
  %282 = vmatprep.subr.mxu0 0.0
  %283 = vmatpush1.msra.mxu0 0.0
  %284 = vmatprep.subr.mxu0 0.0
  %285 = vmatpush1.msra.mxu0 0.0
  %286 = vmatprep.subr.mxu0 0.0
  %287 = vmatpush1.msra.mxu0 0.0
  %288 = vmatprep.subr.mxu0 0.0
  %289 = vmatpush1.msra.mxu0 0.0
  %290 = vmatprep.subr.mxu0 0.0
  %291 = vmatpush1.msra.mxu0 0.0
  %292 = vmatprep.subr.mxu0 0.0
  %293 = vmatpush1.msra.mxu0 0.0
  %294 = vmatprep.subr.mxu0 0.0
  %295 = vmatpush1.msra.mxu0 0.0
  %296 = vmatprep.subr.mxu0 0.0
  %297 = vmatpush1.msra.mxu0 0.0
  %298 = vmatprep.subr.mxu0 0.0
  %299 = vmatpush1.msra.mxu0 0.0
  %300 = vmatprep.subr.mxu0 0.0
  %301 = vmatpush1.msra.mxu0 0.0
  %302 = vmatprep.subr.mxu0 0.0
  %303 = vmatpush1.msra.mxu0 0.0
  %304 = vmatprep.subr.mxu0 0.0
  %305 = vmatpush1.msra.mxu0 0.0
  %306 = vmatprep.subr.mxu0 0.0
  %307 = vmatpush1.msra.mxu0 0.0
  %308 = vmatprep.subr.mxu0 0.0
  %309 = vmatpush1.msra.mxu0 0.0
  %310 = vmatprep.subr.mxu0 0.0
  %311 = vmatpush1.msra.mxu0 0.0
  %312 = vmatprep.subr.mxu0 0.0
  %313 = vmatpush1.msra.mxu0 0.0
  %314 = vmatprep.subr.mxu0 0.0
  %315 = vmatpush1.msra.mxu0 0.0
  %316 = vmatprep.subr.mxu0 0.0
  %317 = vmatpush1.msra.mxu0 0.0
  %318 = vmatprep.subr.mxu0 0.0
  %319 = vmatpush1.msra.mxu0 0.0
  %320 = vmatprep.mubr.f32.mxu0 0.0
  %321 = vmatmul.mubr.f32.gmra.mrb[0].mxu0 %v251
  %v322 = vpop.f32.mrb[0].mxu0
  %v323 = vadd.f32 %v247, %v322
  %v324 = vpop.f32.mrb[0].mxu0
  %325 = vmatprep.mubr.f32.mxu0 0.0
  %326 = vmatmul.mubr.f32.gmra.mrb[0].mxu0 %v254
  %v327 = vpop.f32.mrb[0].mxu0
  %v328 = vadd.f32 %v247, %v327
  %v329 = vpop.f32.mrb[0].mxu0
  %330 = vdwg.mxu0
  %v331 = vld [vmem:[%s7] sm:$0xff]
  %v332 = vld [vmem:[%s7 + $0x8] sm:$0xff]
  %v333 = vld [vmem:[%s7 + $0x10] sm:$0xff]
  %v334 = vld [vmem:[%s7 + $0x18] sm:$0xff]
  %v335 = vld [vmem:[%s9] sm:$0x1]
  %v337 = vlaneseq
  %v338 = vshrl.u32 %v337, 7
  %v339 = vsub.s32 0, %v338
  %v340 = vrot.slane %v335, %v339
  %v343 = vsel %vm249, %v230, 0
  %v346 = vsel %vm249, %v235, 0
  %348 = vmatprep.subr.mxu0 0.0
  %349 = vmatpush1.msra.mxu0 %v331
  %350 = vmatprep.subr.mxu0 0.0
  %351 = vmatpush1.msra.mxu0 %v332
  %352 = vmatprep.subr.mxu0 0.0
  %353 = vmatpush1.msra.mxu0 %v333
  %354 = vmatprep.subr.mxu0 0.0
  %355 = vmatpush1.msra.mxu0 %v334
  %356 = vmatprep.subr.mxu0 0.0
  %357 = vmatpush1.msra.mxu0 0.0
  %358 = vmatprep.subr.mxu0 0.0
  %359 = vmatpush1.msra.mxu0 0.0
  %360 = vmatprep.subr.mxu0 0.0
  %361 = vmatpush1.msra.mxu0 0.0
  %362 = vmatprep.subr.mxu0 0.0
  %363 = vmatpush1.msra.mxu0 0.0
  %364 = vmatprep.subr.mxu0 0.0
  %365 = vmatpush1.msra.mxu0 0.0
  %366 = vmatprep.subr.mxu0 0.0
  %367 = vmatpush1.msra.mxu0 0.0
  %368 = vmatprep.subr.mxu0 0.0
  %369 = vmatpush1.msra.mxu0 0.0
  %370 = vmatprep.subr.mxu0 0.0
  %371 = vmatpush1.msra.mxu0 0.0
  %372 = vmatprep.subr.mxu0 0.0
  %373 = vmatpush1.msra.mxu0 0.0
  %374 = vmatprep.subr.mxu0 0.0
  %375 = vmatpush1.msra.mxu0 0.0
  %376 = vmatprep.subr.mxu0 0.0
  %377 = vmatpush1.msra.mxu0 0.0
  %378 = vmatprep.subr.mxu0 0.0
  %379 = vmatpush1.msra.mxu0 0.0
  %380 = vmatprep.subr.mxu0 0.0
  %381 = vmatpush1.msra.mxu0 0.0
  %382 = vmatprep.subr.mxu0 0.0
  %383 = vmatpush1.msra.mxu0 0.0
  %384 = vmatprep.subr.mxu0 0.0
  %385 = vmatpush1.msra.mxu0 0.0
  %386 = vmatprep.subr.mxu0 0.0
  %387 = vmatpush1.msra.mxu0 0.0
  %388 = vmatprep.subr.mxu0 0.0
  %389 = vmatpush1.msra.mxu0 0.0
  %390 = vmatprep.subr.mxu0 0.0
  %391 = vmatpush1.msra.mxu0 0.0
  %392 = vmatprep.subr.mxu0 0.0
  %393 = vmatpush1.msra.mxu0 0.0
  %394 = vmatprep.subr.mxu0 0.0
  %395 = vmatpush1.msra.mxu0 0.0
  %396 = vmatprep.subr.mxu0 0.0
  %397 = vmatpush1.msra.mxu0 0.0
  %398 = vmatprep.subr.mxu0 0.0
  %399 = vmatpush1.msra.mxu0 0.0
  %400 = vmatprep.subr.mxu0 0.0
  %401 = vmatpush1.msra.mxu0 0.0
  %402 = vmatprep.subr.mxu0 0.0
  %403 = vmatpush1.msra.mxu0 0.0
  %404 = vmatprep.subr.mxu0 0.0
  %405 = vmatpush1.msra.mxu0 0.0
  %406 = vmatprep.subr.mxu0 0.0
  %407 = vmatpush1.msra.mxu0 0.0
  %408 = vmatprep.subr.mxu0 0.0
  %409 = vmatpush1.msra.mxu0 0.0
  %410 = vmatprep.subr.mxu0 0.0
  %411 = vmatpush1.msra.mxu0 0.0
  %412 = vmatprep.mubr.f32.mxu0 0.0
  %413 = vmatmul.mubr.f32.gmra.mrb[0].mxu0 %v343
  %v414 = vpop.f32.mrb[0].mxu0
  %v415 = vadd.f32 %v340, %v414
  %v416 = vpop.f32.mrb[0].mxu0
  %417 = vmatprep.mubr.f32.mxu0 0.0
  %418 = vmatmul.mubr.f32.gmra.mrb[0].mxu0 %v346
  %v419 = vpop.f32.mrb[0].mxu0
  %v420 = vadd.f32 %v340, %v419
  %v421 = vpop.f32.mrb[0].mxu0
  %422 = vdwg.mxu0
  %v423 = vld [vmem:[%s5] sm:$0xff]
  %v424 = vld [vmem:[%s5 + $0x8] sm:$0xff]
  %v425 = vld [vmem:[%s5 + $0x10] sm:$0xff]
  %v426 = vld [vmem:[%s5 + $0x18] sm:$0xff]
  %v427 = vld [vmem:[%s8] sm:$0xff]
  %v428 = vld [vmem:[%s8 + $0x8] sm:$0xff]
  %v429 = vld [vmem:[%s8 + $0x10] sm:$0xff]
  %v430 = vld [vmem:[%s8 + $0x18] sm:$0xff]
  %v431 = vld [vmem:[%s10] sm:$0xff]
  %v432 = vld [vmem:[%s10 + $0x8] sm:$0xff]
  %v433 = vld [vmem:[%s10 + $0x10] sm:$0xff]
  %v434 = vld [vmem:[%s10 + $0x18] sm:$0xff]
  %v435 = vld [vmem:[%s10 + $0x20] sm:$0xff]
  %v436 = vld [vmem:[%s10 + $0x28] sm:$0xff]
  %v437 = vld [vmem:[%s10 + $0x30] sm:$0xff]
  %v438 = vld [vmem:[%s10 + $0x38] sm:$0xff]
  %v439 = vld [vmem:[%s11] sm:$0x1]
  %v441 = vsel %vm249, 0.0, 0
  %443 = vmatprep.subr.mxu0 0.0
  %444 = vmatpush1.msra.mxu0 %v423
  %445 = vmatprep.subr.mxu0 0.0
  %446 = vmatpush1.msra.mxu0 %v424
  %447 = vmatprep.subr.mxu0 0.0
  %448 = vmatpush1.msra.mxu0 %v425
  %449 = vmatprep.subr.mxu0 0.0
  %450 = vmatpush1.msra.mxu0 %v426
  %451 = vmatprep.subr.mxu0 0.0
  %452 = vmatpush1.msra.mxu0 0.0
  %453 = vmatprep.subr.mxu0 0.0
  %454 = vmatpush1.msra.mxu0 0.0
  %455 = vmatprep.subr.mxu0 0.0
  %456 = vmatpush1.msra.mxu0 0.0
  %457 = vmatprep.subr.mxu0 0.0
  %458 = vmatpush1.msra.mxu0 0.0
  %459 = vmatprep.subr.mxu0 0.0
  %460 = vmatpush1.msra.mxu0 0.0
  %461 = vmatprep.subr.mxu0 0.0
  %462 = vmatpush1.msra.mxu0 0.0
  %463 = vmatprep.subr.mxu0 0.0
  %464 = vmatpush1.msra.mxu0 0.0
  %465 = vmatprep.subr.mxu0 0.0
  %466 = vmatpush1.msra.mxu0 0.0
  %467 = vmatprep.subr.mxu0 0.0
  %468 = vmatpush1.msra.mxu0 0.0
  %469 = vmatprep.subr.mxu0 0.0
  %470 = vmatpush1.msra.mxu0 0.0
  %471 = vmatprep.subr.mxu0 0.0
  %472 = vmatpush1.msra.mxu0 0.0
  %473 = vmatprep.subr.mxu0 0.0
  %474 = vmatpush1.msra.mxu0 0.0
  %475 = vmatprep.subr.mxu0 0.0
  %476 = vmatpush1.msra.mxu0 0.0
  %477 = vmatprep.subr.mxu0 0.0
  %478 = vmatpush1.msra.mxu0 0.0
  %479 = vmatprep.subr.mxu0 0.0
  %480 = vmatpush1.msra.mxu0 0.0
  %481 = vmatprep.subr.mxu0 0.0
  %482 = vmatpush1.msra.mxu0 0.0
  %483 = vmatprep.subr.mxu0 0.0
  %484 = vmatpush1.msra.mxu0 0.0
  %485 = vmatprep.subr.mxu0 0.0
  %486 = vmatpush1.msra.mxu0 0.0
  %487 = vmatprep.subr.mxu0 0.0
  %488 = vmatpush1.msra.mxu0 0.0
  %489 = vmatprep.subr.mxu0 0.0
  %490 = vmatpush1.msra.mxu0 0.0
  %491 = vmatprep.subr.mxu0 0.0
  %492 = vmatpush1.msra.mxu0 0.0
  %493 = vmatprep.subr.mxu0 0.0
  %494 = vmatpush1.msra.mxu0 0.0
  %495 = vmatprep.subr.mxu0 0.0
  %496 = vmatpush1.msra.mxu0 0.0
  %497 = vmatprep.subr.mxu0 0.0
  %498 = vmatpush1.msra.mxu0 0.0
  %499 = vmatprep.subr.mxu0 0.0
  %500 = vmatpush1.msra.mxu0 0.0
  %501 = vmatprep.subr.mxu0 0.0
  %502 = vmatpush1.msra.mxu0 0.0
  %503 = vmatprep.subr.mxu0 0.0
  %504 = vmatpush1.msra.mxu0 0.0
  %505 = vmatprep.subr.mxu0 0.0
  %506 = vmatpush1.msra.mxu0 0.0
  %507 = vmatprep.mubr.f32.mxu0 0.0
  %508 = vmatmul.mubr.f32.gmra.mrb[0].mxu0 %v441
  %v509 = vpop.f32.mrb[0].mxu0
  %v510 = vadd.f32 0.0, %v509
  %v511 = vpop.f32.mrb[0].mxu0
  %512 = vdwg.mxu0
  %v513 = vadd.f32 %v323, %v510
  %v514 = vtanh.pop %v513
  %v516 = vsel %vm249, %v514, 0
  %518 = vmatprep.subr.mxu0 0.0
  %519 = vmatpush1.msra.mxu0 %v423
  %520 = vmatprep.subr.mxu0 0.0
  %521 = vmatpush1.msra.mxu0 %v424
  %522 = vmatprep.subr.mxu0 0.0
  %523 = vmatpush1.msra.mxu0 %v425
  %524 = vmatprep.subr.mxu0 0.0
  %525 = vmatpush1.msra.mxu0 %v426
  %526 = vmatprep.subr.mxu0 0.0
  %527 = vmatpush1.msra.mxu0 0.0
  %528 = vmatprep.subr.mxu0 0.0
  %529 = vmatpush1.msra.mxu0 0.0
  %530 = vmatprep.subr.mxu0 0.0
  %531 = vmatpush1.msra.mxu0 0.0
  %532 = vmatprep.subr.mxu0 0.0
  %533 = vmatpush1.msra.mxu0 0.0
  %534 = vmatprep.subr.mxu0 0.0
  %535 = vmatpush1.msra.mxu0 0.0
  %536 = vmatprep.subr.mxu0 0.0
  %537 = vmatpush1.msra.mxu0 0.0
  %538 = vmatprep.subr.mxu0 0.0
  %539 = vmatpush1.msra.mxu0 0.0
  %540 = vmatprep.subr.mxu0 0.0
  %541 = vmatpush1.msra.mxu0 0.0
  %542 = vmatprep.subr.mxu0 0.0
  %543 = vmatpush1.msra.mxu0 0.0
  %544 = vmatprep.subr.mxu0 0.0
  %545 = vmatpush1.msra.mxu0 0.0
  %546 = vmatprep.subr.mxu0 0.0
  %547 = vmatpush1.msra.mxu0 0.0
  %548 = vmatprep.subr.mxu0 0.0
  %549 = vmatpush1.msra.mxu0 0.0
  %550 = vmatprep.subr.mxu0 0.0
  %551 = vmatpush1.msra.mxu0 0.0
  %552 = vmatprep.subr.mxu0 0.0
  %553 = vmatpush1.msra.mxu0 0.0
  %554 = vmatprep.subr.mxu0 0.0
  %555 = vmatpush1.msra.mxu0 0.0
  %556 = vmatprep.subr.mxu0 0.0
  %557 = vmatpush1.msra.mxu0 0.0
  %558 = vmatprep.subr.mxu0 0.0
  %559 = vmatpush1.msra.mxu0 0.0
  %560 = vmatprep.subr.mxu0 0.0
  %561 = vmatpush1.msra.mxu0 0.0
  %562 = vmatprep.subr.mxu0 0.0
  %563 = vmatpush1.msra.mxu0 0.0
  %564 = vmatprep.subr.mxu0 0.0
  %565 = vmatpush1.msra.mxu0 0.0
  %566 = vmatprep.subr.mxu0 0.0
  %567 = vmatpush1.msra.mxu0 0.0
  %568 = vmatprep.subr.mxu0 0.0
  %569 = vmatpush1.msra.mxu0 0.0
  %570 = vmatprep.subr.mxu0 0.0
  %571 = vmatpush1.msra.mxu0 0.0
  %572 = vmatprep.subr.mxu0 0.0
  %573 = vmatpush1.msra.mxu0 0.0
  %574 = vmatprep.subr.mxu0 0.0
  %575 = vmatpush1.msra.mxu0 0.0
  %576 = vmatprep.subr.mxu0 0.0
  %577 = vmatpush1.msra.mxu0 0.0
  %578 = vmatprep.subr.mxu0 0.0
  %579 = vmatpush1.msra.mxu0 0.0
  %580 = vmatprep.subr.mxu0 0.0
  %581 = vmatpush1.msra.mxu0 0.0
  %582 = vmatprep.mubr.f32.mxu0 0.0
  %583 = vmatmul.mubr.f32.gmra.mrb[0].mxu0 %v516
  %v584 = vpop.f32.mrb[0].mxu0
  %v585 = vadd.f32 0.0, %v584
  %v586 = vpop.f32.mrb[0].mxu0
  %587 = vdwg.mxu0
  %v589 = vrot.slane %v585, 7
  %v591 = vadd.f32 %v323, %v589
  %v592 = vtanh.pop %v591
  %v594 = vrot.slane %v592, 1
  %v595 = vsel %vm249, %v594, 0
  %597 = vmatprep.subr.mxu0 0.0
  %598 = vmatpush1.msra.mxu0 %v423
  %599 = vmatprep.subr.mxu0 0.0
  %600 = vmatpush1.msra.mxu0 %v424
  %601 = vmatprep.subr.mxu0 0.0
  %602 = vmatpush1.msra.mxu0 %v425
  %603 = vmatprep.subr.mxu0 0.0
  %604 = vmatpush1.msra.mxu0 %v426
  %605 = vmatprep.subr.mxu0 0.0
  %606 = vmatpush1.msra.mxu0 0.0
  %607 = vmatprep.subr.mxu0 0.0
  %608 = vmatpush1.msra.mxu0 0.0
  %609 = vmatprep.subr.mxu0 0.0
  %610 = vmatpush1.msra.mxu0 0.0
  %611 = vmatprep.subr.mxu0 0.0
  %612 = vmatpush1.msra.mxu0 0.0
  %613 = vmatprep.subr.mxu0 0.0
  %614 = vmatpush1.msra.mxu0 0.0
  %615 = vmatprep.subr.mxu0 0.0
  %616 = vmatpush1.msra.mxu0 0.0
  %617 = vmatprep.subr.mxu0 0.0
  %618 = vmatpush1.msra.mxu0 0.0
  %619 = vmatprep.subr.mxu0 0.0
  %620 = vmatpush1.msra.mxu0 0.0
  %621 = vmatprep.subr.mxu0 0.0
  %622 = vmatpush1.msra.mxu0 0.0
  %623 = vmatprep.subr.mxu0 0.0
  %624 = vmatpush1.msra.mxu0 0.0
  %625 = vmatprep.subr.mxu0 0.0
  %626 = vmatpush1.msra.mxu0 0.0
  %627 = vmatprep.subr.mxu0 0.0
  %628 = vmatpush1.msra.mxu0 0.0
  %629 = vmatprep.subr.mxu0 0.0
  %630 = vmatpush1.msra.mxu0 0.0
  %631 = vmatprep.subr.mxu0 0.0
  %632 = vmatpush1.msra.mxu0 0.0
  %633 = vmatprep.subr.mxu0 0.0
  %634 = vmatpush1.msra.mxu0 0.0
  %635 = vmatprep.subr.mxu0 0.0
  %636 = vmatpush1.msra.mxu0 0.0
  %637 = vmatprep.subr.mxu0 0.0
  %638 = vmatpush1.msra.mxu0 0.0
  %639 = vmatprep.subr.mxu0 0.0
  %640 = vmatpush1.msra.mxu0 0.0
  %641 = vmatprep.subr.mxu0 0.0
  %642 = vmatpush1.msra.mxu0 0.0
  %643 = vmatprep.subr.mxu0 0.0
  %644 = vmatpush1.msra.mxu0 0.0
  %645 = vmatprep.subr.mxu0 0.0
  %646 = vmatpush1.msra.mxu0 0.0
  %647 = vmatprep.subr.mxu0 0.0
  %648 = vmatpush1.msra.mxu0 0.0
  %649 = vmatprep.subr.mxu0 0.0
  %650 = vmatpush1.msra.mxu0 0.0
  %651 = vmatprep.subr.mxu0 0.0
  %652 = vmatpush1.msra.mxu0 0.0
  %653 = vmatprep.subr.mxu0 0.0
  %654 = vmatpush1.msra.mxu0 0.0
  %655 = vmatprep.subr.mxu0 0.0
  %656 = vmatpush1.msra.mxu0 0.0
  %657 = vmatprep.subr.mxu0 0.0
  %658 = vmatpush1.msra.mxu0 0.0
  %659 = vmatprep.subr.mxu0 0.0
  %660 = vmatpush1.msra.mxu0 0.0
  %661 = vmatprep.mubr.f32.mxu0 0.0
  %662 = vmatmul.mubr.f32.gmra.mrb[0].mxu0 %v595
  %v663 = vpop.f32.mrb[0].mxu0
  %v664 = vadd.f32 0.0, %v663
  %v665 = vpop.f32.mrb[0].mxu0
  %666 = vdwg.mxu0
  %v668 = vrot.slane %v664, 6
  %v670 = vadd.f32 %v323, %v668
  %v671 = vtanh.pop %v670
  %v673 = vrot.slane %v671, 2
  %v674 = vsel %vm249, %v673, 0
  %676 = vmatprep.subr.mxu0 0.0
  %677 = vmatpush1.msra.mxu0 %v423
  %678 = vmatprep.subr.mxu0 0.0
  %679 = vmatpush1.msra.mxu0 %v424
  %680 = vmatprep.subr.mxu0 0.0
  %681 = vmatpush1.msra.mxu0 %v425
  %682 = vmatprep.subr.mxu0 0.0
  %683 = vmatpush1.msra.mxu0 %v426
  %684 = vmatprep.subr.mxu0 0.0
  %685 = vmatpush1.msra.mxu0 0.0
  %686 = vmatprep.subr.mxu0 0.0
  %687 = vmatpush1.msra.mxu0 0.0
  %688 = vmatprep.subr.mxu0 0.0
  %689 = vmatpush1.msra.mxu0 0.0
  %690 = vmatprep.subr.mxu0 0.0
  %691 = vmatpush1.msra.mxu0 0.0
  %692 = vmatprep.subr.mxu0 0.0
  %693 = vmatpush1.msra.mxu0 0.0
  %694 = vmatprep.subr.mxu0 0.0
  %695 = vmatpush1.msra.mxu0 0.0
  %696 = vmatprep.subr.mxu0 0.0
  %697 = vmatpush1.msra.mxu0 0.0
  %698 = vmatprep.subr.mxu0 0.0
  %699 = vmatpush1.msra.mxu0 0.0
  %700 = vmatprep.subr.mxu0 0.0
  %701 = vmatpush1.msra.mxu0 0.0
  %702 = vmatprep.subr.mxu0 0.0
  %703 = vmatpush1.msra.mxu0 0.0
  %704 = vmatprep.subr.mxu0 0.0
  %705 = vmatpush1.msra.mxu0 0.0
  %706 = vmatprep.subr.mxu0 0.0
  %707 = vmatpush1.msra.mxu0 0.0
  %708 = vmatprep.subr.mxu0 0.0
  %709 = vmatpush1.msra.mxu0 0.0
  %710 = vmatprep.subr.mxu0 0.0
  %711 = vmatpush1.msra.mxu0 0.0
  %712 = vmatprep.subr.mxu0 0.0
  %713 = vmatpush1.msra.mxu0 0.0
  %714 = vmatprep.subr.mxu0 0.0
  %715 = vmatpush1.msra.mxu0 0.0
  %716 = vmatprep.subr.mxu0 0.0
  %717 = vmatpush1.msra.mxu0 0.0
  %718 = vmatprep.subr.mxu0 0.0
  %719 = vmatpush1.msra.mxu0 0.0
  %720 = vmatprep.subr.mxu0 0.0
  %721 = vmatpush1.msra.mxu0 0.0
  %722 = vmatprep.subr.mxu0 0.0
  %723 = vmatpush1.msra.mxu0 0.0
  %724 = vmatprep.subr.mxu0 0.0
  %725 = vmatpush1.msra.mxu0 0.0
  %726 = vmatprep.subr.mxu0 0.0
  %727 = vmatpush1.msra.mxu0 0.0
  %728 = vmatprep.subr.mxu0 0.0
  %729 = vmatpush1.msra.mxu0 0.0
  %730 = vmatprep.subr.mxu0 0.0
  %731 = vmatpush1.msra.mxu0 0.0
  %732 = vmatprep.subr.mxu0 0.0
  %733 = vmatpush1.msra.mxu0 0.0
  %734 = vmatprep.subr.mxu0 0.0
  %735 = vmatpush1.msra.mxu0 0.0
  %736 = vmatprep.subr.mxu0 0.0
  %737 = vmatpush1.msra.mxu0 0.0
  %738 = vmatprep.subr.mxu0 0.0
  %739 = vmatpush1.msra.mxu0 0.0
  %740 = vmatprep.mubr.f32.mxu0 0.0
  %741 = vmatmul.mubr.f32.gmra.mrb[0].mxu0 %v674
  %v742 = vpop.f32.mrb[0].mxu0
  %v743 = vadd.f32 0.0, %v742
  %v744 = vpop.f32.mrb[0].mxu0
  %745 = vdwg.mxu0
  %v747 = vrot.slane %v743, 5
  %v749 = vadd.f32 %v323, %v747
  %v750 = vtanh.pop %v749
  %v752 = vrot.slane %v750, 3
  %v753 = vsel %vm249, %v752, 0
  %755 = vmatprep.subr.mxu0 0.0
  %756 = vmatpush1.msra.mxu0 %v423
  %757 = vmatprep.subr.mxu0 0.0
  %758 = vmatpush1.msra.mxu0 %v424
  %759 = vmatprep.subr.mxu0 0.0
  %760 = vmatpush1.msra.mxu0 %v425
  %761 = vmatprep.subr.mxu0 0.0
  %762 = vmatpush1.msra.mxu0 %v426
  %763 = vmatprep.subr.mxu0 0.0
  %764 = vmatpush1.msra.mxu0 0.0
  %765 = vmatprep.subr.mxu0 0.0
  %766 = vmatpush1.msra.mxu0 0.0
  %767 = vmatprep.subr.mxu0 0.0
  %768 = vmatpush1.msra.mxu0 0.0
  %769 = vmatprep.subr.mxu0 0.0
  %770 = vmatpush1.msra.mxu0 0.0
  %771 = vmatprep.subr.mxu0 0.0
  %772 = vmatpush1.msra.mxu0 0.0
  %773 = vmatprep.subr.mxu0 0.0
  %774 = vmatpush1.msra.mxu0 0.0
  %775 = vmatprep.subr.mxu0 0.0
  %776 = vmatpush1.msra.mxu0 0.0
  %777 = vmatprep.subr.mxu0 0.0
  %778 = vmatpush1.msra.mxu0 0.0
  %779 = vmatprep.subr.mxu0 0.0
  %780 = vmatpush1.msra.mxu0 0.0
  %781 = vmatprep.subr.mxu0 0.0
  %782 = vmatpush1.msra.mxu0 0.0
  %783 = vmatprep.subr.mxu0 0.0
  %784 = vmatpush1.msra.mxu0 0.0
  %785 = vmatprep.subr.mxu0 0.0
  %786 = vmatpush1.msra.mxu0 0.0
  %787 = vmatprep.subr.mxu0 0.0
  %788 = vmatpush1.msra.mxu0 0.0
  %789 = vmatprep.subr.mxu0 0.0
  %790 = vmatpush1.msra.mxu0 0.0
  %791 = vmatprep.subr.mxu0 0.0
  %792 = vmatpush1.msra.mxu0 0.0
  %793 = vmatprep.subr.mxu0 0.0
  %794 = vmatpush1.msra.mxu0 0.0
  %795 = vmatprep.subr.mxu0 0.0
  %796 = vmatpush1.msra.mxu0 0.0
  %797 = vmatprep.subr.mxu0 0.0
  %798 = vmatpush1.msra.mxu0 0.0
  %799 = vmatprep.subr.mxu0 0.0
  %800 = vmatpush1.msra.mxu0 0.0
  %801 = vmatprep.subr.mxu0 0.0
  %802 = vmatpush1.msra.mxu0 0.0
  %803 = vmatprep.subr.mxu0 0.0
  %804 = vmatpush1.msra.mxu0 0.0
  %805 = vmatprep.subr.mxu0 0.0
  %806 = vmatpush1.msra.mxu0 0.0
  %807 = vmatprep.subr.mxu0 0.0
  %808 = vmatpush1.msra.mxu0 0.0
  %809 = vmatprep.subr.mxu0 0.0
  %810 = vmatpush1.msra.mxu0 0.0
  %811 = vmatprep.subr.mxu0 0.0
  %812 = vmatpush1.msra.mxu0 0.0
  %813 = vmatprep.subr.mxu0 0.0
  %814 = vmatpush1.msra.mxu0 0.0
  %815 = vmatprep.subr.mxu0 0.0
  %816 = vmatpush1.msra.mxu0 0.0
  %817 = vmatprep.subr.mxu0 0.0
  %818 = vmatpush1.msra.mxu0 0.0
  %819 = vmatprep.mubr.f32.mxu0 0.0
  %820 = vmatmul.mubr.f32.gmra.mrb[0].mxu0 %v753
  %v821 = vpop.f32.mrb[0].mxu0
  %v822 = vadd.f32 0.0, %v821
  %v823 = vpop.f32.mrb[0].mxu0
  %824 = vdwg.mxu0
  %v826 = vrot.slane %v822, 4
  %v828 = vadd.f32 %v323, %v826
  %v829 = vtanh.pop %v828
  %v831 = vrot.slane %v829, 4
  %v832 = vsel %vm249, %v831, 0
  %834 = vmatprep.subr.mxu0 0.0
  %835 = vmatpush1.msra.mxu0 %v423
  %836 = vmatprep.subr.mxu0 0.0
  %837 = vmatpush1.msra.mxu0 %v424
  %838 = vmatprep.subr.mxu0 0.0
  %839 = vmatpush1.msra.mxu0 %v425
  %840 = vmatprep.subr.mxu0 0.0
  %841 = vmatpush1.msra.mxu0 %v426
  %842 = vmatprep.subr.mxu0 0.0
  %843 = vmatpush1.msra.mxu0 0.0
  %844 = vmatprep.subr.mxu0 0.0
  %845 = vmatpush1.msra.mxu0 0.0
  %846 = vmatprep.subr.mxu0 0.0
  %847 = vmatpush1.msra.mxu0 0.0
  %848 = vmatprep.subr.mxu0 0.0
  %849 = vmatpush1.msra.mxu0 0.0
  %850 = vmatprep.subr.mxu0 0.0
  %851 = vmatpush1.msra.mxu0 0.0
  %852 = vmatprep.subr.mxu0 0.0
  %853 = vmatpush1.msra.mxu0 0.0
  %854 = vmatprep.subr.mxu0 0.0
  %855 = vmatpush1.msra.mxu0 0.0
  %856 = vmatprep.subr.mxu0 0.0
  %857 = vmatpush1.msra.mxu0 0.0
  %858 = vmatprep.subr.mxu0 0.0
  %859 = vmatpush1.msra.mxu0 0.0
  %860 = vmatprep.subr.mxu0 0.0
  %861 = vmatpush1.msra.mxu0 0.0
  %862 = vmatprep.subr.mxu0 0.0
  %863 = vmatpush1.msra.mxu0 0.0
  %864 = vmatprep.subr.mxu0 0.0
  %865 = vmatpush1.msra.mxu0 0.0
  %866 = vmatprep.subr.mxu0 0.0
  %867 = vmatpush1.msra.mxu0 0.0
  %868 = vmatprep.subr.mxu0 0.0
  %869 = vmatpush1.msra.mxu0 0.0
  %870 = vmatprep.subr.mxu0 0.0
  %871 = vmatpush1.msra.mxu0 0.0
  %872 = vmatprep.subr.mxu0 0.0
  %873 = vmatpush1.msra.mxu0 0.0
  %874 = vmatprep.subr.mxu0 0.0
  %875 = vmatpush1.msra.mxu0 0.0
  %876 = vmatprep.subr.mxu0 0.0
  %877 = vmatpush1.msra.mxu0 0.0
  %878 = vmatprep.subr.mxu0 0.0
  %879 = vmatpush1.msra.mxu0 0.0
  %880 = vmatprep.subr.mxu0 0.0
  %881 = vmatpush1.msra.mxu0 0.0
  %882 = vmatprep.subr.mxu0 0.0
  %883 = vmatpush1.msra.mxu0 0.0
  %884 = vmatprep.subr.mxu0 0.0
  %885 = vmatpush1.msra.mxu0 0.0
  %886 = vmatprep.subr.mxu0 0.0
  %887 = vmatpush1.msra.mxu0 0.0
  %888 = vmatprep.subr.mxu0 0.0
  %889 = vmatpush1.msra.mxu0 0.0
  %890 = vmatprep.subr.mxu0 0.0
  %891 = vmatpush1.msra.mxu0 0.0
  %892 = vmatprep.subr.mxu0 0.0
  %893 = vmatpush1.msra.mxu0 0.0
  %894 = vmatprep.subr.mxu0 0.0
  %895 = vmatpush1.msra.mxu0 0.0
  %896 = vmatprep.subr.mxu0 0.0
  %897 = vmatpush1.msra.mxu0 0.0
  %898 = vmatprep.mubr.f32.mxu0 0.0
  %899 = vmatmul.mubr.f32.gmra.mrb[0].mxu0 %v832
  %v900 = vpop.f32.mrb[0].mxu0
  %v901 = vadd.f32 0.0, %v900
  %v902 = vpop.f32.mrb[0].mxu0
  %903 = vdwg.mxu0
  %v905 = vrot.slane %v901, 3
  %v907 = vadd.f32 %v323, %v905
  %v908 = vtanh.pop %v907
  %v910 = vrot.slane %v908, 5
  %v911 = vsel %vm249, %v910, 0
  %913 = vmatprep.subr.mxu0 0.0
  %914 = vmatpush1.msra.mxu0 %v423
  %915 = vmatprep.subr.mxu0 0.0
  %916 = vmatpush1.msra.mxu0 %v424
  %917 = vmatprep.subr.mxu0 0.0
  %918 = vmatpush1.msra.mxu0 %v425
  %919 = vmatprep.subr.mxu0 0.0
  %920 = vmatpush1.msra.mxu0 %v426
  %921 = vmatprep.subr.mxu0 0.0
  %922 = vmatpush1.msra.mxu0 0.0
  %923 = vmatprep.subr.mxu0 0.0
  %924 = vmatpush1.msra.mxu0 0.0
  %925 = vmatprep.subr.mxu0 0.0
  %926 = vmatpush1.msra.mxu0 0.0
  %927 = vmatprep.subr.mxu0 0.0
  %928 = vmatpush1.msra.mxu0 0.0
  %929 = vmatprep.subr.mxu0 0.0
  %930 = vmatpush1.msra.mxu0 0.0
  %931 = vmatprep.subr.mxu0 0.0
  %932 = vmatpush1.msra.mxu0 0.0
  %933 = vmatprep.subr.mxu0 0.0
  %934 = vmatpush1.msra.mxu0 0.0
  %935 = vmatprep.subr.mxu0 0.0
  %936 = vmatpush1.msra.mxu0 0.0
  %937 = vmatprep.subr.mxu0 0.0
  %938 = vmatpush1.msra.mxu0 0.0
  %939 = vmatprep.subr.mxu0 0.0
  %940 = vmatpush1.msra.mxu0 0.0
  %941 = vmatprep.subr.mxu0 0.0
  %942 = vmatpush1.msra.mxu0 0.0
  %943 = vmatprep.subr.mxu0 0.0
  %944 = vmatpush1.msra.mxu0 0.0
  %945 = vmatprep.subr.mxu0 0.0
  %946 = vmatpush1.msra.mxu0 0.0
  %947 = vmatprep.subr.mxu0 0.0
  %948 = vmatpush1.msra.mxu0 0.0
  %949 = vmatprep.subr.mxu0 0.0
  %950 = vmatpush1.msra.mxu0 0.0
  %951 = vmatprep.subr.mxu0 0.0
  %952 = vmatpush1.msra.mxu0 0.0
  %953 = vmatprep.subr.mxu0 0.0
  %954 = vmatpush1.msra.mxu0 0.0
  %955 = vmatprep.subr.mxu0 0.0
  %956 = vmatpush1.msra.mxu0 0.0
  %957 = vmatprep.subr.mxu0 0.0
  %958 = vmatpush1.msra.mxu0 0.0
  %959 = vmatprep.subr.mxu0 0.0
  %960 = vmatpush1.msra.mxu0 0.0
  %961 = vmatprep.subr.mxu0 0.0
  %962 = vmatpush1.msra.mxu0 0.0
  %963 = vmatprep.subr.mxu0 0.0
  %964 = vmatpush1.msra.mxu0 0.0
  %965 = vmatprep.subr.mxu0 0.0
  %966 = vmatpush1.msra.mxu0 0.0
  %967 = vmatprep.subr.mxu0 0.0
  %968 = vmatpush1.msra.mxu0 0.0
  %969 = vmatprep.subr.mxu0 0.0
  %970 = vmatpush1.msra.mxu0 0.0
  %971 = vmatprep.subr.mxu0 0.0
  %972 = vmatpush1.msra.mxu0 0.0
  %973 = vmatprep.subr.mxu0 0.0
  %974 = vmatpush1.msra.mxu0 0.0
  %975 = vmatprep.subr.mxu0 0.0
  %976 = vmatpush1.msra.mxu0 0.0
  %977 = vmatprep.mubr.f32.mxu0 0.0
  %978 = vmatmul.mubr.f32.gmra.mrb[0].mxu0 %v911
  %v979 = vpop.f32.mrb[0].mxu0
  %v980 = vadd.f32 0.0, %v979
  %v981 = vpop.f32.mrb[0].mxu0
  %982 = vdwg.mxu0
  %v984 = vrot.slane %v980, 2
  %v986 = vadd.f32 %v323, %v984
  %v987 = vtanh.pop %v986
  %v989 = vrot.slane %v987, 6
  %v990 = vsel %vm249, %v989, 0
  %992 = vmatprep.subr.mxu0 0.0
  %993 = vmatpush1.msra.mxu0 %v423
  %994 = vmatprep.subr.mxu0 0.0
  %995 = vmatpush1.msra.mxu0 %v424
  %996 = vmatprep.subr.mxu0 0.0
  %997 = vmatpush1.msra.mxu0 %v425
  %998 = vmatprep.subr.mxu0 0.0
  %999 = vmatpush1.msra.mxu0 %v426
  %1000 = vmatprep.subr.mxu0 0.0
  %1001 = vmatpush1.msra.mxu0 0.0
  %1002 = vmatprep.subr.mxu0 0.0
  %1003 = vmatpush1.msra.mxu0 0.0
  %1004 = vmatprep.subr.mxu0 0.0
  %1005 = vmatpush1.msra.mxu0 0.0
  %1006 = vmatprep.subr.mxu0 0.0
  %1007 = vmatpush1.msra.mxu0 0.0
  %1008 = vmatprep.subr.mxu0 0.0
  %1009 = vmatpush1.msra.mxu0 0.0
  %1010 = vmatprep.subr.mxu0 0.0
  %1011 = vmatpush1.msra.mxu0 0.0
  %1012 = vmatprep.subr.mxu0 0.0
  %1013 = vmatpush1.msra.mxu0 0.0
  %1014 = vmatprep.subr.mxu0 0.0
  %1015 = vmatpush1.msra.mxu0 0.0
  %1016 = vmatprep.subr.mxu0 0.0
  %1017 = vmatpush1.msra.mxu0 0.0
  %1018 = vmatprep.subr.mxu0 0.0
  %1019 = vmatpush1.msra.mxu0 0.0
  %1020 = vmatprep.subr.mxu0 0.0
  %1021 = vmatpush1.msra.mxu0 0.0
  %1022 = vmatprep.subr.mxu0 0.0
  %1023 = vmatpush1.msra.mxu0 0.0
  %1024 = vmatprep.subr.mxu0 0.0
  %1025 = vmatpush1.msra.mxu0 0.0
  %1026 = vmatprep.subr.mxu0 0.0
  %1027 = vmatpush1.msra.mxu0 0.0
  %1028 = vmatprep.subr.mxu0 0.0
  %1029 = vmatpush1.msra.mxu0 0.0
  %1030 = vmatprep.subr.mxu0 0.0
  %1031 = vmatpush1.msra.mxu0 0.0
  %1032 = vmatprep.subr.mxu0 0.0
  %1033 = vmatpush1.msra.mxu0 0.0
  %1034 = vmatprep.subr.mxu0 0.0
  %1035 = vmatpush1.msra.mxu0 0.0
  %1036 = vmatprep.subr.mxu0 0.0
  %1037 = vmatpush1.msra.mxu0 0.0
  %1038 = vmatprep.subr.mxu0 0.0
  %1039 = vmatpush1.msra.mxu0 0.0
  %1040 = vmatprep.subr.mxu0 0.0
  %1041 = vmatpush1.msra.mxu0 0.0
  %1042 = vmatprep.subr.mxu0 0.0
  %1043 = vmatpush1.msra.mxu0 0.0
  %1044 = vmatprep.subr.mxu0 0.0
  %1045 = vmatpush1.msra.mxu0 0.0
  %1046 = vmatprep.subr.mxu0 0.0
  %1047 = vmatpush1.msra.mxu0 0.0
  %1048 = vmatprep.subr.mxu0 0.0
  %1049 = vmatpush1.msra.mxu0 0.0
  %1050 = vmatprep.subr.mxu0 0.0
  %1051 = vmatpush1.msra.mxu0 0.0
  %1052 = vmatprep.subr.mxu0 0.0
  %1053 = vmatpush1.msra.mxu0 0.0
  %1054 = vmatprep.subr.mxu0 0.0
  %1055 = vmatpush1.msra.mxu0 0.0
  %1056 = vmatprep.mubr.f32.mxu0 0.0
  %1057 = vmatmul.mubr.f32.gmra.mrb[0].mxu0 %v990
  %v1058 = vpop.f32.mrb[0].mxu0
  %v1059 = vadd.f32 0.0, %v1058
  %v1060 = vpop.f32.mrb[0].mxu0
  %1061 = vdwg.mxu0
  %v1063 = vrot.slane %v1059, 1
  %v1065 = vadd.f32 %v323, %v1063
  %v1066 = vtanh.pop %v1065
  %vm1067 = vcmask 1040384
  %v1068 = vsel %vm1067, %v514, %v592
  %vm1069 = vcmask 1041408
  %v1070 = vsel %vm1069, %v1068, %v671
  %vm1071 = vcmask 1042432
  %v1072 = vsel %vm1071, %v1070, %v750
  %vm1073 = vcmask 1043456
  %v1074 = vsel %vm1073, %v1072, %v829
  %vm1075 = vcmask 1044480
  %v1076 = vsel %vm1075, %v1074, %v908
  %vm1077 = vcmask 1045504
  %v1078 = vsel %vm1077, %v1076, %v987
  %vm1079 = vcmask 1046528
  %v1080 = vsel %vm1079, %v1078, %v1066
  %v1082 = vrot.slane %v1066, 7
  %v1083 = vsel %vm249, %v1082, 0
  %1085 = vmatprep.subr.mxu0 0.0
  %1086 = vmatpush1.msra.mxu0 %v427
  %1087 = vmatprep.subr.mxu0 0.0
  %1088 = vmatpush1.msra.mxu0 %v428
  %1089 = vmatprep.subr.mxu0 0.0
  %1090 = vmatpush1.msra.mxu0 %v429
  %1091 = vmatprep.subr.mxu0 0.0
  %1092 = vmatpush1.msra.mxu0 %v430
  %1093 = vmatprep.subr.mxu0 0.0
  %1094 = vmatpush1.msra.mxu0 0.0
  %1095 = vmatprep.subr.mxu0 0.0
  %1096 = vmatpush1.msra.mxu0 0.0
  %1097 = vmatprep.subr.mxu0 0.0
  %1098 = vmatpush1.msra.mxu0 0.0
  %1099 = vmatprep.subr.mxu0 0.0
  %1100 = vmatpush1.msra.mxu0 0.0
  %1101 = vmatprep.subr.mxu0 0.0
  %1102 = vmatpush1.msra.mxu0 0.0
  %1103 = vmatprep.subr.mxu0 0.0
  %1104 = vmatpush1.msra.mxu0 0.0
  %1105 = vmatprep.subr.mxu0 0.0
  %1106 = vmatpush1.msra.mxu0 0.0
  %1107 = vmatprep.subr.mxu0 0.0
  %1108 = vmatpush1.msra.mxu0 0.0
  %1109 = vmatprep.subr.mxu0 0.0
  %1110 = vmatpush1.msra.mxu0 0.0
  %1111 = vmatprep.subr.mxu0 0.0
  %1112 = vmatpush1.msra.mxu0 0.0
  %1113 = vmatprep.subr.mxu0 0.0
  %1114 = vmatpush1.msra.mxu0 0.0
  %1115 = vmatprep.subr.mxu0 0.0
  %1116 = vmatpush1.msra.mxu0 0.0
  %1117 = vmatprep.subr.mxu0 0.0
  %1118 = vmatpush1.msra.mxu0 0.0
  %1119 = vmatprep.subr.mxu0 0.0
  %1120 = vmatpush1.msra.mxu0 0.0
  %1121 = vmatprep.subr.mxu0 0.0
  %1122 = vmatpush1.msra.mxu0 0.0
  %1123 = vmatprep.subr.mxu0 0.0
  %1124 = vmatpush1.msra.mxu0 0.0
  %1125 = vmatprep.subr.mxu0 0.0
  %1126 = vmatpush1.msra.mxu0 0.0
  %1127 = vmatprep.subr.mxu0 0.0
  %1128 = vmatpush1.msra.mxu0 0.0
  %1129 = vmatprep.subr.mxu0 0.0
  %1130 = vmatpush1.msra.mxu0 0.0
  %1131 = vmatprep.subr.mxu0 0.0
  %1132 = vmatpush1.msra.mxu0 0.0
  %1133 = vmatprep.subr.mxu0 0.0
  %1134 = vmatpush1.msra.mxu0 0.0
  %1135 = vmatprep.subr.mxu0 0.0
  %1136 = vmatpush1.msra.mxu0 0.0
  %1137 = vmatprep.subr.mxu0 0.0
  %1138 = vmatpush1.msra.mxu0 0.0
  %1139 = vmatprep.subr.mxu0 0.0
  %1140 = vmatpush1.msra.mxu0 0.0
  %1141 = vmatprep.subr.mxu0 0.0
  %1142 = vmatpush1.msra.mxu0 0.0
  %1143 = vmatprep.subr.mxu0 0.0
  %1144 = vmatpush1.msra.mxu0 0.0
  %1145 = vmatprep.subr.mxu0 0.0
  %1146 = vmatpush1.msra.mxu0 0.0
  %1147 = vmatprep.subr.mxu0 0.0
  %1148 = vmatpush1.msra.mxu0 0.0
  %1149 = vmatprep.mubr.f32.mxu0 0.0
  %1150 = vmatmul.mubr.f32.gmra.mrb[0].mxu0 %v1083
  %v1151 = vpop.f32.mrb[0].mxu0
  %v1152 = vadd.f32 0.0, %v1151
  %v1153 = vpop.f32.mrb[0].mxu0
  %1154 = vdwg.mxu0
  %v1155 = vadd.f32 %v415, %v1152
  %v1156 = vtanh.pop %v1155
  %v1158 = vsel %vm249, %v1156, 0
  %1160 = vmatprep.subr.mxu0 0.0
  %1161 = vmatpush1.msra.mxu0 %v427
  %1162 = vmatprep.subr.mxu0 0.0
  %1163 = vmatpush1.msra.mxu0 %v428
  %1164 = vmatprep.subr.mxu0 0.0
  %1165 = vmatpush1.msra.mxu0 %v429
  %1166 = vmatprep.subr.mxu0 0.0
  %1167 = vmatpush1.msra.mxu0 %v430
  %1168 = vmatprep.subr.mxu0 0.0
  %1169 = vmatpush1.msra.mxu0 0.0
  %1170 = vmatprep.subr.mxu0 0.0
  %1171 = vmatpush1.msra.mxu0 0.0
  %1172 = vmatprep.subr.mxu0 0.0
  %1173 = vmatpush1.msra.mxu0 0.0
  %1174 = vmatprep.subr.mxu0 0.0
  %1175 = vmatpush1.msra.mxu0 0.0
  %1176 = vmatprep.subr.mxu0 0.0
  %1177 = vmatpush1.msra.mxu0 0.0
  %1178 = vmatprep.subr.mxu0 0.0
  %1179 = vmatpush1.msra.mxu0 0.0
  %1180 = vmatprep.subr.mxu0 0.0
  %1181 = vmatpush1.msra.mxu0 0.0
  %1182 = vmatprep.subr.mxu0 0.0
  %1183 = vmatpush1.msra.mxu0 0.0
  %1184 = vmatprep.subr.mxu0 0.0
  %1185 = vmatpush1.msra.mxu0 0.0
  %1186 = vmatprep.subr.mxu0 0.0
  %1187 = vmatpush1.msra.mxu0 0.0
  %1188 = vmatprep.subr.mxu0 0.0
  %1189 = vmatpush1.msra.mxu0 0.0
  %1190 = vmatprep.subr.mxu0 0.0
  %1191 = vmatpush1.msra.mxu0 0.0
  %1192 = vmatprep.subr.mxu0 0.0
  %1193 = vmatpush1.msra.mxu0 0.0
  %1194 = vmatprep.subr.mxu0 0.0
  %1195 = vmatpush1.msra.mxu0 0.0
  %1196 = vmatprep.subr.mxu0 0.0
  %1197 = vmatpush1.msra.mxu0 0.0
  %1198 = vmatprep.subr.mxu0 0.0
  %1199 = vmatpush1.msra.mxu0 0.0
  %1200 = vmatprep.subr.mxu0 0.0
  %1201 = vmatpush1.msra.mxu0 0.0
  %1202 = vmatprep.subr.mxu0 0.0
  %1203 = vmatpush1.msra.mxu0 0.0
  %1204 = vmatprep.subr.mxu0 0.0
  %1205 = vmatpush1.msra.mxu0 0.0
  %1206 = vmatprep.subr.mxu0 0.0
  %1207 = vmatpush1.msra.mxu0 0.0
  %1208 = vmatprep.subr.mxu0 0.0
  %1209 = vmatpush1.msra.mxu0 0.0
  %1210 = vmatprep.subr.mxu0 0.0
  %1211 = vmatpush1.msra.mxu0 0.0
  %1212 = vmatprep.subr.mxu0 0.0
  %1213 = vmatpush1.msra.mxu0 0.0
  %1214 = vmatprep.subr.mxu0 0.0
  %1215 = vmatpush1.msra.mxu0 0.0
  %1216 = vmatprep.subr.mxu0 0.0
  %1217 = vmatpush1.msra.mxu0 0.0
  %1218 = vmatprep.subr.mxu0 0.0
  %1219 = vmatpush1.msra.mxu0 0.0
  %1220 = vmatprep.subr.mxu0 0.0
  %1221 = vmatpush1.msra.mxu0 0.0
  %1222 = vmatprep.subr.mxu0 0.0
  %1223 = vmatpush1.msra.mxu0 0.0
  %1224 = vmatprep.mubr.f32.mxu0 0.0
  %1225 = vmatmul.mubr.f32.gmra.mrb[0].mxu0 %v1158
  %v1226 = vpop.f32.mrb[0].mxu0
  %v1227 = vadd.f32 0.0, %v1226
  %v1228 = vpop.f32.mrb[0].mxu0
  %1229 = vdwg.mxu0
  %v1231 = vrot.slane %v1227, 7
  %v1233 = vadd.f32 %v415, %v1231
  %v1234 = vtanh.pop %v1233
  %v1236 = vrot.slane %v1234, 1
  %v1237 = vsel %vm249, %v1236, 0
  %1239 = vmatprep.subr.mxu0 0.0
  %1240 = vmatpush1.msra.mxu0 %v427
  %1241 = vmatprep.subr.mxu0 0.0
  %1242 = vmatpush1.msra.mxu0 %v428
  %1243 = vmatprep.subr.mxu0 0.0
  %1244 = vmatpush1.msra.mxu0 %v429
  %1245 = vmatprep.subr.mxu0 0.0
  %1246 = vmatpush1.msra.mxu0 %v430
  %1247 = vmatprep.subr.mxu0 0.0
  %1248 = vmatpush1.msra.mxu0 0.0
  %1249 = vmatprep.subr.mxu0 0.0
  %1250 = vmatpush1.msra.mxu0 0.0
  %1251 = vmatprep.subr.mxu0 0.0
  %1252 = vmatpush1.msra.mxu0 0.0
  %1253 = vmatprep.subr.mxu0 0.0
  %1254 = vmatpush1.msra.mxu0 0.0
  %1255 = vmatprep.subr.mxu0 0.0
  %1256 = vmatpush1.msra.mxu0 0.0
  %1257 = vmatprep.subr.mxu0 0.0
  %1258 = vmatpush1.msra.mxu0 0.0
  %1259 = vmatprep.subr.mxu0 0.0
  %1260 = vmatpush1.msra.mxu0 0.0
  %1261 = vmatprep.subr.mxu0 0.0
  %1262 = vmatpush1.msra.mxu0 0.0
  %1263 = vmatprep.subr.mxu0 0.0
  %1264 = vmatpush1.msra.mxu0 0.0
  %1265 = vmatprep.subr.mxu0 0.0
  %1266 = vmatpush1.msra.mxu0 0.0
  %1267 = vmatprep.subr.mxu0 0.0
  %1268 = vmatpush1.msra.mxu0 0.0
  %1269 = vmatprep.subr.mxu0 0.0
  %1270 = vmatpush1.msra.mxu0 0.0
  %1271 = vmatprep.subr.mxu0 0.0
  %1272 = vmatpush1.msra.mxu0 0.0
  %1273 = vmatprep.subr.mxu0 0.0
  %1274 = vmatpush1.msra.mxu0 0.0
  %1275 = vmatprep.subr.mxu0 0.0
  %1276 = vmatpush1.msra.mxu0 0.0
  %1277 = vmatprep.subr.mxu0 0.0
  %1278 = vmatpush1.msra.mxu0 0.0
  %1279 = vmatprep.subr.mxu0 0.0
  %1280 = vmatpush1.msra.mxu0 0.0
  %1281 = vmatprep.subr.mxu0 0.0
  %1282 = vmatpush1.msra.mxu0 0.0
  %1283 = vmatprep.subr.mxu0 0.0
  %1284 = vmatpush1.msra.mxu0 0.0
  %1285 = vmatprep.subr.mxu0 0.0
  %1286 = vmatpush1.msra.mxu0 0.0
  %1287 = vmatprep.subr.mxu0 0.0
  %1288 = vmatpush1.msra.mxu0 0.0
  %1289 = vmatprep.subr.mxu0 0.0
  %1290 = vmatpush1.msra.mxu0 0.0
  %1291 = vmatprep.subr.mxu0 0.0
  %1292 = vmatpush1.msra.mxu0 0.0
  %1293 = vmatprep.subr.mxu0 0.0
  %1294 = vmatpush1.msra.mxu0 0.0
  %1295 = vmatprep.subr.mxu0 0.0
  %1296 = vmatpush1.msra.mxu0 0.0
  %1297 = vmatprep.subr.mxu0 0.0
  %1298 = vmatpush1.msra.mxu0 0.0
  %1299 = vmatprep.subr.mxu0 0.0
  %1300 = vmatpush1.msra.mxu0 0.0
  %1301 = vmatprep.subr.mxu0 0.0
  %1302 = vmatpush1.msra.mxu0 0.0
  %1303 = vmatprep.mubr.f32.mxu0 0.0
  %1304 = vmatmul.mubr.f32.gmra.mrb[0].mxu0 %v1237
  %v1305 = vpop.f32.mrb[0].mxu0
  %v1306 = vadd.f32 0.0, %v1305
  %v1307 = vpop.f32.mrb[0].mxu0
  %1308 = vdwg.mxu0
  %v1310 = vrot.slane %v1306, 6
  %v1312 = vadd.f32 %v415, %v1310
  %v1313 = vtanh.pop %v1312
  %v1315 = vrot.slane %v1313, 2
  %v1316 = vsel %vm249, %v1315, 0
  %1318 = vmatprep.subr.mxu0 0.0
  %1319 = vmatpush1.msra.mxu0 %v427
  %1320 = vmatprep.subr.mxu0 0.0
  %1321 = vmatpush1.msra.mxu0 %v428
  %1322 = vmatprep.subr.mxu0 0.0
  %1323 = vmatpush1.msra.mxu0 %v429
  %1324 = vmatprep.subr.mxu0 0.0
  %1325 = vmatpush1.msra.mxu0 %v430
  %1326 = vmatprep.subr.mxu0 0.0
  %1327 = vmatpush1.msra.mxu0 0.0
  %1328 = vmatprep.subr.mxu0 0.0
  %1329 = vmatpush1.msra.mxu0 0.0
  %1330 = vmatprep.subr.mxu0 0.0
  %1331 = vmatpush1.msra.mxu0 0.0
  %1332 = vmatprep.subr.mxu0 0.0
  %1333 = vmatpush1.msra.mxu0 0.0
  %1334 = vmatprep.subr.mxu0 0.0
  %1335 = vmatpush1.msra.mxu0 0.0
  %1336 = vmatprep.subr.mxu0 0.0
  %1337 = vmatpush1.msra.mxu0 0.0
  %1338 = vmatprep.subr.mxu0 0.0
  %1339 = vmatpush1.msra.mxu0 0.0
  %1340 = vmatprep.subr.mxu0 0.0
  %1341 = vmatpush1.msra.mxu0 0.0
  %1342 = vmatprep.subr.mxu0 0.0
  %1343 = vmatpush1.msra.mxu0 0.0
  %1344 = vmatprep.subr.mxu0 0.0
  %1345 = vmatpush1.msra.mxu0 0.0
  %1346 = vmatprep.subr.mxu0 0.0
  %1347 = vmatpush1.msra.mxu0 0.0
  %1348 = vmatprep.subr.mxu0 0.0
  %1349 = vmatpush1.msra.mxu0 0.0
  %1350 = vmatprep.subr.mxu0 0.0
  %1351 = vmatpush1.msra.mxu0 0.0
  %1352 = vmatprep.subr.mxu0 0.0
  %1353 = vmatpush1.msra.mxu0 0.0
  %1354 = vmatprep.subr.mxu0 0.0
  %1355 = vmatpush1.msra.mxu0 0.0
  %1356 = vmatprep.subr.mxu0 0.0
  %1357 = vmatpush1.msra.mxu0 0.0
  %1358 = vmatprep.subr.mxu0 0.0
  %1359 = vmatpush1.msra.mxu0 0.0
  %1360 = vmatprep.subr.mxu0 0.0
  %1361 = vmatpush1.msra.mxu0 0.0
  %1362 = vmatprep.subr.mxu0 0.0
  %1363 = vmatpush1.msra.mxu0 0.0
  %1364 = vmatprep.subr.mxu0 0.0
  %1365 = vmatpush1.msra.mxu0 0.0
  %1366 = vmatprep.subr.mxu0 0.0
  %1367 = vmatpush1.msra.mxu0 0.0
  %1368 = vmatprep.subr.mxu0 0.0
  %1369 = vmatpush1.msra.mxu0 0.0
  %1370 = vmatprep.subr.mxu0 0.0
  %1371 = vmatpush1.msra.mxu0 0.0
  %1372 = vmatprep.subr.mxu0 0.0
  %1373 = vmatpush1.msra.mxu0 0.0
  %1374 = vmatprep.subr.mxu0 0.0
  %1375 = vmatpush1.msra.mxu0 0.0
  %1376 = vmatprep.subr.mxu0 0.0
  %1377 = vmatpush1.msra.mxu0 0.0
  %1378 = vmatprep.subr.mxu0 0.0
  %1379 = vmatpush1.msra.mxu0 0.0
  %1380 = vmatprep.subr.mxu0 0.0
  %1381 = vmatpush1.msra.mxu0 0.0
  %1382 = vmatprep.mubr.f32.mxu0 0.0
  %1383 = vmatmul.mubr.f32.gmra.mrb[0].mxu0 %v1316
  %v1384 = vpop.f32.mrb[0].mxu0
  %v1385 = vadd.f32 0.0, %v1384
  %v1386 = vpop.f32.mrb[0].mxu0
  %1387 = vdwg.mxu0
  %v1389 = vrot.slane %v1385, 5
  %v1391 = vadd.f32 %v415, %v1389
  %v1392 = vtanh.pop %v1391
  %v1394 = vrot.slane %v1392, 3
  %v1395 = vsel %vm249, %v1394, 0
  %1397 = vmatprep.subr.mxu0 0.0
  %1398 = vmatpush1.msra.mxu0 %v427
  %1399 = vmatprep.subr.mxu0 0.0
  %1400 = vmatpush1.msra.mxu0 %v428
  %1401 = vmatprep.subr.mxu0 0.0
  %1402 = vmatpush1.msra.mxu0 %v429
  %1403 = vmatprep.subr.mxu0 0.0
  %1404 = vmatpush1.msra.mxu0 %v430
  %1405 = vmatprep.subr.mxu0 0.0
  %1406 = vmatpush1.msra.mxu0 0.0
  %1407 = vmatprep.subr.mxu0 0.0
  %1408 = vmatpush1.msra.mxu0 0.0
  %1409 = vmatprep.subr.mxu0 0.0
  %1410 = vmatpush1.msra.mxu0 0.0
  %1411 = vmatprep.subr.mxu0 0.0
  %1412 = vmatpush1.msra.mxu0 0.0
  %1413 = vmatprep.subr.mxu0 0.0
  %1414 = vmatpush1.msra.mxu0 0.0
  %1415 = vmatprep.subr.mxu0 0.0
  %1416 = vmatpush1.msra.mxu0 0.0
  %1417 = vmatprep.subr.mxu0 0.0
  %1418 = vmatpush1.msra.mxu0 0.0
  %1419 = vmatprep.subr.mxu0 0.0
  %1420 = vmatpush1.msra.mxu0 0.0
  %1421 = vmatprep.subr.mxu0 0.0
  %1422 = vmatpush1.msra.mxu0 0.0
  %1423 = vmatprep.subr.mxu0 0.0
  %1424 = vmatpush1.msra.mxu0 0.0
  %1425 = vmatprep.subr.mxu0 0.0
  %1426 = vmatpush1.msra.mxu0 0.0
  %1427 = vmatprep.subr.mxu0 0.0
  %1428 = vmatpush1.msra.mxu0 0.0
  %1429 = vmatprep.subr.mxu0 0.0
  %1430 = vmatpush1.msra.mxu0 0.0
  %1431 = vmatprep.subr.mxu0 0.0
  %1432 = vmatpush1.msra.mxu0 0.0
  %1433 = vmatprep.subr.mxu0 0.0
  %1434 = vmatpush1.msra.mxu0 0.0
  %1435 = vmatprep.subr.mxu0 0.0
  %1436 = vmatpush1.msra.mxu0 0.0
  %1437 = vmatprep.subr.mxu0 0.0
  %1438 = vmatpush1.msra.mxu0 0.0
  %1439 = vmatprep.subr.mxu0 0.0
  %1440 = vmatpush1.msra.mxu0 0.0
  %1441 = vmatprep.subr.mxu0 0.0
  %1442 = vmatpush1.msra.mxu0 0.0
  %1443 = vmatprep.subr.mxu0 0.0
  %1444 = vmatpush1.msra.mxu0 0.0
  %1445 = vmatprep.subr.mxu0 0.0
  %1446 = vmatpush1.msra.mxu0 0.0
  %1447 = vmatprep.subr.mxu0 0.0
  %1448 = vmatpush1.msra.mxu0 0.0
  %1449 = vmatprep.subr.mxu0 0.0
  %1450 = vmatpush1.msra.mxu0 0.0
  %1451 = vmatprep.subr.mxu0 0.0
  %1452 = vmatpush1.msra.mxu0 0.0
  %1453 = vmatprep.subr.mxu0 0.0
  %1454 = vmatpush1.msra.mxu0 0.0
  %1455 = vmatprep.subr.mxu0 0.0
  %1456 = vmatpush1.msra.mxu0 0.0
  %1457 = vmatprep.subr.mxu0 0.0
  %1458 = vmatpush1.msra.mxu0 0.0
  %1459 = vmatprep.subr.mxu0 0.0
  %1460 = vmatpush1.msra.mxu0 0.0
  %1461 = vmatprep.mubr.f32.mxu0 0.0
  %1462 = vmatmul.mubr.f32.gmra.mrb[0].mxu0 %v1395
  %v1463 = vpop.f32.mrb[0].mxu0
  %v1464 = vadd.f32 0.0, %v1463
  %v1465 = vpop.f32.mrb[0].mxu0
  %1466 = vdwg.mxu0
  %v1468 = vrot.slane %v1464, 4
  %v1470 = vadd.f32 %v415, %v1468
  %v1471 = vtanh.pop %v1470
  %v1473 = vrot.slane %v1471, 4
  %v1474 = vsel %vm249, %v1473, 0
  %1476 = vmatprep.subr.mxu0 0.0
  %1477 = vmatpush1.msra.mxu0 %v427
  %1478 = vmatprep.subr.mxu0 0.0
  %1479 = vmatpush1.msra.mxu0 %v428
  %1480 = vmatprep.subr.mxu0 0.0
  %1481 = vmatpush1.msra.mxu0 %v429
  %1482 = vmatprep.subr.mxu0 0.0
  %1483 = vmatpush1.msra.mxu0 %v430
  %1484 = vmatprep.subr.mxu0 0.0
  %1485 = vmatpush1.msra.mxu0 0.0
  %1486 = vmatprep.subr.mxu0 0.0
  %1487 = vmatpush1.msra.mxu0 0.0
  %1488 = vmatprep.subr.mxu0 0.0
  %1489 = vmatpush1.msra.mxu0 0.0
  %1490 = vmatprep.subr.mxu0 0.0
  %1491 = vmatpush1.msra.mxu0 0.0
  %1492 = vmatprep.subr.mxu0 0.0
  %1493 = vmatpush1.msra.mxu0 0.0
  %1494 = vmatprep.subr.mxu0 0.0
  %1495 = vmatpush1.msra.mxu0 0.0
  %1496 = vmatprep.subr.mxu0 0.0
  %1497 = vmatpush1.msra.mxu0 0.0
  %1498 = vmatprep.subr.mxu0 0.0
  %1499 = vmatpush1.msra.mxu0 0.0
  %1500 = vmatprep.subr.mxu0 0.0
  %1501 = vmatpush1.msra.mxu0 0.0
  %1502 = vmatprep.subr.mxu0 0.0
  %1503 = vmatpush1.msra.mxu0 0.0
  %1504 = vmatprep.subr.mxu0 0.0
  %1505 = vmatpush1.msra.mxu0 0.0
  %1506 = vmatprep.subr.mxu0 0.0
  %1507 = vmatpush1.msra.mxu0 0.0
  %1508 = vmatprep.subr.mxu0 0.0
  %1509 = vmatpush1.msra.mxu0 0.0
  %1510 = vmatprep.subr.mxu0 0.0
  %1511 = vmatpush1.msra.mxu0 0.0
  %1512 = vmatprep.subr.mxu0 0.0
  %1513 = vmatpush1.msra.mxu0 0.0
  %1514 = vmatprep.subr.mxu0 0.0
  %1515 = vmatpush1.msra.mxu0 0.0
  %1516 = vmatprep.subr.mxu0 0.0
  %1517 = vmatpush1.msra.mxu0 0.0
  %1518 = vmatprep.subr.mxu0 0.0
  %1519 = vmatpush1.msra.mxu0 0.0
  %1520 = vmatprep.subr.mxu0 0.0
  %1521 = vmatpush1.msra.mxu0 0.0
  %1522 = vmatprep.subr.mxu0 0.0
  %1523 = vmatpush1.msra.mxu0 0.0
  %1524 = vmatprep.subr.mxu0 0.0
  %1525 = vmatpush1.msra.mxu0 0.0
  %1526 = vmatprep.subr.mxu0 0.0
  %1527 = vmatpush1.msra.mxu0 0.0
  %1528 = vmatprep.subr.mxu0 0.0
  %1529 = vmatpush1.msra.mxu0 0.0
  %1530 = vmatprep.subr.mxu0 0.0
  %1531 = vmatpush1.msra.mxu0 0.0
  %1532 = vmatprep.subr.mxu0 0.0
  %1533 = vmatpush1.msra.mxu0 0.0
  %1534 = vmatprep.subr.mxu0 0.0
  %1535 = vmatpush1.msra.mxu0 0.0
  %1536 = vmatprep.subr.mxu0 0.0
  %1537 = vmatpush1.msra.mxu0 0.0
  %1538 = vmatprep.subr.mxu0 0.0
  %1539 = vmatpush1.msra.mxu0 0.0
  %1540 = vmatprep.mubr.f32.mxu0 0.0
  %1541 = vmatmul.mubr.f32.gmra.mrb[0].mxu0 %v1474
  %v1542 = vpop.f32.mrb[0].mxu0
  %v1543 = vadd.f32 0.0, %v1542
  %v1544 = vpop.f32.mrb[0].mxu0
  %1545 = vdwg.mxu0
  %v1547 = vrot.slane %v1543, 3
  %v1549 = vadd.f32 %v415, %v1547
  %v1550 = vtanh.pop %v1549
  %v1552 = vrot.slane %v1550, 5
  %v1553 = vsel %vm249, %v1552, 0
  %1555 = vmatprep.subr.mxu0 0.0
  %1556 = vmatpush1.msra.mxu0 %v427
  %1557 = vmatprep.subr.mxu0 0.0
  %1558 = vmatpush1.msra.mxu0 %v428
  %1559 = vmatprep.subr.mxu0 0.0
  %1560 = vmatpush1.msra.mxu0 %v429
  %1561 = vmatprep.subr.mxu0 0.0
  %1562 = vmatpush1.msra.mxu0 %v430
  %1563 = vmatprep.subr.mxu0 0.0
  %1564 = vmatpush1.msra.mxu0 0.0
  %1565 = vmatprep.subr.mxu0 0.0
  %1566 = vmatpush1.msra.mxu0 0.0
  %1567 = vmatprep.subr.mxu0 0.0
  %1568 = vmatpush1.msra.mxu0 0.0
  %1569 = vmatprep.subr.mxu0 0.0
  %1570 = vmatpush1.msra.mxu0 0.0
  %1571 = vmatprep.subr.mxu0 0.0
  %1572 = vmatpush1.msra.mxu0 0.0
  %1573 = vmatprep.subr.mxu0 0.0
  %1574 = vmatpush1.msra.mxu0 0.0
  %1575 = vmatprep.subr.mxu0 0.0
  %1576 = vmatpush1.msra.mxu0 0.0
  %1577 = vmatprep.subr.mxu0 0.0
  %1578 = vmatpush1.msra.mxu0 0.0
  %1579 = vmatprep.subr.mxu0 0.0
  %1580 = vmatpush1.msra.mxu0 0.0
  %1581 = vmatprep.subr.mxu0 0.0
  %1582 = vmatpush1.msra.mxu0 0.0
  %1583 = vmatprep.subr.mxu0 0.0
  %1584 = vmatpush1.msra.mxu0 0.0
  %1585 = vmatprep.subr.mxu0 0.0
  %1586 = vmatpush1.msra.mxu0 0.0
  %1587 = vmatprep.subr.mxu0 0.0
  %1588 = vmatpush1.msra.mxu0 0.0
  %1589 = vmatprep.subr.mxu0 0.0
  %1590 = vmatpush1.msra.mxu0 0.0
  %1591 = vmatprep.subr.mxu0 0.0
  %1592 = vmatpush1.msra.mxu0 0.0
  %1593 = vmatprep.subr.mxu0 0.0
  %1594 = vmatpush1.msra.mxu0 0.0
  %1595 = vmatprep.subr.mxu0 0.0
  %1596 = vmatpush1.msra.mxu0 0.0
  %1597 = vmatprep.subr.mxu0 0.0
  %1598 = vmatpush1.msra.mxu0 0.0
  %1599 = vmatprep.subr.mxu0 0.0
  %1600 = vmatpush1.msra.mxu0 0.0
  %1601 = vmatprep.subr.mxu0 0.0
  %1602 = vmatpush1.msra.mxu0 0.0
  %1603 = vmatprep.subr.mxu0 0.0
  %1604 = vmatpush1.msra.mxu0 0.0
  %1605 = vmatprep.subr.mxu0 0.0
  %1606 = vmatpush1.msra.mxu0 0.0
  %1607 = vmatprep.subr.mxu0 0.0
  %1608 = vmatpush1.msra.mxu0 0.0
  %1609 = vmatprep.subr.mxu0 0.0
  %1610 = vmatpush1.msra.mxu0 0.0
  %1611 = vmatprep.subr.mxu0 0.0
  %1612 = vmatpush1.msra.mxu0 0.0
  %1613 = vmatprep.subr.mxu0 0.0
  %1614 = vmatpush1.msra.mxu0 0.0
  %1615 = vmatprep.subr.mxu0 0.0
  %1616 = vmatpush1.msra.mxu0 0.0
  %1617 = vmatprep.subr.mxu0 0.0
  %1618 = vmatpush1.msra.mxu0 0.0
  %1619 = vmatprep.mubr.f32.mxu0 0.0
  %1620 = vmatmul.mubr.f32.gmra.mrb[0].mxu0 %v1553
  %v1621 = vpop.f32.mrb[0].mxu0
  %v1622 = vadd.f32 0.0, %v1621
  %v1623 = vpop.f32.mrb[0].mxu0
  %1624 = vdwg.mxu0
  %v1626 = vrot.slane %v1622, 2
  %v1628 = vadd.f32 %v415, %v1626
  %v1629 = vtanh.pop %v1628
  %v1631 = vrot.slane %v1629, 6
  %v1632 = vsel %vm249, %v1631, 0
  %1634 = vmatprep.subr.mxu0 0.0
  %1635 = vmatpush1.msra.mxu0 %v427
  %1636 = vmatprep.subr.mxu0 0.0
  %1637 = vmatpush1.msra.mxu0 %v428
  %1638 = vmatprep.subr.mxu0 0.0
  %1639 = vmatpush1.msra.mxu0 %v429
  %1640 = vmatprep.subr.mxu0 0.0
  %1641 = vmatpush1.msra.mxu0 %v430
  %1642 = vmatprep.subr.mxu0 0.0
  %1643 = vmatpush1.msra.mxu0 0.0
  %1644 = vmatprep.subr.mxu0 0.0
  %1645 = vmatpush1.msra.mxu0 0.0
  %1646 = vmatprep.subr.mxu0 0.0
  %1647 = vmatpush1.msra.mxu0 0.0
  %1648 = vmatprep.subr.mxu0 0.0
  %1649 = vmatpush1.msra.mxu0 0.0
  %1650 = vmatprep.subr.mxu0 0.0
  %1651 = vmatpush1.msra.mxu0 0.0
  %1652 = vmatprep.subr.mxu0 0.0
  %1653 = vmatpush1.msra.mxu0 0.0
  %1654 = vmatprep.subr.mxu0 0.0
  %1655 = vmatpush1.msra.mxu0 0.0
  %1656 = vmatprep.subr.mxu0 0.0
  %1657 = vmatpush1.msra.mxu0 0.0
  %1658 = vmatprep.subr.mxu0 0.0
  %1659 = vmatpush1.msra.mxu0 0.0
  %1660 = vmatprep.subr.mxu0 0.0
  %1661 = vmatpush1.msra.mxu0 0.0
  %1662 = vmatprep.subr.mxu0 0.0
  %1663 = vmatpush1.msra.mxu0 0.0
  %1664 = vmatprep.subr.mxu0 0.0
  %1665 = vmatpush1.msra.mxu0 0.0
  %1666 = vmatprep.subr.mxu0 0.0
  %1667 = vmatpush1.msra.mxu0 0.0
  %1668 = vmatprep.subr.mxu0 0.0
  %1669 = vmatpush1.msra.mxu0 0.0
  %1670 = vmatprep.subr.mxu0 0.0
  %1671 = vmatpush1.msra.mxu0 0.0
  %1672 = vmatprep.subr.mxu0 0.0
  %1673 = vmatpush1.msra.mxu0 0.0
  %1674 = vmatprep.subr.mxu0 0.0
  %1675 = vmatpush1.msra.mxu0 0.0
  %1676 = vmatprep.subr.mxu0 0.0
  %1677 = vmatpush1.msra.mxu0 0.0
  %1678 = vmatprep.subr.mxu0 0.0
  %1679 = vmatpush1.msra.mxu0 0.0
  %1680 = vmatprep.subr.mxu0 0.0
  %1681 = vmatpush1.msra.mxu0 0.0
  %1682 = vmatprep.subr.mxu0 0.0
  %1683 = vmatpush1.msra.mxu0 0.0
  %1684 = vmatprep.subr.mxu0 0.0
  %1685 = vmatpush1.msra.mxu0 0.0
  %1686 = vmatprep.subr.mxu0 0.0
  %1687 = vmatpush1.msra.mxu0 0.0
  %1688 = vmatprep.subr.mxu0 0.0
  %1689 = vmatpush1.msra.mxu0 0.0
  %1690 = vmatprep.subr.mxu0 0.0
  %1691 = vmatpush1.msra.mxu0 0.0
  %1692 = vmatprep.subr.mxu0 0.0
  %1693 = vmatpush1.msra.mxu0 0.0
  %1694 = vmatprep.subr.mxu0 0.0
  %1695 = vmatpush1.msra.mxu0 0.0
  %1696 = vmatprep.subr.mxu0 0.0
  %1697 = vmatpush1.msra.mxu0 0.0
  %1698 = vmatprep.mubr.f32.mxu0 0.0
  %1699 = vmatmul.mubr.f32.gmra.mrb[0].mxu0 %v1632
  %v1700 = vpop.f32.mrb[0].mxu0
  %v1701 = vadd.f32 0.0, %v1700
  %v1702 = vpop.f32.mrb[0].mxu0
  %1703 = vdwg.mxu0
  %v1705 = vrot.slane %v1701, 1
  %v1707 = vadd.f32 %v415, %v1705
  %v1708 = vtanh.pop %v1707
  %v1709 = vsel %vm1067, %v1156, %v1234
  %v1710 = vsel %vm1069, %v1709, %v1313
  %v1711 = vsel %vm1071, %v1710, %v1392
  %v1712 = vsel %vm1073, %v1711, %v1471
  %v1713 = vsel %vm1075, %v1712, %v1550
  %v1714 = vsel %vm1077, %v1713, %v1629
  %v1715 = vsel %vm1079, %v1714, %v1708
  %v1717 = vsel %vm249, %v1715, 0
  %v1720 = vsel %vm249, %v1080, 0
  %1722 = vmatprep.subr.mxu0 0.0
  %1723 = vmatpush1.xpose.msra.mxu0 %v1720
  %1724 = vmatprep.subr.mxu0 0.0
  %1725 = vmatpush1.xpose.msra.mxu0 0.0
  %1726 = vmatprep.subr.mxu0 0.0
  %1727 = vmatpush1.xpose.msra.mxu0 0.0
  %1728 = vmatprep.subr.mxu0 0.0
  %1729 = vmatpush1.xpose.msra.mxu0 0.0
  %1730 = vmatprep.subr.mxu0 0.0
  %1731 = vmatpush1.xpose.msra.mxu0 0.0
  %1732 = vmatprep.subr.mxu0 0.0
  %1733 = vmatpush1.xpose.msra.mxu0 0.0
  %1734 = vmatprep.subr.mxu0 0.0
  %1735 = vmatpush1.xpose.msra.mxu0 0.0
  %1736 = vmatprep.subr.mxu0 0.0
  %1737 = vmatpush1.xpose.msra.mxu0 0.0
  %1738 = vmatprep.subr.mxu0 0.0
  %1739 = vmatpush1.xpose.msra.mxu0 0.0
  %1740 = vmatprep.subr.mxu0 0.0
  %1741 = vmatpush1.xpose.msra.mxu0 0.0
  %1742 = vmatprep.subr.mxu0 0.0
  %1743 = vmatpush1.xpose.msra.mxu0 0.0
  %1744 = vmatprep.subr.mxu0 0.0
  %1745 = vmatpush1.xpose.msra.mxu0 0.0
  %1746 = vmatprep.subr.mxu0 0.0
  %1747 = vmatpush1.xpose.msra.mxu0 0.0
  %1748 = vmatprep.subr.mxu0 0.0
  %1749 = vmatpush1.xpose.msra.mxu0 0.0
  %1750 = vmatprep.subr.mxu0 0.0
  %1751 = vmatpush1.xpose.msra.mxu0 0.0
  %1752 = vmatprep.subr.mxu0 0.0
  %1753 = vmatpush1.xpose.msra.mxu0 0.0
  %1754 = vmatprep.subr.mxu0 0.0
  %1755 = vmatpush1.xpose.msra.mxu0 0.0
  %1756 = vmatprep.subr.mxu0 0.0
  %1757 = vmatpush1.xpose.msra.mxu0 0.0
  %1758 = vmatprep.subr.mxu0 0.0
  %1759 = vmatpush1.xpose.msra.mxu0 0.0
  %1760 = vmatprep.subr.mxu0 0.0
  %1761 = vmatpush1.xpose.msra.mxu0 0.0
  %1762 = vmatprep.subr.mxu0 0.0
  %1763 = vmatpush1.xpose.msra.mxu0 0.0
  %1764 = vmatprep.subr.mxu0 0.0
  %1765 = vmatpush1.xpose.msra.mxu0 0.0
  %1766 = vmatprep.subr.mxu0 0.0
  %1767 = vmatpush1.xpose.msra.mxu0 0.0
  %1768 = vmatprep.subr.mxu0 0.0
  %1769 = vmatpush1.xpose.msra.mxu0 0.0
  %1770 = vmatprep.subr.mxu0 0.0
  %1771 = vmatpush1.xpose.msra.mxu0 0.0
  %1772 = vmatprep.subr.mxu0 0.0
  %1773 = vmatpush1.xpose.msra.mxu0 0.0
  %1774 = vmatprep.subr.mxu0 0.0
  %1775 = vmatpush1.xpose.msra.mxu0 0.0
  %1776 = vmatprep.subr.mxu0 0.0
  %1777 = vmatpush1.xpose.msra.mxu0 0.0
  %1778 = vmatprep.subr.mxu0 0.0
  %1779 = vmatpush1.xpose.msra.mxu0 0.0
  %1780 = vmatprep.subr.mxu0 0.0
  %1781 = vmatpush1.xpose.msra.mxu0 0.0
  %1782 = vmatprep.subr.mxu0 0.0
  %1783 = vmatpush1.xpose.msra.mxu0 0.0
  %1784 = vmatprep.subr.mxu0 0.0
  %1785 = vmatpush1.xpose.msra.mxu0 0.0
  %1786 = vmatprep.mubr.f32.mxu0 0.0
  %1787 = vmatmul.mubr.f32.gmra.mrb[0].mxu0 %v1717
  %v1788 = vpop.f32.mrb[0].mxu0
  %v1789 = vadd.f32 0.0, %v1788
  %v1790 = vpop.f32.mrb[0].mxu0
  %1791 = vdwg.mxu0
  %vm1792 = vcmask 64512
  %v1793 = vsel %vm1792, %v1789, -inf
  %1794 = vmax.xlane.f32.xlu0 %v1793
  %v1795 = vpop.xlane.xlu0 %1794
  %v1796 = vsub.f32 %v1789, %v1795
  %v1797 = vmul.f32 %v1796, 1.442695
  %v1798 = vpow.pop %v1797
  %v1799 = vsel %vm1792, %v1798, 0.0
  %1800 = vadd.xlane.f32.xlu0 %v1799
  %v1801 = vpop.xlane.xlu0 %1800
  %v1802 = vrcp.pop %v1801
  %v1803 = vmul.f32 %v1798, %v1802
  %v1805 = vsel %vm1792, %v1803, 0
  %1807 = vmatprep.subr.mxu0 0.0
  %1808 = vmatpush1.msra.mxu0 %v1080
  %1809 = vmatprep.subr.mxu0 0.0
  %1810 = vmatpush1.msra.mxu0 0.0
  %1811 = vmatprep.subr.mxu0 0.0
  %1812 = vmatpush1.msra.mxu0 0.0
  %1813 = vmatprep.subr.mxu0 0.0
  %1814 = vmatpush1.msra.mxu0 0.0
  %1815 = vmatprep.subr.mxu0 0.0
  %1816 = vmatpush1.msra.mxu0 0.0
  %1817 = vmatprep.subr.mxu0 0.0
  %1818 = vmatpush1.msra.mxu0 0.0
  %1819 = vmatprep.subr.mxu0 0.0
  %1820 = vmatpush1.msra.mxu0 0.0
  %1821 = vmatprep.subr.mxu0 0.0
  %1822 = vmatpush1.msra.mxu0 0.0
  %1823 = vmatprep.subr.mxu0 0.0
  %1824 = vmatpush1.msra.mxu0 0.0
  %1825 = vmatprep.subr.mxu0 0.0
  %1826 = vmatpush1.msra.mxu0 0.0
  %1827 = vmatprep.subr.mxu0 0.0
  %1828 = vmatpush1.msra.mxu0 0.0
  %1829 = vmatprep.subr.mxu0 0.0
  %1830 = vmatpush1.msra.mxu0 0.0
  %1831 = vmatprep.subr.mxu0 0.0
  %1832 = vmatpush1.msra.mxu0 0.0
  %1833 = vmatprep.subr.mxu0 0.0
  %1834 = vmatpush1.msra.mxu0 0.0
  %1835 = vmatprep.subr.mxu0 0.0
  %1836 = vmatpush1.msra.mxu0 0.0
  %1837 = vmatprep.subr.mxu0 0.0
  %1838 = vmatpush1.msra.mxu0 0.0
  %1839 = vmatprep.subr.mxu0 0.0
  %1840 = vmatpush1.msra.mxu0 0.0
  %1841 = vmatprep.subr.mxu0 0.0
  %1842 = vmatpush1.msra.mxu0 0.0
  %1843 = vmatprep.subr.mxu0 0.0
  %1844 = vmatpush1.msra.mxu0 0.0
  %1845 = vmatprep.subr.mxu0 0.0
  %1846 = vmatpush1.msra.mxu0 0.0
  %1847 = vmatprep.subr.mxu0 0.0
  %1848 = vmatpush1.msra.mxu0 0.0
  %1849 = vmatprep.subr.mxu0 0.0
  %1850 = vmatpush1.msra.mxu0 0.0
  %1851 = vmatprep.subr.mxu0 0.0
  %1852 = vmatpush1.msra.mxu0 0.0
  %1853 = vmatprep.subr.mxu0 0.0
  %1854 = vmatpush1.msra.mxu0 0.0
  %1855 = vmatprep.subr.mxu0 0.0
  %1856 = vmatpush1.msra.mxu0 0.0
  %1857 = vmatprep.subr.mxu0 0.0
  %1858 = vmatpush1.msra.mxu0 0.0
  %1859 = vmatprep.subr.mxu0 0.0
  %1860 = vmatpush1.msra.mxu0 0.0
  %1861 = vmatprep.subr.mxu0 0.0
  %1862 = vmatpush1.msra.mxu0 0.0
  %1863 = vmatprep.subr.mxu0 0.0
  %1864 = vmatpush1.msra.mxu0 0.0
  %1865 = vmatprep.subr.mxu0 0.0
  %1866 = vmatpush1.msra.mxu0 0.0
  %1867 = vmatprep.subr.mxu0 0.0
  %1868 = vmatpush1.msra.mxu0 0.0
  %1869 = vmatprep.subr.mxu0 0.0
  %1870 = vmatpush1.msra.mxu0 0.0
  %1871 = vmatprep.mubr.f32.mxu0 0.0
  %1872 = vmatmul.mubr.f32.gmra.mrb[0].mxu0 %v1805
  %v1873 = vpop.f32.mrb[0].mxu0
  %v1874 = vadd.f32 0.0, %v1873
  %v1875 = vpop.f32.mrb[0].mxu0
  %1876 = vdwg.mxu0
  %v1878 = vsel %vm249, %v1874, 0
  %1880 = vmatprep.subr.mxu0 0.0
  %1881 = vmatpush1.msra.mxu0 %v435
  %1882 = vmatprep.subr.mxu0 0.0
  %1883 = vmatpush1.msra.mxu0 %v436
  %1884 = vmatprep.subr.mxu0 0.0
  %1885 = vmatpush1.msra.mxu0 %v437
  %1886 = vmatprep.subr.mxu0 0.0
  %1887 = vmatpush1.msra.mxu0 %v438
  %1888 = vmatprep.subr.mxu0 0.0
  %1889 = vmatpush1.msra.mxu0 0.0
  %1890 = vmatprep.subr.mxu0 0.0
  %1891 = vmatpush1.msra.mxu0 0.0
  %1892 = vmatprep.subr.mxu0 0.0
  %1893 = vmatpush1.msra.mxu0 0.0
  %1894 = vmatprep.subr.mxu0 0.0
  %1895 = vmatpush1.msra.mxu0 0.0
  %1896 = vmatprep.subr.mxu0 0.0
  %1897 = vmatpush1.msra.mxu0 0.0
  %1898 = vmatprep.subr.mxu0 0.0
  %1899 = vmatpush1.msra.mxu0 0.0
  %1900 = vmatprep.subr.mxu0 0.0
  %1901 = vmatpush1.msra.mxu0 0.0
  %1902 = vmatprep.subr.mxu0 0.0
  %1903 = vmatpush1.msra.mxu0 0.0
  %1904 = vmatprep.subr.mxu0 0.0
  %1905 = vmatpush1.msra.mxu0 0.0
  %1906 = vmatprep.subr.mxu0 0.0
  %1907 = vmatpush1.msra.mxu0 0.0
  %1908 = vmatprep.subr.mxu0 0.0
  %1909 = vmatpush1.msra.mxu0 0.0
  %1910 = vmatprep.subr.mxu0 0.0
  %1911 = vmatpush1.msra.mxu0 0.0
  %1912 = vmatprep.subr.mxu0 0.0
  %1913 = vmatpush1.msra.mxu0 0.0
  %1914 = vmatprep.subr.mxu0 0.0
  %1915 = vmatpush1.msra.mxu0 0.0
  %1916 = vmatprep.subr.mxu0 0.0
  %1917 = vmatpush1.msra.mxu0 0.0
  %1918 = vmatprep.subr.mxu0 0.0
  %1919 = vmatpush1.msra.mxu0 0.0
  %1920 = vmatprep.subr.mxu0 0.0
  %1921 = vmatpush1.msra.mxu0 0.0
  %1922 = vmatprep.subr.mxu0 0.0
  %1923 = vmatpush1.msra.mxu0 0.0
  %1924 = vmatprep.subr.mxu0 0.0
  %1925 = vmatpush1.msra.mxu0 0.0
  %1926 = vmatprep.subr.mxu0 0.0
  %1927 = vmatpush1.msra.mxu0 0.0
  %1928 = vmatprep.subr.mxu0 0.0
  %1929 = vmatpush1.msra.mxu0 0.0
  %1930 = vmatprep.subr.mxu0 0.0
  %1931 = vmatpush1.msra.mxu0 0.0
  %1932 = vmatprep.subr.mxu0 0.0
  %1933 = vmatpush1.msra.mxu0 0.0
  %1934 = vmatprep.subr.mxu0 0.0
  %1935 = vmatpush1.msra.mxu0 0.0
  %1936 = vmatprep.subr.mxu0 0.0
  %1937 = vmatpush1.msra.mxu0 0.0
  %1938 = vmatprep.subr.mxu0 0.0
  %1939 = vmatpush1.msra.mxu0 0.0
  %1940 = vmatprep.subr.mxu0 0.0
  %1941 = vmatpush1.msra.mxu0 0.0
  %1942 = vmatprep.subr.mxu0 0.0
  %1943 = vmatpush1.msra.mxu0 0.0
  %1944 = vmatprep.mubr.f32.mxu0 0.0
  %1945 = vmatmul.mubr.f32.gmra.mrb[0].mxu0 %v1878
  %v1946 = vpop.f32.mrb[0].mxu0
  %v1947 = vadd.f32 0.0, %v1946
  %v1948 = vpop.f32.mrb[0].mxu0
  %1949 = vdwg.mxu0
  %1950 = vmatprep.subr.mxu0 0.0
  %1951 = vmatpush1.msra.mxu0 %v431
  %1952 = vmatprep.subr.mxu0 0.0
  %1953 = vmatpush1.msra.mxu0 %v432
  %1954 = vmatprep.subr.mxu0 0.0
  %1955 = vmatpush1.msra.mxu0 %v433
  %1956 = vmatprep.subr.mxu0 0.0
  %1957 = vmatpush1.msra.mxu0 %v434
  %1958 = vmatprep.subr.mxu0 0.0
  %1959 = vmatpush1.msra.mxu0 0.0
  %1960 = vmatprep.subr.mxu0 0.0
  %1961 = vmatpush1.msra.mxu0 0.0
  %1962 = vmatprep.subr.mxu0 0.0
  %1963 = vmatpush1.msra.mxu0 0.0
  %1964 = vmatprep.subr.mxu0 0.0
  %1965 = vmatpush1.msra.mxu0 0.0
  %1966 = vmatprep.subr.mxu0 0.0
  %1967 = vmatpush1.msra.mxu0 0.0
  %1968 = vmatprep.subr.mxu0 0.0
  %1969 = vmatpush1.msra.mxu0 0.0
  %1970 = vmatprep.subr.mxu0 0.0
  %1971 = vmatpush1.msra.mxu0 0.0
  %1972 = vmatprep.subr.mxu0 0.0
  %1973 = vmatpush1.msra.mxu0 0.0
  %1974 = vmatprep.subr.mxu0 0.0
  %1975 = vmatpush1.msra.mxu0 0.0
  %1976 = vmatprep.subr.mxu0 0.0
  %1977 = vmatpush1.msra.mxu0 0.0
  %1978 = vmatprep.subr.mxu0 0.0
  %1979 = vmatpush1.msra.mxu0 0.0
  %1980 = vmatprep.subr.mxu0 0.0
  %1981 = vmatpush1.msra.mxu0 0.0
  %1982 = vmatprep.subr.mxu0 0.0
  %1983 = vmatpush1.msra.mxu0 0.0
  %1984 = vmatprep.subr.mxu0 0.0
  %1985 = vmatpush1.msra.mxu0 0.0
  %1986 = vmatprep.subr.mxu0 0.0
  %1987 = vmatpush1.msra.mxu0 0.0
  %1988 = vmatprep.subr.mxu0 0.0
  %1989 = vmatpush1.msra.mxu0 0.0
  %1990 = vmatprep.subr.mxu0 0.0
  %1991 = vmatpush1.msra.mxu0 0.0
  %1992 = vmatprep.subr.mxu0 0.0
  %1993 = vmatpush1.msra.mxu0 0.0
  %1994 = vmatprep.subr.mxu0 0.0
  %1995 = vmatpush1.msra.mxu0 0.0
  %1996 = vmatprep.subr.mxu0 0.0
  %1997 = vmatpush1.msra.mxu0 0.0
  %1998 = vmatprep.subr.mxu0 0.0
  %1999 = vmatpush1.msra.mxu0 0.0
  %2000 = vmatprep.subr.mxu0 0.0
  %2001 = vmatpush1.msra.mxu0 0.0
  %2002 = vmatprep.subr.mxu0 0.0
  %2003 = vmatpush1.msra.mxu0 0.0
  %2004 = vmatprep.subr.mxu0 0.0
  %2005 = vmatpush1.msra.mxu0 0.0
  %2006 = vmatprep.subr.mxu0 0.0
  %2007 = vmatpush1.msra.mxu0 0.0
  %2008 = vmatprep.subr.mxu0 0.0
  %2009 = vmatpush1.msra.mxu0 0.0
  %2010 = vmatprep.subr.mxu0 0.0
  %2011 = vmatpush1.msra.mxu0 0.0
  %2012 = vmatprep.subr.mxu0 0.0
  %2013 = vmatpush1.msra.mxu0 0.0
  %2014 = vmatprep.mubr.f32.mxu0 0.0
  %2015 = vmatmul.mubr.f32.gmra.mrb[0].mxu0 %v1717
  %v2016 = vpop.f32.mrb[0].mxu0
  %v2017 = vadd.f32 %v1947, %v2016
  %v2018 = vpop.f32.mrb[0].mxu0
  %2019 = vdwg.mxu0
  %v2021 = vlaneseq
  %v2022 = vshrl.u32 %v2021, 7
  %v2023 = vsub.s32 0, %v2022
  %v2024 = vrot.slane %v439, %v2023
  %v2026 = vadd.f32 %v2017, %v2024
  %2027 = vst [vmem:[%s12] sm:$0xff] %v2026
  %v2028 = vadd.f32 %v328, %v510
  %v2029 = vtanh.pop %v2028
  %v2031 = vsel %vm249, %v2029, 0
  %2033 = vmatprep.subr.mxu0 0.0
  %2034 = vmatpush1.msra.mxu0 %v423
  %2035 = vmatprep.subr.mxu0 0.0
  %2036 = vmatpush1.msra.mxu0 %v424
  %2037 = vmatprep.subr.mxu0 0.0
  %2038 = vmatpush1.msra.mxu0 %v425
  %2039 = vmatprep.subr.mxu0 0.0
  %2040 = vmatpush1.msra.mxu0 %v426
  %2041 = vmatprep.subr.mxu0 0.0
  %2042 = vmatpush1.msra.mxu0 0.0
  %2043 = vmatprep.subr.mxu0 0.0
  %2044 = vmatpush1.msra.mxu0 0.0
  %2045 = vmatprep.subr.mxu0 0.0
  %2046 = vmatpush1.msra.mxu0 0.0
  %2047 = vmatprep.subr.mxu0 0.0
  %2048 = vmatpush1.msra.mxu0 0.0
  %2049 = vmatprep.subr.mxu0 0.0
  %2050 = vmatpush1.msra.mxu0 0.0
  %2051 = vmatprep.subr.mxu0 0.0
  %2052 = vmatpush1.msra.mxu0 0.0
  %2053 = vmatprep.subr.mxu0 0.0
  %2054 = vmatpush1.msra.mxu0 0.0
  %2055 = vmatprep.subr.mxu0 0.0
  %2056 = vmatpush1.msra.mxu0 0.0
  %2057 = vmatprep.subr.mxu0 0.0
  %2058 = vmatpush1.msra.mxu0 0.0
  %2059 = vmatprep.subr.mxu0 0.0
  %2060 = vmatpush1.msra.mxu0 0.0
  %2061 = vmatprep.subr.mxu0 0.0
  %2062 = vmatpush1.msra.mxu0 0.0
  %2063 = vmatprep.subr.mxu0 0.0
  %2064 = vmatpush1.msra.mxu0 0.0
  %2065 = vmatprep.subr.mxu0 0.0
  %2066 = vmatpush1.msra.mxu0 0.0
  %2067 = vmatprep.subr.mxu0 0.0
  %2068 = vmatpush1.msra.mxu0 0.0
  %2069 = vmatprep.subr.mxu0 0.0
  %2070 = vmatpush1.msra.mxu0 0.0
  %2071 = vmatprep.subr.mxu0 0.0
  %2072 = vmatpush1.msra.mxu0 0.0
  %2073 = vmatprep.subr.mxu0 0.0
  %2074 = vmatpush1.msra.mxu0 0.0
  %2075 = vmatprep.subr.mxu0 0.0
  %2076 = vmatpush1.msra.mxu0 0.0
  %2077 = vmatprep.subr.mxu0 0.0
  %2078 = vmatpush1.msra.mxu0 0.0
  %2079 = vmatprep.subr.mxu0 0.0
  %2080 = vmatpush1.msra.mxu0 0.0
  %2081 = vmatprep.subr.mxu0 0.0
  %2082 = vmatpush1.msra.mxu0 0.0
  %2083 = vmatprep.subr.mxu0 0.0
  %2084 = vmatpush1.msra.mxu0 0.0
  %2085 = vmatprep.subr.mxu0 0.0
  %2086 = vmatpush1.msra.mxu0 0.0
  %2087 = vmatprep.subr.mxu0 0.0
  %2088 = vmatpush1.msra.mxu0 0.0
  %2089 = vmatprep.subr.mxu0 0.0
  %2090 = vmatpush1.msra.mxu0 0.0
  %2091 = vmatprep.subr.mxu0 0.0
  %2092 = vmatpush1.msra.mxu0 0.0
  %2093 = vmatprep.subr.mxu0 0.0
  %2094 = vmatpush1.msra.mxu0 0.0
  %2095 = vmatprep.subr.mxu0 0.0
  %2096 = vmatpush1.msra.mxu0 0.0
  %2097 = vmatprep.mubr.f32.mxu0 0.0
  %2098 = vmatmul.mubr.f32.gmra.mrb[0].mxu0 %v2031
  %v2099 = vpop.f32.mrb[0].mxu0
  %v2100 = vadd.f32 0.0, %v2099
  %v2101 = vpop.f32.mrb[0].mxu0
  %2102 = vdwg.mxu0
  %v2104 = vrot.slane %v2100, 7
  %v2106 = vadd.f32 %v328, %v2104
  %v2107 = vtanh.pop %v2106
  %v2109 = vrot.slane %v2107, 1
  %v2110 = vsel %vm249, %v2109, 0
  %2112 = vmatprep.subr.mxu0 0.0
  %2113 = vmatpush1.msra.mxu0 %v423
  %2114 = vmatprep.subr.mxu0 0.0
  %2115 = vmatpush1.msra.mxu0 %v424
  %2116 = vmatprep.subr.mxu0 0.0
  %2117 = vmatpush1.msra.mxu0 %v425
  %2118 = vmatprep.subr.mxu0 0.0
  %2119 = vmatpush1.msra.mxu0 %v426
  %2120 = vmatprep.subr.mxu0 0.0
  %2121 = vmatpush1.msra.mxu0 0.0
  %2122 = vmatprep.subr.mxu0 0.0
  %2123 = vmatpush1.msra.mxu0 0.0
  %2124 = vmatprep.subr.mxu0 0.0
  %2125 = vmatpush1.msra.mxu0 0.0
  %2126 = vmatprep.subr.mxu0 0.0
  %2127 = vmatpush1.msra.mxu0 0.0
  %2128 = vmatprep.subr.mxu0 0.0
  %2129 = vmatpush1.msra.mxu0 0.0
  %2130 = vmatprep.subr.mxu0 0.0
  %2131 = vmatpush1.msra.mxu0 0.0
  %2132 = vmatprep.subr.mxu0 0.0
  %2133 = vmatpush1.msra.mxu0 0.0
  %2134 = vmatprep.subr.mxu0 0.0
  %2135 = vmatpush1.msra.mxu0 0.0
  %2136 = vmatprep.subr.mxu0 0.0
  %2137 = vmatpush1.msra.mxu0 0.0
  %2138 = vmatprep.subr.mxu0 0.0
  %2139 = vmatpush1.msra.mxu0 0.0
  %2140 = vmatprep.subr.mxu0 0.0
  %2141 = vmatpush1.msra.mxu0 0.0
  %2142 = vmatprep.subr.mxu0 0.0
  %2143 = vmatpush1.msra.mxu0 0.0
  %2144 = vmatprep.subr.mxu0 0.0
  %2145 = vmatpush1.msra.mxu0 0.0
  %2146 = vmatprep.subr.mxu0 0.0
  %2147 = vmatpush1.msra.mxu0 0.0
  %2148 = vmatprep.subr.mxu0 0.0
  %2149 = vmatpush1.msra.mxu0 0.0
  %2150 = vmatprep.subr.mxu0 0.0
  %2151 = vmatpush1.msra.mxu0 0.0
  %2152 = vmatprep.subr.mxu0 0.0
  %2153 = vmatpush1.msra.mxu0 0.0
  %2154 = vmatprep.subr.mxu0 0.0
  %2155 = vmatpush1.msra.mxu0 0.0
  %2156 = vmatprep.subr.mxu0 0.0
  %2157 = vmatpush1.msra.mxu0 0.0
  %2158 = vmatprep.subr.mxu0 0.0
  %2159 = vmatpush1.msra.mxu0 0.0
  %2160 = vmatprep.subr.mxu0 0.0
  %2161 = vmatpush1.msra.mxu0 0.0
  %2162 = vmatprep.subr.mxu0 0.0
  %2163 = vmatpush1.msra.mxu0 0.0
  %2164 = vmatprep.subr.mxu0 0.0
  %2165 = vmatpush1.msra.mxu0 0.0
  %2166 = vmatprep.subr.mxu0 0.0
  %2167 = vmatpush1.msra.mxu0 0.0
  %2168 = vmatprep.subr.mxu0 0.0
  %2169 = vmatpush1.msra.mxu0 0.0
  %2170 = vmatprep.subr.mxu0 0.0
  %2171 = vmatpush1.msra.mxu0 0.0
  %2172 = vmatprep.subr.mxu0 0.0
  %2173 = vmatpush1.msra.mxu0 0.0
  %2174 = vmatprep.subr.mxu0 0.0
  %2175 = vmatpush1.msra.mxu0 0.0
  %2176 = vmatprep.mubr.f32.mxu0 0.0
  %2177 = vmatmul.mubr.f32.gmra.mrb[0].mxu0 %v2110
  %v2178 = vpop.f32.mrb[0].mxu0
  %v2179 = vadd.f32 0.0, %v2178
  %v2180 = vpop.f32.mrb[0].mxu0
  %2181 = vdwg.mxu0
  %v2183 = vrot.slane %v2179, 6
  %v2185 = vadd.f32 %v328, %v2183
  %v2186 = vtanh.pop %v2185
  %v2188 = vrot.slane %v2186, 2
  %v2189 = vsel %vm249, %v2188, 0
  %2191 = vmatprep.subr.mxu0 0.0
  %2192 = vmatpush1.msra.mxu0 %v423
  %2193 = vmatprep.subr.mxu0 0.0
  %2194 = vmatpush1.msra.mxu0 %v424
  %2195 = vmatprep.subr.mxu0 0.0
  %2196 = vmatpush1.msra.mxu0 %v425
  %2197 = vmatprep.subr.mxu0 0.0
  %2198 = vmatpush1.msra.mxu0 %v426
  %2199 = vmatprep.subr.mxu0 0.0
  %2200 = vmatpush1.msra.mxu0 0.0
  %2201 = vmatprep.subr.mxu0 0.0
  %2202 = vmatpush1.msra.mxu0 0.0
  %2203 = vmatprep.subr.mxu0 0.0
  %2204 = vmatpush1.msra.mxu0 0.0
  %2205 = vmatprep.subr.mxu0 0.0
  %2206 = vmatpush1.msra.mxu0 0.0
  %2207 = vmatprep.subr.mxu0 0.0
  %2208 = vmatpush1.msra.mxu0 0.0
  %2209 = vmatprep.subr.mxu0 0.0
  %2210 = vmatpush1.msra.mxu0 0.0
  %2211 = vmatprep.subr.mxu0 0.0
  %2212 = vmatpush1.msra.mxu0 0.0
  %2213 = vmatprep.subr.mxu0 0.0
  %2214 = vmatpush1.msra.mxu0 0.0
  %2215 = vmatprep.subr.mxu0 0.0
  %2216 = vmatpush1.msra.mxu0 0.0
  %2217 = vmatprep.subr.mxu0 0.0
  %2218 = vmatpush1.msra.mxu0 0.0
  %2219 = vmatprep.subr.mxu0 0.0
  %2220 = vmatpush1.msra.mxu0 0.0
  %2221 = vmatprep.subr.mxu0 0.0
  %2222 = vmatpush1.msra.mxu0 0.0
  %2223 = vmatprep.subr.mxu0 0.0
  %2224 = vmatpush1.msra.mxu0 0.0
  %2225 = vmatprep.subr.mxu0 0.0
  %2226 = vmatpush1.msra.mxu0 0.0
  %2227 = vmatprep.subr.mxu0 0.0
  %2228 = vmatpush1.msra.mxu0 0.0
  %2229 = vmatprep.subr.mxu0 0.0
  %2230 = vmatpush1.msra.mxu0 0.0
  %2231 = vmatprep.subr.mxu0 0.0
  %2232 = vmatpush1.msra.mxu0 0.0
  %2233 = vmatprep.subr.mxu0 0.0
  %2234 = vmatpush1.msra.mxu0 0.0
  %2235 = vmatprep.subr.mxu0 0.0
  %2236 = vmatpush1.msra.mxu0 0.0
  %2237 = vmatprep.subr.mxu0 0.0
  %2238 = vmatpush1.msra.mxu0 0.0
  %2239 = vmatprep.subr.mxu0 0.0
  %2240 = vmatpush1.msra.mxu0 0.0
  %2241 = vmatprep.subr.mxu0 0.0
  %2242 = vmatpush1.msra.mxu0 0.0
  %2243 = vmatprep.subr.mxu0 0.0
  %2244 = vmatpush1.msra.mxu0 0.0
  %2245 = vmatprep.subr.mxu0 0.0
  %2246 = vmatpush1.msra.mxu0 0.0
  %2247 = vmatprep.subr.mxu0 0.0
  %2248 = vmatpush1.msra.mxu0 0.0
  %2249 = vmatprep.subr.mxu0 0.0
  %2250 = vmatpush1.msra.mxu0 0.0
  %2251 = vmatprep.subr.mxu0 0.0
  %2252 = vmatpush1.msra.mxu0 0.0
  %2253 = vmatprep.subr.mxu0 0.0
  %2254 = vmatpush1.msra.mxu0 0.0
  %2255 = vmatprep.mubr.f32.mxu0 0.0
  %2256 = vmatmul.mubr.f32.gmra.mrb[0].mxu0 %v2189
  %v2257 = vpop.f32.mrb[0].mxu0
  %v2258 = vadd.f32 0.0, %v2257
  %v2259 = vpop.f32.mrb[0].mxu0
  %2260 = vdwg.mxu0
  %v2262 = vrot.slane %v2258, 5
  %v2264 = vadd.f32 %v328, %v2262
  %v2265 = vtanh.pop %v2264
  %v2267 = vrot.slane %v2265, 3
  %v2268 = vsel %vm249, %v2267, 0
  %2270 = vmatprep.subr.mxu0 0.0
  %2271 = vmatpush1.msra.mxu0 %v423
  %2272 = vmatprep.subr.mxu0 0.0
  %2273 = vmatpush1.msra.mxu0 %v424
  %2274 = vmatprep.subr.mxu0 0.0
  %2275 = vmatpush1.msra.mxu0 %v425
  %2276 = vmatprep.subr.mxu0 0.0
  %2277 = vmatpush1.msra.mxu0 %v426
  %2278 = vmatprep.subr.mxu0 0.0
  %2279 = vmatpush1.msra.mxu0 0.0
  %2280 = vmatprep.subr.mxu0 0.0
  %2281 = vmatpush1.msra.mxu0 0.0
  %2282 = vmatprep.subr.mxu0 0.0
  %2283 = vmatpush1.msra.mxu0 0.0
  %2284 = vmatprep.subr.mxu0 0.0
  %2285 = vmatpush1.msra.mxu0 0.0
  %2286 = vmatprep.subr.mxu0 0.0
  %2287 = vmatpush1.msra.mxu0 0.0
  %2288 = vmatprep.subr.mxu0 0.0
  %2289 = vmatpush1.msra.mxu0 0.0
  %2290 = vmatprep.subr.mxu0 0.0
  %2291 = vmatpush1.msra.mxu0 0.0
  %2292 = vmatprep.subr.mxu0 0.0
  %2293 = vmatpush1.msra.mxu0 0.0
  %2294 = vmatprep.subr.mxu0 0.0
  %2295 = vmatpush1.msra.mxu0 0.0
  %2296 = vmatprep.subr.mxu0 0.0
  %2297 = vmatpush1.msra.mxu0 0.0
  %2298 = vmatprep.subr.mxu0 0.0
  %2299 = vmatpush1.msra.mxu0 0.0
  %2300 = vmatprep.subr.mxu0 0.0
  %2301 = vmatpush1.msra.mxu0 0.0
  %2302 = vmatprep.subr.mxu0 0.0
  %2303 = vmatpush1.msra.mxu0 0.0
  %2304 = vmatprep.subr.mxu0 0.0
  %2305 = vmatpush1.msra.mxu0 0.0
  %2306 = vmatprep.subr.mxu0 0.0
  %2307 = vmatpush1.msra.mxu0 0.0
  %2308 = vmatprep.subr.mxu0 0.0
  %2309 = vmatpush1.msra.mxu0 0.0
  %2310 = vmatprep.subr.mxu0 0.0
  %2311 = vmatpush1.msra.mxu0 0.0
  %2312 = vmatprep.subr.mxu0 0.0
  %2313 = vmatpush1.msra.mxu0 0.0
  %2314 = vmatprep.subr.mxu0 0.0
  %2315 = vmatpush1.msra.mxu0 0.0
  %2316 = vmatprep.subr.mxu0 0.0
  %2317 = vmatpush1.msra.mxu0 0.0
  %2318 = vmatprep.subr.mxu0 0.0
  %2319 = vmatpush1.msra.mxu0 0.0
  %2320 = vmatprep.subr.mxu0 0.0
  %2321 = vmatpush1.msra.mxu0 0.0
  %2322 = vmatprep.subr.mxu0 0.0
  %2323 = vmatpush1.msra.mxu0 0.0
  %2324 = vmatprep.subr.mxu0 0.0
  %2325 = vmatpush1.msra.mxu0 0.0
  %2326 = vmatprep.subr.mxu0 0.0
  %2327 = vmatpush1.msra.mxu0 0.0
  %2328 = vmatprep.subr.mxu0 0.0
  %2329 = vmatpush1.msra.mxu0 0.0
  %2330 = vmatprep.subr.mxu0 0.0
  %2331 = vmatpush1.msra.mxu0 0.0
  %2332 = vmatprep.subr.mxu0 0.0
  %2333 = vmatpush1.msra.mxu0 0.0
  %2334 = vmatprep.mubr.f32.mxu0 0.0
  %2335 = vmatmul.mubr.f32.gmra.mrb[0].mxu0 %v2268
  %v2336 = vpop.f32.mrb[0].mxu0
  %v2337 = vadd.f32 0.0, %v2336
  %v2338 = vpop.f32.mrb[0].mxu0
  %2339 = vdwg.mxu0
  %v2341 = vrot.slane %v2337, 4
  %v2343 = vadd.f32 %v328, %v2341
  %v2344 = vtanh.pop %v2343
  %v2346 = vrot.slane %v2344, 4
  %v2347 = vsel %vm249, %v2346, 0
  %2349 = vmatprep.subr.mxu0 0.0
  %2350 = vmatpush1.msra.mxu0 %v423
  %2351 = vmatprep.subr.mxu0 0.0
  %2352 = vmatpush1.msra.mxu0 %v424
  %2353 = vmatprep.subr.mxu0 0.0
  %2354 = vmatpush1.msra.mxu0 %v425
  %2355 = vmatprep.subr.mxu0 0.0
  %2356 = vmatpush1.msra.mxu0 %v426
  %2357 = vmatprep.subr.mxu0 0.0
  %2358 = vmatpush1.msra.mxu0 0.0
  %2359 = vmatprep.subr.mxu0 0.0
  %2360 = vmatpush1.msra.mxu0 0.0
  %2361 = vmatprep.subr.mxu0 0.0
  %2362 = vmatpush1.msra.mxu0 0.0
  %2363 = vmatprep.subr.mxu0 0.0
  %2364 = vmatpush1.msra.mxu0 0.0
  %2365 = vmatprep.subr.mxu0 0.0
  %2366 = vmatpush1.msra.mxu0 0.0
  %2367 = vmatprep.subr.mxu0 0.0
  %2368 = vmatpush1.msra.mxu0 0.0
  %2369 = vmatprep.subr.mxu0 0.0
  %2370 = vmatpush1.msra.mxu0 0.0
  %2371 = vmatprep.subr.mxu0 0.0
  %2372 = vmatpush1.msra.mxu0 0.0
  %2373 = vmatprep.subr.mxu0 0.0
  %2374 = vmatpush1.msra.mxu0 0.0
  %2375 = vmatprep.subr.mxu0 0.0
  %2376 = vmatpush1.msra.mxu0 0.0
  %2377 = vmatprep.subr.mxu0 0.0
  %2378 = vmatpush1.msra.mxu0 0.0
  %2379 = vmatprep.subr.mxu0 0.0
  %2380 = vmatpush1.msra.mxu0 0.0
  %2381 = vmatprep.subr.mxu0 0.0
  %2382 = vmatpush1.msra.mxu0 0.0
  %2383 = vmatprep.subr.mxu0 0.0
  %2384 = vmatpush1.msra.mxu0 0.0
  %2385 = vmatprep.subr.mxu0 0.0
  %2386 = vmatpush1.msra.mxu0 0.0
  %2387 = vmatprep.subr.mxu0 0.0
  %2388 = vmatpush1.msra.mxu0 0.0
  %2389 = vmatprep.subr.mxu0 0.0
  %2390 = vmatpush1.msra.mxu0 0.0
  %2391 = vmatprep.subr.mxu0 0.0
  %2392 = vmatpush1.msra.mxu0 0.0
  %2393 = vmatprep.subr.mxu0 0.0
  %2394 = vmatpush1.msra.mxu0 0.0
  %2395 = vmatprep.subr.mxu0 0.0
  %2396 = vmatpush1.msra.mxu0 0.0
  %2397 = vmatprep.subr.mxu0 0.0
  %2398 = vmatpush1.msra.mxu0 0.0
  %2399 = vmatprep.subr.mxu0 0.0
  %2400 = vmatpush1.msra.mxu0 0.0
  %2401 = vmatprep.subr.mxu0 0.0
  %2402 = vmatpush1.msra.mxu0 0.0
  %2403 = vmatprep.subr.mxu0 0.0
  %2404 = vmatpush1.msra.mxu0 0.0
  %2405 = vmatprep.subr.mxu0 0.0
  %2406 = vmatpush1.msra.mxu0 0.0
  %2407 = vmatprep.subr.mxu0 0.0
  %2408 = vmatpush1.msra.mxu0 0.0
  %2409 = vmatprep.subr.mxu0 0.0
  %2410 = vmatpush1.msra.mxu0 0.0
  %2411 = vmatprep.subr.mxu0 0.0
  %2412 = vmatpush1.msra.mxu0 0.0
  %2413 = vmatprep.mubr.f32.mxu0 0.0
  %2414 = vmatmul.mubr.f32.gmra.mrb[0].mxu0 %v2347
  %v2415 = vpop.f32.mrb[0].mxu0
  %v2416 = vadd.f32 0.0, %v2415
  %v2417 = vpop.f32.mrb[0].mxu0
  %2418 = vdwg.mxu0
  %v2420 = vrot.slane %v2416, 3
  %v2422 = vadd.f32 %v328, %v2420
  %v2423 = vtanh.pop %v2422
  %v2425 = vrot.slane %v2423, 5
  %v2426 = vsel %vm249, %v2425, 0
  %2428 = vmatprep.subr.mxu0 0.0
  %2429 = vmatpush1.msra.mxu0 %v423
  %2430 = vmatprep.subr.mxu0 0.0
  %2431 = vmatpush1.msra.mxu0 %v424
  %2432 = vmatprep.subr.mxu0 0.0
  %2433 = vmatpush1.msra.mxu0 %v425
  %2434 = vmatprep.subr.mxu0 0.0
  %2435 = vmatpush1.msra.mxu0 %v426
  %2436 = vmatprep.subr.mxu0 0.0
  %2437 = vmatpush1.msra.mxu0 0.0
  %2438 = vmatprep.subr.mxu0 0.0
  %2439 = vmatpush1.msra.mxu0 0.0
  %2440 = vmatprep.subr.mxu0 0.0
  %2441 = vmatpush1.msra.mxu0 0.0
  %2442 = vmatprep.subr.mxu0 0.0
  %2443 = vmatpush1.msra.mxu0 0.0
  %2444 = vmatprep.subr.mxu0 0.0
  %2445 = vmatpush1.msra.mxu0 0.0
  %2446 = vmatprep.subr.mxu0 0.0
  %2447 = vmatpush1.msra.mxu0 0.0
  %2448 = vmatprep.subr.mxu0 0.0
  %2449 = vmatpush1.msra.mxu0 0.0
  %2450 = vmatprep.subr.mxu0 0.0
  %2451 = vmatpush1.msra.mxu0 0.0
  %2452 = vmatprep.subr.mxu0 0.0
  %2453 = vmatpush1.msra.mxu0 0.0
  %2454 = vmatprep.subr.mxu0 0.0
  %2455 = vmatpush1.msra.mxu0 0.0
  %2456 = vmatprep.subr.mxu0 0.0
  %2457 = vmatpush1.msra.mxu0 0.0
  %2458 = vmatprep.subr.mxu0 0.0
  %2459 = vmatpush1.msra.mxu0 0.0
  %2460 = vmatprep.subr.mxu0 0.0
  %2461 = vmatpush1.msra.mxu0 0.0
  %2462 = vmatprep.subr.mxu0 0.0
  %2463 = vmatpush1.msra.mxu0 0.0
  %2464 = vmatprep.subr.mxu0 0.0
  %2465 = vmatpush1.msra.mxu0 0.0
  %2466 = vmatprep.subr.mxu0 0.0
  %2467 = vmatpush1.msra.mxu0 0.0
  %2468 = vmatprep.subr.mxu0 0.0
  %2469 = vmatpush1.msra.mxu0 0.0
  %2470 = vmatprep.subr.mxu0 0.0
  %2471 = vmatpush1.msra.mxu0 0.0
  %2472 = vmatprep.subr.mxu0 0.0
  %2473 = vmatpush1.msra.mxu0 0.0
  %2474 = vmatprep.subr.mxu0 0.0
  %2475 = vmatpush1.msra.mxu0 0.0
  %2476 = vmatprep.subr.mxu0 0.0
  %2477 = vmatpush1.msra.mxu0 0.0
  %2478 = vmatprep.subr.mxu0 0.0
  %2479 = vmatpush1.msra.mxu0 0.0
  %2480 = vmatprep.subr.mxu0 0.0
  %2481 = vmatpush1.msra.mxu0 0.0
  %2482 = vmatprep.subr.mxu0 0.0
  %2483 = vmatpush1.msra.mxu0 0.0
  %2484 = vmatprep.subr.mxu0 0.0
  %2485 = vmatpush1.msra.mxu0 0.0
  %2486 = vmatprep.subr.mxu0 0.0
  %2487 = vmatpush1.msra.mxu0 0.0
  %2488 = vmatprep.subr.mxu0 0.0
  %2489 = vmatpush1.msra.mxu0 0.0
  %2490 = vmatprep.subr.mxu0 0.0
  %2491 = vmatpush1.msra.mxu0 0.0
  %2492 = vmatprep.mubr.f32.mxu0 0.0
  %2493 = vmatmul.mubr.f32.gmra.mrb[0].mxu0 %v2426
  %v2494 = vpop.f32.mrb[0].mxu0
  %v2495 = vadd.f32 0.0, %v2494
  %v2496 = vpop.f32.mrb[0].mxu0
  %2497 = vdwg.mxu0
  %v2499 = vrot.slane %v2495, 2
  %v2501 = vadd.f32 %v328, %v2499
  %v2502 = vtanh.pop %v2501
  %v2504 = vrot.slane %v2502, 6
  %v2505 = vsel %vm249, %v2504, 0
  %2507 = vmatprep.subr.mxu0 0.0
  %2508 = vmatpush1.msra.mxu0 %v423
  %2509 = vmatprep.subr.mxu0 0.0
  %2510 = vmatpush1.msra.mxu0 %v424
  %2511 = vmatprep.subr.mxu0 0.0
  %2512 = vmatpush1.msra.mxu0 %v425
  %2513 = vmatprep.subr.mxu0 0.0
  %2514 = vmatpush1.msra.mxu0 %v426
  %2515 = vmatprep.subr.mxu0 0.0
  %2516 = vmatpush1.msra.mxu0 0.0
  %2517 = vmatprep.subr.mxu0 0.0
  %2518 = vmatpush1.msra.mxu0 0.0
  %2519 = vmatprep.subr.mxu0 0.0
  %2520 = vmatpush1.msra.mxu0 0.0
  %2521 = vmatprep.subr.mxu0 0.0
  %2522 = vmatpush1.msra.mxu0 0.0
  %2523 = vmatprep.subr.mxu0 0.0
  %2524 = vmatpush1.msra.mxu0 0.0
  %2525 = vmatprep.subr.mxu0 0.0
  %2526 = vmatpush1.msra.mxu0 0.0
  %2527 = vmatprep.subr.mxu0 0.0
  %2528 = vmatpush1.msra.mxu0 0.0
  %2529 = vmatprep.subr.mxu0 0.0
  %2530 = vmatpush1.msra.mxu0 0.0
  %2531 = vmatprep.subr.mxu0 0.0
  %2532 = vmatpush1.msra.mxu0 0.0
  %2533 = vmatprep.subr.mxu0 0.0
  %2534 = vmatpush1.msra.mxu0 0.0
  %2535 = vmatprep.subr.mxu0 0.0
  %2536 = vmatpush1.msra.mxu0 0.0
  %2537 = vmatprep.subr.mxu0 0.0
  %2538 = vmatpush1.msra.mxu0 0.0
  %2539 = vmatprep.subr.mxu0 0.0
  %2540 = vmatpush1.msra.mxu0 0.0
  %2541 = vmatprep.subr.mxu0 0.0
  %2542 = vmatpush1.msra.mxu0 0.0
  %2543 = vmatprep.subr.mxu0 0.0
  %2544 = vmatpush1.msra.mxu0 0.0
  %2545 = vmatprep.subr.mxu0 0.0
  %2546 = vmatpush1.msra.mxu0 0.0
  %2547 = vmatprep.subr.mxu0 0.0
  %2548 = vmatpush1.msra.mxu0 0.0
  %2549 = vmatprep.subr.mxu0 0.0
  %2550 = vmatpush1.msra.mxu0 0.0
  %2551 = vmatprep.subr.mxu0 0.0
  %2552 = vmatpush1.msra.mxu0 0.0
  %2553 = vmatprep.subr.mxu0 0.0
  %2554 = vmatpush1.msra.mxu0 0.0
  %2555 = vmatprep.subr.mxu0 0.0
  %2556 = vmatpush1.msra.mxu0 0.0
  %2557 = vmatprep.subr.mxu0 0.0
  %2558 = vmatpush1.msra.mxu0 0.0
  %2559 = vmatprep.subr.mxu0 0.0
  %2560 = vmatpush1.msra.mxu0 0.0
  %2561 = vmatprep.subr.mxu0 0.0
  %2562 = vmatpush1.msra.mxu0 0.0
  %2563 = vmatprep.subr.mxu0 0.0
  %2564 = vmatpush1.msra.mxu0 0.0
  %2565 = vmatprep.subr.mxu0 0.0
  %2566 = vmatpush1.msra.mxu0 0.0
  %2567 = vmatprep.subr.mxu0 0.0
  %2568 = vmatpush1.msra.mxu0 0.0
  %2569 = vmatprep.subr.mxu0 0.0
  %2570 = vmatpush1.msra.mxu0 0.0
  %2571 = vmatprep.mubr.f32.mxu0 0.0
  %2572 = vmatmul.mubr.f32.gmra.mrb[0].mxu0 %v2505
  %v2573 = vpop.f32.mrb[0].mxu0
  %v2574 = vadd.f32 0.0, %v2573
  %v2575 = vpop.f32.mrb[0].mxu0
  %2576 = vdwg.mxu0
  %v2578 = vrot.slane %v2574, 1
  %v2580 = vadd.f32 %v328, %v2578
  %v2581 = vtanh.pop %v2580
  %v2582 = vsel %vm1067, %v2029, %v2107
  %v2583 = vsel %vm1069, %v2582, %v2186
  %v2584 = vsel %vm1071, %v2583, %v2265
  %v2585 = vsel %vm1073, %v2584, %v2344
  %v2586 = vsel %vm1075, %v2585, %v2423
  %v2587 = vsel %vm1077, %v2586, %v2502
  %v2588 = vsel %vm1079, %v2587, %v2581
  %v2590 = vrot.slane %v2581, 7
  %v2591 = vsel %vm249, %v2590, 0
  %2593 = vmatprep.subr.mxu0 0.0
  %2594 = vmatpush1.msra.mxu0 %v427
  %2595 = vmatprep.subr.mxu0 0.0
  %2596 = vmatpush1.msra.mxu0 %v428
  %2597 = vmatprep.subr.mxu0 0.0
  %2598 = vmatpush1.msra.mxu0 %v429
  %2599 = vmatprep.subr.mxu0 0.0
  %2600 = vmatpush1.msra.mxu0 %v430
  %2601 = vmatprep.subr.mxu0 0.0
  %2602 = vmatpush1.msra.mxu0 0.0
  %2603 = vmatprep.subr.mxu0 0.0
  %2604 = vmatpush1.msra.mxu0 0.0
  %2605 = vmatprep.subr.mxu0 0.0
  %2606 = vmatpush1.msra.mxu0 0.0
  %2607 = vmatprep.subr.mxu0 0.0
  %2608 = vmatpush1.msra.mxu0 0.0
  %2609 = vmatprep.subr.mxu0 0.0
  %2610 = vmatpush1.msra.mxu0 0.0
  %2611 = vmatprep.subr.mxu0 0.0
  %2612 = vmatpush1.msra.mxu0 0.0
  %2613 = vmatprep.subr.mxu0 0.0
  %2614 = vmatpush1.msra.mxu0 0.0
  %2615 = vmatprep.subr.mxu0 0.0
  %2616 = vmatpush1.msra.mxu0 0.0
  %2617 = vmatprep.subr.mxu0 0.0
  %2618 = vmatpush1.msra.mxu0 0.0
  %2619 = vmatprep.subr.mxu0 0.0
  %2620 = vmatpush1.msra.mxu0 0.0
  %2621 = vmatprep.subr.mxu0 0.0
  %2622 = vmatpush1.msra.mxu0 0.0
  %2623 = vmatprep.subr.mxu0 0.0
  %2624 = vmatpush1.msra.mxu0 0.0
  %2625 = vmatprep.subr.mxu0 0.0
  %2626 = vmatpush1.msra.mxu0 0.0
  %2627 = vmatprep.subr.mxu0 0.0
  %2628 = vmatpush1.msra.mxu0 0.0
  %2629 = vmatprep.subr.mxu0 0.0
  %2630 = vmatpush1.msra.mxu0 0.0
  %2631 = vmatprep.subr.mxu0 0.0
  %2632 = vmatpush1.msra.mxu0 0.0
  %2633 = vmatprep.subr.mxu0 0.0
  %2634 = vmatpush1.msra.mxu0 0.0
  %2635 = vmatprep.subr.mxu0 0.0
  %2636 = vmatpush1.msra.mxu0 0.0
  %2637 = vmatprep.subr.mxu0 0.0
  %2638 = vmatpush1.msra.mxu0 0.0
  %2639 = vmatprep.subr.mxu0 0.0
  %2640 = vmatpush1.msra.mxu0 0.0
  %2641 = vmatprep.subr.mxu0 0.0
  %2642 = vmatpush1.msra.mxu0 0.0
  %2643 = vmatprep.subr.mxu0 0.0
  %2644 = vmatpush1.msra.mxu0 0.0
  %2645 = vmatprep.subr.mxu0 0.0
  %2646 = vmatpush1.msra.mxu0 0.0
  %2647 = vmatprep.subr.mxu0 0.0
  %2648 = vmatpush1.msra.mxu0 0.0
  %2649 = vmatprep.subr.mxu0 0.0
  %2650 = vmatpush1.msra.mxu0 0.0
  %2651 = vmatprep.subr.mxu0 0.0
  %2652 = vmatpush1.msra.mxu0 0.0
  %2653 = vmatprep.subr.mxu0 0.0
  %2654 = vmatpush1.msra.mxu0 0.0
  %2655 = vmatprep.subr.mxu0 0.0
  %2656 = vmatpush1.msra.mxu0 0.0
  %2657 = vmatprep.mubr.f32.mxu0 0.0
  %2658 = vmatmul.mubr.f32.gmra.mrb[0].mxu0 %v2591
  %v2659 = vpop.f32.mrb[0].mxu0
  %v2660 = vadd.f32 0.0, %v2659
  %v2661 = vpop.f32.mrb[0].mxu0
  %2662 = vdwg.mxu0
  %v2663 = vadd.f32 %v420, %v2660
  %v2664 = vtanh.pop %v2663
  %v2666 = vsel %vm249, %v2664, 0
  %2668 = vmatprep.subr.mxu0 0.0
  %2669 = vmatpush1.msra.mxu0 %v427
  %2670 = vmatprep.subr.mxu0 0.0
  %2671 = vmatpush1.msra.mxu0 %v428
  %2672 = vmatprep.subr.mxu0 0.0
  %2673 = vmatpush1.msra.mxu0 %v429
  %2674 = vmatprep.subr.mxu0 0.0
  %2675 = vmatpush1.msra.mxu0 %v430
  %2676 = vmatprep.subr.mxu0 0.0
  %2677 = vmatpush1.msra.mxu0 0.0
  %2678 = vmatprep.subr.mxu0 0.0
  %2679 = vmatpush1.msra.mxu0 0.0
  %2680 = vmatprep.subr.mxu0 0.0
  %2681 = vmatpush1.msra.mxu0 0.0
  %2682 = vmatprep.subr.mxu0 0.0
  %2683 = vmatpush1.msra.mxu0 0.0
  %2684 = vmatprep.subr.mxu0 0.0
  %2685 = vmatpush1.msra.mxu0 0.0
  %2686 = vmatprep.subr.mxu0 0.0
  %2687 = vmatpush1.msra.mxu0 0.0
  %2688 = vmatprep.subr.mxu0 0.0
  %2689 = vmatpush1.msra.mxu0 0.0
  %2690 = vmatprep.subr.mxu0 0.0
  %2691 = vmatpush1.msra.mxu0 0.0
  %2692 = vmatprep.subr.mxu0 0.0
  %2693 = vmatpush1.msra.mxu0 0.0
  %2694 = vmatprep.subr.mxu0 0.0
  %2695 = vmatpush1.msra.mxu0 0.0
  %2696 = vmatprep.subr.mxu0 0.0
  %2697 = vmatpush1.msra.mxu0 0.0
  %2698 = vmatprep.subr.mxu0 0.0
  %2699 = vmatpush1.msra.mxu0 0.0
  %2700 = vmatprep.subr.mxu0 0.0
  %2701 = vmatpush1.msra.mxu0 0.0
  %2702 = vmatprep.subr.mxu0 0.0
  %2703 = vmatpush1.msra.mxu0 0.0
  %2704 = vmatprep.subr.mxu0 0.0
  %2705 = vmatpush1.msra.mxu0 0.0
  %2706 = vmatprep.subr.mxu0 0.0
  %2707 = vmatpush1.msra.mxu0 0.0
  %2708 = vmatprep.subr.mxu0 0.0
  %2709 = vmatpush1.msra.mxu0 0.0
  %2710 = vmatprep.subr.mxu0 0.0
  %2711 = vmatpush1.msra.mxu0 0.0
  %2712 = vmatprep.subr.mxu0 0.0
  %2713 = vmatpush1.msra.mxu0 0.0
  %2714 = vmatprep.subr.mxu0 0.0
  %2715 = vmatpush1.msra.mxu0 0.0
  %2716 = vmatprep.subr.mxu0 0.0
  %2717 = vmatpush1.msra.mxu0 0.0
  %2718 = vmatprep.subr.mxu0 0.0
  %2719 = vmatpush1.msra.mxu0 0.0
  %2720 = vmatprep.subr.mxu0 0.0
  %2721 = vmatpush1.msra.mxu0 0.0
  %2722 = vmatprep.subr.mxu0 0.0
  %2723 = vmatpush1.msra.mxu0 0.0
  %2724 = vmatprep.subr.mxu0 0.0
  %2725 = vmatpush1.msra.mxu0 0.0
  %2726 = vmatprep.subr.mxu0 0.0
  %2727 = vmatpush1.msra.mxu0 0.0
  %2728 = vmatprep.subr.mxu0 0.0
  %2729 = vmatpush1.msra.mxu0 0.0
  %2730 = vmatprep.subr.mxu0 0.0
  %2731 = vmatpush1.msra.mxu0 0.0
  %2732 = vmatprep.mubr.f32.mxu0 0.0
  %2733 = vmatmul.mubr.f32.gmra.mrb[0].mxu0 %v2666
  %v2734 = vpop.f32.mrb[0].mxu0
  %v2735 = vadd.f32 0.0, %v2734
  %v2736 = vpop.f32.mrb[0].mxu0
  %2737 = vdwg.mxu0
  %v2739 = vrot.slane %v2735, 7
  %v2741 = vadd.f32 %v420, %v2739
  %v2742 = vtanh.pop %v2741
  %v2744 = vrot.slane %v2742, 1
  %v2745 = vsel %vm249, %v2744, 0
  %2747 = vmatprep.subr.mxu0 0.0
  %2748 = vmatpush1.msra.mxu0 %v427
  %2749 = vmatprep.subr.mxu0 0.0
  %2750 = vmatpush1.msra.mxu0 %v428
  %2751 = vmatprep.subr.mxu0 0.0
  %2752 = vmatpush1.msra.mxu0 %v429
  %2753 = vmatprep.subr.mxu0 0.0
  %2754 = vmatpush1.msra.mxu0 %v430
  %2755 = vmatprep.subr.mxu0 0.0
  %2756 = vmatpush1.msra.mxu0 0.0
  %2757 = vmatprep.subr.mxu0 0.0
  %2758 = vmatpush1.msra.mxu0 0.0
  %2759 = vmatprep.subr.mxu0 0.0
  %2760 = vmatpush1.msra.mxu0 0.0
  %2761 = vmatprep.subr.mxu0 0.0
  %2762 = vmatpush1.msra.mxu0 0.0
  %2763 = vmatprep.subr.mxu0 0.0
  %2764 = vmatpush1.msra.mxu0 0.0
  %2765 = vmatprep.subr.mxu0 0.0
  %2766 = vmatpush1.msra.mxu0 0.0
  %2767 = vmatprep.subr.mxu0 0.0
  %2768 = vmatpush1.msra.mxu0 0.0
  %2769 = vmatprep.subr.mxu0 0.0
  %2770 = vmatpush1.msra.mxu0 0.0
  %2771 = vmatprep.subr.mxu0 0.0
  %2772 = vmatpush1.msra.mxu0 0.0
  %2773 = vmatprep.subr.mxu0 0.0
  %2774 = vmatpush1.msra.mxu0 0.0
  %2775 = vmatprep.subr.mxu0 0.0
  %2776 = vmatpush1.msra.mxu0 0.0
  %2777 = vmatprep.subr.mxu0 0.0
  %2778 = vmatpush1.msra.mxu0 0.0
  %2779 = vmatprep.subr.mxu0 0.0
  %2780 = vmatpush1.msra.mxu0 0.0
  %2781 = vmatprep.subr.mxu0 0.0
  %2782 = vmatpush1.msra.mxu0 0.0
  %2783 = vmatprep.subr.mxu0 0.0
  %2784 = vmatpush1.msra.mxu0 0.0
  %2785 = vmatprep.subr.mxu0 0.0
  %2786 = vmatpush1.msra.mxu0 0.0
  %2787 = vmatprep.subr.mxu0 0.0
  %2788 = vmatpush1.msra.mxu0 0.0
  %2789 = vmatprep.subr.mxu0 0.0
  %2790 = vmatpush1.msra.mxu0 0.0
  %2791 = vmatprep.subr.mxu0 0.0
  %2792 = vmatpush1.msra.mxu0 0.0
  %2793 = vmatprep.subr.mxu0 0.0
  %2794 = vmatpush1.msra.mxu0 0.0
  %2795 = vmatprep.subr.mxu0 0.0
  %2796 = vmatpush1.msra.mxu0 0.0
  %2797 = vmatprep.subr.mxu0 0.0
  %2798 = vmatpush1.msra.mxu0 0.0
  %2799 = vmatprep.subr.mxu0 0.0
  %2800 = vmatpush1.msra.mxu0 0.0
  %2801 = vmatprep.subr.mxu0 0.0
  %2802 = vmatpush1.msra.mxu0 0.0
  %2803 = vmatprep.subr.mxu0 0.0
  %2804 = vmatpush1.msra.mxu0 0.0
  %2805 = vmatprep.subr.mxu0 0.0
  %2806 = vmatpush1.msra.mxu0 0.0
  %2807 = vmatprep.subr.mxu0 0.0
  %2808 = vmatpush1.msra.mxu0 0.0
  %2809 = vmatprep.subr.mxu0 0.0
  %2810 = vmatpush1.msra.mxu0 0.0
  %2811 = vmatprep.mubr.f32.mxu0 0.0
  %2812 = vmatmul.mubr.f32.gmra.mrb[0].mxu0 %v2745
  %v2813 = vpop.f32.mrb[0].mxu0
  %v2814 = vadd.f32 0.0, %v2813
  %v2815 = vpop.f32.mrb[0].mxu0
  %2816 = vdwg.mxu0
  %v2818 = vrot.slane %v2814, 6
  %v2820 = vadd.f32 %v420, %v2818
  %v2821 = vtanh.pop %v2820
  %v2823 = vrot.slane %v2821, 2
  %v2824 = vsel %vm249, %v2823, 0
  %2826 = vmatprep.subr.mxu0 0.0
  %2827 = vmatpush1.msra.mxu0 %v427
  %2828 = vmatprep.subr.mxu0 0.0
  %2829 = vmatpush1.msra.mxu0 %v428
  %2830 = vmatprep.subr.mxu0 0.0
  %2831 = vmatpush1.msra.mxu0 %v429
  %2832 = vmatprep.subr.mxu0 0.0
  %2833 = vmatpush1.msra.mxu0 %v430
  %2834 = vmatprep.subr.mxu0 0.0
  %2835 = vmatpush1.msra.mxu0 0.0
  %2836 = vmatprep.subr.mxu0 0.0
  %2837 = vmatpush1.msra.mxu0 0.0
  %2838 = vmatprep.subr.mxu0 0.0
  %2839 = vmatpush1.msra.mxu0 0.0
  %2840 = vmatprep.subr.mxu0 0.0
  %2841 = vmatpush1.msra.mxu0 0.0
  %2842 = vmatprep.subr.mxu0 0.0
  %2843 = vmatpush1.msra.mxu0 0.0
  %2844 = vmatprep.subr.mxu0 0.0
  %2845 = vmatpush1.msra.mxu0 0.0
  %2846 = vmatprep.subr.mxu0 0.0
  %2847 = vmatpush1.msra.mxu0 0.0
  %2848 = vmatprep.subr.mxu0 0.0
  %2849 = vmatpush1.msra.mxu0 0.0
  %2850 = vmatprep.subr.mxu0 0.0
  %2851 = vmatpush1.msra.mxu0 0.0
  %2852 = vmatprep.subr.mxu0 0.0
  %2853 = vmatpush1.msra.mxu0 0.0
  %2854 = vmatprep.subr.mxu0 0.0
  %2855 = vmatpush1.msra.mxu0 0.0
  %2856 = vmatprep.subr.mxu0 0.0
  %2857 = vmatpush1.msra.mxu0 0.0
  %2858 = vmatprep.subr.mxu0 0.0
  %2859 = vmatpush1.msra.mxu0 0.0
  %2860 = vmatprep.subr.mxu0 0.0
  %2861 = vmatpush1.msra.mxu0 0.0
  %2862 = vmatprep.subr.mxu0 0.0
  %2863 = vmatpush1.msra.mxu0 0.0
  %2864 = vmatprep.subr.mxu0 0.0
  %2865 = vmatpush1.msra.mxu0 0.0
  %2866 = vmatprep.subr.mxu0 0.0
  %2867 = vmatpush1.msra.mxu0 0.0
  %2868 = vmatprep.subr.mxu0 0.0
  %2869 = vmatpush1.msra.mxu0 0.0
  %2870 = vmatprep.subr.mxu0 0.0
  %2871 = vmatpush1.msra.mxu0 0.0
  %2872 = vmatprep.subr.mxu0 0.0
  %2873 = vmatpush1.msra.mxu0 0.0
  %2874 = vmatprep.subr.mxu0 0.0
  %2875 = vmatpush1.msra.mxu0 0.0
  %2876 = vmatprep.subr.mxu0 0.0
  %2877 = vmatpush1.msra.mxu0 0.0
  %2878 = vmatprep.subr.mxu0 0.0
  %2879 = vmatpush1.msra.mxu0 0.0
  %2880 = vmatprep.subr.mxu0 0.0
  %2881 = vmatpush1.msra.mxu0 0.0
  %2882 = vmatprep.subr.mxu0 0.0
  %2883 = vmatpush1.msra.mxu0 0.0
  %2884 = vmatprep.subr.mxu0 0.0
  %2885 = vmatpush1.msra.mxu0 0.0
  %2886 = vmatprep.subr.mxu0 0.0
  %2887 = vmatpush1.msra.mxu0 0.0
  %2888 = vmatprep.subr.mxu0 0.0
  %2889 = vmatpush1.msra.mxu0 0.0
  %2890 = vmatprep.mubr.f32.mxu0 0.0
  %2891 = vmatmul.mubr.f32.gmra.mrb[0].mxu0 %v2824
  %v2892 = vpop.f32.mrb[0].mxu0
  %v2893 = vadd.f32 0.0, %v2892
  %v2894 = vpop.f32.mrb[0].mxu0
  %2895 = vdwg.mxu0
  %v2897 = vrot.slane %v2893, 5
  %v2899 = vadd.f32 %v420, %v2897
  %v2900 = vtanh.pop %v2899
  %v2902 = vrot.slane %v2900, 3
  %v2903 = vsel %vm249, %v2902, 0
  %2905 = vmatprep.subr.mxu0 0.0
  %2906 = vmatpush1.msra.mxu0 %v427
  %2907 = vmatprep.subr.mxu0 0.0
  %2908 = vmatpush1.msra.mxu0 %v428
  %2909 = vmatprep.subr.mxu0 0.0
  %2910 = vmatpush1.msra.mxu0 %v429
  %2911 = vmatprep.subr.mxu0 0.0
  %2912 = vmatpush1.msra.mxu0 %v430
  %2913 = vmatprep.subr.mxu0 0.0
  %2914 = vmatpush1.msra.mxu0 0.0
  %2915 = vmatprep.subr.mxu0 0.0
  %2916 = vmatpush1.msra.mxu0 0.0
  %2917 = vmatprep.subr.mxu0 0.0
  %2918 = vmatpush1.msra.mxu0 0.0
  %2919 = vmatprep.subr.mxu0 0.0
  %2920 = vmatpush1.msra.mxu0 0.0
  %2921 = vmatprep.subr.mxu0 0.0
  %2922 = vmatpush1.msra.mxu0 0.0
  %2923 = vmatprep.subr.mxu0 0.0
  %2924 = vmatpush1.msra.mxu0 0.0
  %2925 = vmatprep.subr.mxu0 0.0
  %2926 = vmatpush1.msra.mxu0 0.0
  %2927 = vmatprep.subr.mxu0 0.0
  %2928 = vmatpush1.msra.mxu0 0.0
  %2929 = vmatprep.subr.mxu0 0.0
  %2930 = vmatpush1.msra.mxu0 0.0
  %2931 = vmatprep.subr.mxu0 0.0
  %2932 = vmatpush1.msra.mxu0 0.0
  %2933 = vmatprep.subr.mxu0 0.0
  %2934 = vmatpush1.msra.mxu0 0.0
  %2935 = vmatprep.subr.mxu0 0.0
  %2936 = vmatpush1.msra.mxu0 0.0
  %2937 = vmatprep.subr.mxu0 0.0
  %2938 = vmatpush1.msra.mxu0 0.0
  %2939 = vmatprep.subr.mxu0 0.0
  %2940 = vmatpush1.msra.mxu0 0.0
  %2941 = vmatprep.subr.mxu0 0.0
  %2942 = vmatpush1.msra.mxu0 0.0
  %2943 = vmatprep.subr.mxu0 0.0
  %2944 = vmatpush1.msra.mxu0 0.0
  %2945 = vmatprep.subr.mxu0 0.0
  %2946 = vmatpush1.msra.mxu0 0.0
  %2947 = vmatprep.subr.mxu0 0.0
  %2948 = vmatpush1.msra.mxu0 0.0
  %2949 = vmatprep.subr.mxu0 0.0
  %2950 = vmatpush1.msra.mxu0 0.0
  %2951 = vmatprep.subr.mxu0 0.0
  %2952 = vmatpush1.msra.mxu0 0.0
  %2953 = vmatprep.subr.mxu0 0.0
  %2954 = vmatpush1.msra.mxu0 0.0
  %2955 = vmatprep.subr.mxu0 0.0
  %2956 = vmatpush1.msra.mxu0 0.0
  %2957 = vmatprep.subr.mxu0 0.0
  %2958 = vmatpush1.msra.mxu0 0.0
  %2959 = vmatprep.subr.mxu0 0.0
  %2960 = vmatpush1.msra.mxu0 0.0
  %2961 = vmatprep.subr.mxu0 0.0
  %2962 = vmatpush1.msra.mxu0 0.0
  %2963 = vmatprep.subr.mxu0 0.0
  %2964 = vmatpush1.msra.mxu0 0.0
  %2965 = vmatprep.subr.mxu0 0.0
  %2966 = vmatpush1.msra.mxu0 0.0
  %2967 = vmatprep.subr.mxu0 0.0
  %2968 = vmatpush1.msra.mxu0 0.0
  %2969 = vmatprep.mubr.f32.mxu0 0.0
  %2970 = vmatmul.mubr.f32.gmra.mrb[0].mxu0 %v2903
  %v2971 = vpop.f32.mrb[0].mxu0
  %v2972 = vadd.f32 0.0, %v2971
  %v2973 = vpop.f32.mrb[0].mxu0
  %2974 = vdwg.mxu0
  %v2976 = vrot.slane %v2972, 4
  %v2978 = vadd.f32 %v420, %v2976
  %v2979 = vtanh.pop %v2978
  %v2981 = vrot.slane %v2979, 4
  %v2982 = vsel %vm249, %v2981, 0
  %2984 = vmatprep.subr.mxu0 0.0
  %2985 = vmatpush1.msra.mxu0 %v427
  %2986 = vmatprep.subr.mxu0 0.0
  %2987 = vmatpush1.msra.mxu0 %v428
  %2988 = vmatprep.subr.mxu0 0.0
  %2989 = vmatpush1.msra.mxu0 %v429
  %2990 = vmatprep.subr.mxu0 0.0
  %2991 = vmatpush1.msra.mxu0 %v430
  %2992 = vmatprep.subr.mxu0 0.0
  %2993 = vmatpush1.msra.mxu0 0.0
  %2994 = vmatprep.subr.mxu0 0.0
  %2995 = vmatpush1.msra.mxu0 0.0
  %2996 = vmatprep.subr.mxu0 0.0
  %2997 = vmatpush1.msra.mxu0 0.0
  %2998 = vmatprep.subr.mxu0 0.0
  %2999 = vmatpush1.msra.mxu0 0.0
  %3000 = vmatprep.subr.mxu0 0.0
  %3001 = vmatpush1.msra.mxu0 0.0
  %3002 = vmatprep.subr.mxu0 0.0
  %3003 = vmatpush1.msra.mxu0 0.0
  %3004 = vmatprep.subr.mxu0 0.0
  %3005 = vmatpush1.msra.mxu0 0.0
  %3006 = vmatprep.subr.mxu0 0.0
  %3007 = vmatpush1.msra.mxu0 0.0
  %3008 = vmatprep.subr.mxu0 0.0
  %3009 = vmatpush1.msra.mxu0 0.0
  %3010 = vmatprep.subr.mxu0 0.0
  %3011 = vmatpush1.msra.mxu0 0.0
  %3012 = vmatprep.subr.mxu0 0.0
  %3013 = vmatpush1.msra.mxu0 0.0
  %3014 = vmatprep.subr.mxu0 0.0
  %3015 = vmatpush1.msra.mxu0 0.0
  %3016 = vmatprep.subr.mxu0 0.0
  %3017 = vmatpush1.msra.mxu0 0.0
  %3018 = vmatprep.subr.mxu0 0.0
  %3019 = vmatpush1.msra.mxu0 0.0
  %3020 = vmatprep.subr.mxu0 0.0
  %3021 = vmatpush1.msra.mxu0 0.0
  %3022 = vmatprep.subr.mxu0 0.0
  %3023 = vmatpush1.msra.mxu0 0.0
  %3024 = vmatprep.subr.mxu0 0.0
  %3025 = vmatpush1.msra.mxu0 0.0
  %3026 = vmatprep.subr.mxu0 0.0
  %3027 = vmatpush1.msra.mxu0 0.0
  %3028 = vmatprep.subr.mxu0 0.0
  %3029 = vmatpush1.msra.mxu0 0.0
  %3030 = vmatprep.subr.mxu0 0.0
  %3031 = vmatpush1.msra.mxu0 0.0
  %3032 = vmatprep.subr.mxu0 0.0
  %3033 = vmatpush1.msra.mxu0 0.0
  %3034 = vmatprep.subr.mxu0 0.0
  %3035 = vmatpush1.msra.mxu0 0.0
  %3036 = vmatprep.subr.mxu0 0.0
  %3037 = vmatpush1.msra.mxu0 0.0
  %3038 = vmatprep.subr.mxu0 0.0
  %3039 = vmatpush1.msra.mxu0 0.0
  %3040 = vmatprep.subr.mxu0 0.0
  %3041 = vmatpush1.msra.mxu0 0.0
  %3042 = vmatprep.subr.mxu0 0.0
  %3043 = vmatpush1.msra.mxu0 0.0
  %3044 = vmatprep.subr.mxu0 0.0
  %3045 = vmatpush1.msra.mxu0 0.0
  %3046 = vmatprep.subr.mxu0 0.0
  %3047 = vmatpush1.msra.mxu0 0.0
  %3048 = vmatprep.mubr.f32.mxu0 0.0
  %3049 = vmatmul.mubr.f32.gmra.mrb[0].mxu0 %v2982
  %v3050 = vpop.f32.mrb[0].mxu0
  %v3051 = vadd.f32 0.0, %v3050
  %v3052 = vpop.f32.mrb[0].mxu0
  %3053 = vdwg.mxu0
  %v3055 = vrot.slane %v3051, 3
  %v3057 = vadd.f32 %v420, %v3055
  %v3058 = vtanh.pop %v3057
  %v3060 = vrot.slane %v3058, 5
  %v3061 = vsel %vm249, %v3060, 0
  %3063 = vmatprep.subr.mxu0 0.0
  %3064 = vmatpush1.msra.mxu0 %v427
  %3065 = vmatprep.subr.mxu0 0.0
  %3066 = vmatpush1.msra.mxu0 %v428
  %3067 = vmatprep.subr.mxu0 0.0
  %3068 = vmatpush1.msra.mxu0 %v429
  %3069 = vmatprep.subr.mxu0 0.0
  %3070 = vmatpush1.msra.mxu0 %v430
  %3071 = vmatprep.subr.mxu0 0.0
  %3072 = vmatpush1.msra.mxu0 0.0
  %3073 = vmatprep.subr.mxu0 0.0
  %3074 = vmatpush1.msra.mxu0 0.0
  %3075 = vmatprep.subr.mxu0 0.0
  %3076 = vmatpush1.msra.mxu0 0.0
  %3077 = vmatprep.subr.mxu0 0.0
  %3078 = vmatpush1.msra.mxu0 0.0
  %3079 = vmatprep.subr.mxu0 0.0
  %3080 = vmatpush1.msra.mxu0 0.0
  %3081 = vmatprep.subr.mxu0 0.0
  %3082 = vmatpush1.msra.mxu0 0.0
  %3083 = vmatprep.subr.mxu0 0.0
  %3084 = vmatpush1.msra.mxu0 0.0
  %3085 = vmatprep.subr.mxu0 0.0
  %3086 = vmatpush1.msra.mxu0 0.0
  %3087 = vmatprep.subr.mxu0 0.0
  %3088 = vmatpush1.msra.mxu0 0.0
  %3089 = vmatprep.subr.mxu0 0.0
  %3090 = vmatpush1.msra.mxu0 0.0
  %3091 = vmatprep.subr.mxu0 0.0
  %3092 = vmatpush1.msra.mxu0 0.0
  %3093 = vmatprep.subr.mxu0 0.0
  %3094 = vmatpush1.msra.mxu0 0.0
  %3095 = vmatprep.subr.mxu0 0.0
  %3096 = vmatpush1.msra.mxu0 0.0
  %3097 = vmatprep.subr.mxu0 0.0
  %3098 = vmatpush1.msra.mxu0 0.0
  %3099 = vmatprep.subr.mxu0 0.0
  %3100 = vmatpush1.msra.mxu0 0.0
  %3101 = vmatprep.subr.mxu0 0.0
  %3102 = vmatpush1.msra.mxu0 0.0
  %3103 = vmatprep.subr.mxu0 0.0
  %3104 = vmatpush1.msra.mxu0 0.0
  %3105 = vmatprep.subr.mxu0 0.0
  %3106 = vmatpush1.msra.mxu0 0.0
  %3107 = vmatprep.subr.mxu0 0.0
  %3108 = vmatpush1.msra.mxu0 0.0
  %3109 = vmatprep.subr.mxu0 0.0
  %3110 = vmatpush1.msra.mxu0 0.0
  %3111 = vmatprep.subr.mxu0 0.0
  %3112 = vmatpush1.msra.mxu0 0.0
  %3113 = vmatprep.subr.mxu0 0.0
  %3114 = vmatpush1.msra.mxu0 0.0
  %3115 = vmatprep.subr.mxu0 0.0
  %3116 = vmatpush1.msra.mxu0 0.0
  %3117 = vmatprep.subr.mxu0 0.0
  %3118 = vmatpush1.msra.mxu0 0.0
  %3119 = vmatprep.subr.mxu0 0.0
  %3120 = vmatpush1.msra.mxu0 0.0
  %3121 = vmatprep.subr.mxu0 0.0
  %3122 = vmatpush1.msra.mxu0 0.0
  %3123 = vmatprep.subr.mxu0 0.0
  %3124 = vmatpush1.msra.mxu0 0.0
  %3125 = vmatprep.subr.mxu0 0.0
  %3126 = vmatpush1.msra.mxu0 0.0
  %3127 = vmatprep.mubr.f32.mxu0 0.0
  %3128 = vmatmul.mubr.f32.gmra.mrb[0].mxu0 %v3061
  %v3129 = vpop.f32.mrb[0].mxu0
  %v3130 = vadd.f32 0.0, %v3129
  %v3131 = vpop.f32.mrb[0].mxu0
  %3132 = vdwg.mxu0
  %v3134 = vrot.slane %v3130, 2
  %v3136 = vadd.f32 %v420, %v3134
  %v3137 = vtanh.pop %v3136
  %v3139 = vrot.slane %v3137, 6
  %v3140 = vsel %vm249, %v3139, 0
  %3142 = vmatprep.subr.mxu0 0.0
  %3143 = vmatpush1.msra.mxu0 %v427
  %3144 = vmatprep.subr.mxu0 0.0
  %3145 = vmatpush1.msra.mxu0 %v428
  %3146 = vmatprep.subr.mxu0 0.0
  %3147 = vmatpush1.msra.mxu0 %v429
  %3148 = vmatprep.subr.mxu0 0.0
  %3149 = vmatpush1.msra.mxu0 %v430
  %3150 = vmatprep.subr.mxu0 0.0
  %3151 = vmatpush1.msra.mxu0 0.0
  %3152 = vmatprep.subr.mxu0 0.0
  %3153 = vmatpush1.msra.mxu0 0.0
  %3154 = vmatprep.subr.mxu0 0.0
  %3155 = vmatpush1.msra.mxu0 0.0
  %3156 = vmatprep.subr.mxu0 0.0
  %3157 = vmatpush1.msra.mxu0 0.0
  %3158 = vmatprep.subr.mxu0 0.0
  %3159 = vmatpush1.msra.mxu0 0.0
  %3160 = vmatprep.subr.mxu0 0.0
  %3161 = vmatpush1.msra.mxu0 0.0
  %3162 = vmatprep.subr.mxu0 0.0
  %3163 = vmatpush1.msra.mxu0 0.0
  %3164 = vmatprep.subr.mxu0 0.0
  %3165 = vmatpush1.msra.mxu0 0.0
  %3166 = vmatprep.subr.mxu0 0.0
  %3167 = vmatpush1.msra.mxu0 0.0
  %3168 = vmatprep.subr.mxu0 0.0
  %3169 = vmatpush1.msra.mxu0 0.0
  %3170 = vmatprep.subr.mxu0 0.0
  %3171 = vmatpush1.msra.mxu0 0.0
  %3172 = vmatprep.subr.mxu0 0.0
  %3173 = vmatpush1.msra.mxu0 0.0
  %3174 = vmatprep.subr.mxu0 0.0
  %3175 = vmatpush1.msra.mxu0 0.0
  %3176 = vmatprep.subr.mxu0 0.0
  %3177 = vmatpush1.msra.mxu0 0.0
  %3178 = vmatprep.subr.mxu0 0.0
  %3179 = vmatpush1.msra.mxu0 0.0
  %3180 = vmatprep.subr.mxu0 0.0
  %3181 = vmatpush1.msra.mxu0 0.0
  %3182 = vmatprep.subr.mxu0 0.0
  %3183 = vmatpush1.msra.mxu0 0.0
  %3184 = vmatprep.subr.mxu0 0.0
  %3185 = vmatpush1.msra.mxu0 0.0
  %3186 = vmatprep.subr.mxu0 0.0
  %3187 = vmatpush1.msra.mxu0 0.0
  %3188 = vmatprep.subr.mxu0 0.0
  %3189 = vmatpush1.msra.mxu0 0.0
  %3190 = vmatprep.subr.mxu0 0.0
  %3191 = vmatpush1.msra.mxu0 0.0
  %3192 = vmatprep.subr.mxu0 0.0
  %3193 = vmatpush1.msra.mxu0 0.0
  %3194 = vmatprep.subr.mxu0 0.0
  %3195 = vmatpush1.msra.mxu0 0.0
  %3196 = vmatprep.subr.mxu0 0.0
  %3197 = vmatpush1.msra.mxu0 0.0
  %3198 = vmatprep.subr.mxu0 0.0
  %3199 = vmatpush1.msra.mxu0 0.0
  %3200 = vmatprep.subr.mxu0 0.0
  %3201 = vmatpush1.msra.mxu0 0.0
  %3202 = vmatprep.subr.mxu0 0.0
  %3203 = vmatpush1.msra.mxu0 0.0
  %3204 = vmatprep.subr.mxu0 0.0
  %3205 = vmatpush1.msra.mxu0 0.0
  %3206 = vmatprep.mubr.f32.mxu0 0.0
  %3207 = vmatmul.mubr.f32.gmra.mrb[0].mxu0 %v3140
  %v3208 = vpop.f32.mrb[0].mxu0
  %v3209 = vadd.f32 0.0, %v3208
  %v3210 = vpop.f32.mrb[0].mxu0
  %3211 = vdwg.mxu0
  %v3213 = vrot.slane %v3209, 1
  %v3215 = vadd.f32 %v420, %v3213
  %v3216 = vtanh.pop %v3215
  %v3217 = vsel %vm1067, %v2664, %v2742
  %v3218 = vsel %vm1069, %v3217, %v2821
  %v3219 = vsel %vm1071, %v3218, %v2900
  %v3220 = vsel %vm1073, %v3219, %v2979
  %v3221 = vsel %vm1075, %v3220, %v3058
  %v3222 = vsel %vm1077, %v3221, %v3137
  %v3223 = vsel %vm1079, %v3222, %v3216
  %v3225 = vsel %vm249, %v3223, 0
  %v3228 = vsel %vm249, %v2588, 0
  %3230 = vmatprep.subr.mxu0 0.0
  %3231 = vmatpush1.xpose.msra.mxu0 %v3228
  %3232 = vmatprep.subr.mxu0 0.0
  %3233 = vmatpush1.xpose.msra.mxu0 0.0
  %3234 = vmatprep.subr.mxu0 0.0
  %3235 = vmatpush1.xpose.msra.mxu0 0.0
  %3236 = vmatprep.subr.mxu0 0.0
  %3237 = vmatpush1.xpose.msra.mxu0 0.0
  %3238 = vmatprep.subr.mxu0 0.0
  %3239 = vmatpush1.xpose.msra.mxu0 0.0
  %3240 = vmatprep.subr.mxu0 0.0
  %3241 = vmatpush1.xpose.msra.mxu0 0.0
  %3242 = vmatprep.subr.mxu0 0.0
  %3243 = vmatpush1.xpose.msra.mxu0 0.0
  %3244 = vmatprep.subr.mxu0 0.0
  %3245 = vmatpush1.xpose.msra.mxu0 0.0
  %3246 = vmatprep.subr.mxu0 0.0
  %3247 = vmatpush1.xpose.msra.mxu0 0.0
  %3248 = vmatprep.subr.mxu0 0.0
  %3249 = vmatpush1.xpose.msra.mxu0 0.0
  %3250 = vmatprep.subr.mxu0 0.0
  %3251 = vmatpush1.xpose.msra.mxu0 0.0
  %3252 = vmatprep.subr.mxu0 0.0
  %3253 = vmatpush1.xpose.msra.mxu0 0.0
  %3254 = vmatprep.subr.mxu0 0.0
  %3255 = vmatpush1.xpose.msra.mxu0 0.0
  %3256 = vmatprep.subr.mxu0 0.0
  %3257 = vmatpush1.xpose.msra.mxu0 0.0
  %3258 = vmatprep.subr.mxu0 0.0
  %3259 = vmatpush1.xpose.msra.mxu0 0.0
  %3260 = vmatprep.subr.mxu0 0.0
  %3261 = vmatpush1.xpose.msra.mxu0 0.0
  %3262 = vmatprep.subr.mxu0 0.0
  %3263 = vmatpush1.xpose.msra.mxu0 0.0
  %3264 = vmatprep.subr.mxu0 0.0
  %3265 = vmatpush1.xpose.msra.mxu0 0.0
  %3266 = vmatprep.subr.mxu0 0.0
  %3267 = vmatpush1.xpose.msra.mxu0 0.0
  %3268 = vmatprep.subr.mxu0 0.0
  %3269 = vmatpush1.xpose.msra.mxu0 0.0
  %3270 = vmatprep.subr.mxu0 0.0
  %3271 = vmatpush1.xpose.msra.mxu0 0.0
  %3272 = vmatprep.subr.mxu0 0.0
  %3273 = vmatpush1.xpose.msra.mxu0 0.0
  %3274 = vmatprep.subr.mxu0 0.0
  %3275 = vmatpush1.xpose.msra.mxu0 0.0
  %3276 = vmatprep.subr.mxu0 0.0
  %3277 = vmatpush1.xpose.msra.mxu0 0.0
  %3278 = vmatprep.subr.mxu0 0.0
  %3279 = vmatpush1.xpose.msra.mxu0 0.0
  %3280 = vmatprep.subr.mxu0 0.0
  %3281 = vmatpush1.xpose.msra.mxu0 0.0
  %3282 = vmatprep.subr.mxu0 0.0
  %3283 = vmatpush1.xpose.msra.mxu0 0.0
  %3284 = vmatprep.subr.mxu0 0.0
  %3285 = vmatpush1.xpose.msra.mxu0 0.0
  %3286 = vmatprep.subr.mxu0 0.0
  %3287 = vmatpush1.xpose.msra.mxu0 0.0
  %3288 = vmatprep.subr.mxu0 0.0
  %3289 = vmatpush1.xpose.msra.mxu0 0.0
  %3290 = vmatprep.subr.mxu0 0.0
  %3291 = vmatpush1.xpose.msra.mxu0 0.0
  %3292 = vmatprep.subr.mxu0 0.0
  %3293 = vmatpush1.xpose.msra.mxu0 0.0
  %3294 = vmatprep.mubr.f32.mxu0 0.0
  %3295 = vmatmul.mubr.f32.gmra.mrb[0].mxu0 %v3225
  %v3296 = vpop.f32.mrb[0].mxu0
  %v3297 = vadd.f32 0.0, %v3296
  %v3298 = vpop.f32.mrb[0].mxu0
  %3299 = vdwg.mxu0
  %v3300 = vsel %vm1792, %v3297, -inf
  %3301 = vmax.xlane.f32.xlu0 %v3300
  %v3302 = vpop.xlane.xlu0 %3301
  %v3303 = vsub.f32 %v3297, %v3302
  %v3304 = vmul.f32 %v3303, 1.442695
  %v3305 = vpow.pop %v3304
  %v3306 = vsel %vm1792, %v3305, 0.0
  %3307 = vadd.xlane.f32.xlu0 %v3306
  %v3308 = vpop.xlane.xlu0 %3307
  %v3309 = vrcp.pop %v3308
  %v3310 = vmul.f32 %v3305, %v3309
  %v3312 = vsel %vm1792, %v3310, 0
  %3314 = vmatprep.subr.mxu0 0.0
  %3315 = vmatpush1.msra.mxu0 %v2588
  %3316 = vmatprep.subr.mxu0 0.0
  %3317 = vmatpush1.msra.mxu0 0.0
  %3318 = vmatprep.subr.mxu0 0.0
  %3319 = vmatpush1.msra.mxu0 0.0
  %3320 = vmatprep.subr.mxu0 0.0
  %3321 = vmatpush1.msra.mxu0 0.0
  %3322 = vmatprep.subr.mxu0 0.0
  %3323 = vmatpush1.msra.mxu0 0.0
  %3324 = vmatprep.subr.mxu0 0.0
  %3325 = vmatpush1.msra.mxu0 0.0
  %3326 = vmatprep.subr.mxu0 0.0
  %3327 = vmatpush1.msra.mxu0 0.0
  %3328 = vmatprep.subr.mxu0 0.0
  %3329 = vmatpush1.msra.mxu0 0.0
  %3330 = vmatprep.subr.mxu0 0.0
  %3331 = vmatpush1.msra.mxu0 0.0
  %3332 = vmatprep.subr.mxu0 0.0
  %3333 = vmatpush1.msra.mxu0 0.0
  %3334 = vmatprep.subr.mxu0 0.0
  %3335 = vmatpush1.msra.mxu0 0.0
  %3336 = vmatprep.subr.mxu0 0.0
  %3337 = vmatpush1.msra.mxu0 0.0
  %3338 = vmatprep.subr.mxu0 0.0
  %3339 = vmatpush1.msra.mxu0 0.0
  %3340 = vmatprep.subr.mxu0 0.0
  %3341 = vmatpush1.msra.mxu0 0.0
  %3342 = vmatprep.subr.mxu0 0.0
  %3343 = vmatpush1.msra.mxu0 0.0
  %3344 = vmatprep.subr.mxu0 0.0
  %3345 = vmatpush1.msra.mxu0 0.0
  %3346 = vmatprep.subr.mxu0 0.0
  %3347 = vmatpush1.msra.mxu0 0.0
  %3348 = vmatprep.subr.mxu0 0.0
  %3349 = vmatpush1.msra.mxu0 0.0
  %3350 = vmatprep.subr.mxu0 0.0
  %3351 = vmatpush1.msra.mxu0 0.0
  %3352 = vmatprep.subr.mxu0 0.0
  %3353 = vmatpush1.msra.mxu0 0.0
  %3354 = vmatprep.subr.mxu0 0.0
  %3355 = vmatpush1.msra.mxu0 0.0
  %3356 = vmatprep.subr.mxu0 0.0
  %3357 = vmatpush1.msra.mxu0 0.0
  %3358 = vmatprep.subr.mxu0 0.0
  %3359 = vmatpush1.msra.mxu0 0.0
  %3360 = vmatprep.subr.mxu0 0.0
  %3361 = vmatpush1.msra.mxu0 0.0
  %3362 = vmatprep.subr.mxu0 0.0
  %3363 = vmatpush1.msra.mxu0 0.0
  %3364 = vmatprep.subr.mxu0 0.0
  %3365 = vmatpush1.msra.mxu0 0.0
  %3366 = vmatprep.subr.mxu0 0.0
  %3367 = vmatpush1.msra.mxu0 0.0
  %3368 = vmatprep.subr.mxu0 0.0
  %3369 = vmatpush1.msra.mxu0 0.0
  %3370 = vmatprep.subr.mxu0 0.0
  %3371 = vmatpush1.msra.mxu0 0.0
  %3372 = vmatprep.subr.mxu0 0.0
  %3373 = vmatpush1.msra.mxu0 0.0
  %3374 = vmatprep.subr.mxu0 0.0
  %3375 = vmatpush1.msra.mxu0 0.0
  %3376 = vmatprep.subr.mxu0 0.0
  %3377 = vmatpush1.msra.mxu0 0.0
  %3378 = vmatprep.mubr.f32.mxu0 0.0
  %3379 = vmatmul.mubr.f32.gmra.mrb[0].mxu0 %v3312
  %v3380 = vpop.f32.mrb[0].mxu0
  %v3381 = vadd.f32 0.0, %v3380
  %v3382 = vpop.f32.mrb[0].mxu0
  %3383 = vdwg.mxu0
  %v3385 = vsel %vm249, %v3381, 0
  %3387 = vmatprep.subr.mxu0 0.0
  %3388 = vmatpush1.msra.mxu0 %v435
  %3389 = vmatprep.subr.mxu0 0.0
  %3390 = vmatpush1.msra.mxu0 %v436
  %3391 = vmatprep.subr.mxu0 0.0
  %3392 = vmatpush1.msra.mxu0 %v437
  %3393 = vmatprep.subr.mxu0 0.0
  %3394 = vmatpush1.msra.mxu0 %v438
  %3395 = vmatprep.subr.mxu0 0.0
  %3396 = vmatpush1.msra.mxu0 0.0
  %3397 = vmatprep.subr.mxu0 0.0
  %3398 = vmatpush1.msra.mxu0 0.0
  %3399 = vmatprep.subr.mxu0 0.0
  %3400 = vmatpush1.msra.mxu0 0.0
  %3401 = vmatprep.subr.mxu0 0.0
  %3402 = vmatpush1.msra.mxu0 0.0
  %3403 = vmatprep.subr.mxu0 0.0
  %3404 = vmatpush1.msra.mxu0 0.0
  %3405 = vmatprep.subr.mxu0 0.0
  %3406 = vmatpush1.msra.mxu0 0.0
  %3407 = vmatprep.subr.mxu0 0.0
  %3408 = vmatpush1.msra.mxu0 0.0
  %3409 = vmatprep.subr.mxu0 0.0
  %3410 = vmatpush1.msra.mxu0 0.0
  %3411 = vmatprep.subr.mxu0 0.0
  %3412 = vmatpush1.msra.mxu0 0.0
  %3413 = vmatprep.subr.mxu0 0.0
  %3414 = vmatpush1.msra.mxu0 0.0
  %3415 = vmatprep.subr.mxu0 0.0
  %3416 = vmatpush1.msra.mxu0 0.0
  %3417 = vmatprep.subr.mxu0 0.0
  %3418 = vmatpush1.msra.mxu0 0.0
  %3419 = vmatprep.subr.mxu0 0.0
  %3420 = vmatpush1.msra.mxu0 0.0
  %3421 = vmatprep.subr.mxu0 0.0
  %3422 = vmatpush1.msra.mxu0 0.0
  %3423 = vmatprep.subr.mxu0 0.0
  %3424 = vmatpush1.msra.mxu0 0.0
  %3425 = vmatprep.subr.mxu0 0.0
  %3426 = vmatpush1.msra.mxu0 0.0
  %3427 = vmatprep.subr.mxu0 0.0
  %3428 = vmatpush1.msra.mxu0 0.0
  %3429 = vmatprep.subr.mxu0 0.0
  %3430 = vmatpush1.msra.mxu0 0.0
  %3431 = vmatprep.subr.mxu0 0.0
  %3432 = vmatpush1.msra.mxu0 0.0
  %3433 = vmatprep.subr.mxu0 0.0
  %3434 = vmatpush1.msra.mxu0 0.0
  %3435 = vmatprep.subr.mxu0 0.0
  %3436 = vmatpush1.msra.mxu0 0.0
  %3437 = vmatprep.subr.mxu0 0.0
  %3438 = vmatpush1.msra.mxu0 0.0
  %3439 = vmatprep.subr.mxu0 0.0
  %3440 = vmatpush1.msra.mxu0 0.0
  %3441 = vmatprep.subr.mxu0 0.0
  %3442 = vmatpush1.msra.mxu0 0.0
  %3443 = vmatprep.subr.mxu0 0.0
  %3444 = vmatpush1.msra.mxu0 0.0
  %3445 = vmatprep.subr.mxu0 0.0
  %3446 = vmatpush1.msra.mxu0 0.0
  %3447 = vmatprep.subr.mxu0 0.0
  %3448 = vmatpush1.msra.mxu0 0.0
  %3449 = vmatprep.subr.mxu0 0.0
  %3450 = vmatpush1.msra.mxu0 0.0
  %3451 = vmatprep.mubr.f32.mxu0 0.0
  %3452 = vmatmul.mubr.f32.gmra.mrb[0].mxu0 %v3385
  %v3453 = vpop.f32.mrb[0].mxu0
  %v3454 = vadd.f32 0.0, %v3453
  %v3455 = vpop.f32.mrb[0].mxu0
  %3456 = vdwg.mxu0
  %3457 = vmatprep.subr.mxu0 0.0
  %3458 = vmatpush1.msra.mxu0 %v431
  %3459 = vmatprep.subr.mxu0 0.0
  %3460 = vmatpush1.msra.mxu0 %v432
  %3461 = vmatprep.subr.mxu0 0.0
  %3462 = vmatpush1.msra.mxu0 %v433
  %3463 = vmatprep.subr.mxu0 0.0
  %3464 = vmatpush1.msra.mxu0 %v434
  %3465 = vmatprep.subr.mxu0 0.0
  %3466 = vmatpush1.msra.mxu0 0.0
  %3467 = vmatprep.subr.mxu0 0.0
  %3468 = vmatpush1.msra.mxu0 0.0
  %3469 = vmatprep.subr.mxu0 0.0
  %3470 = vmatpush1.msra.mxu0 0.0
  %3471 = vmatprep.subr.mxu0 0.0
  %3472 = vmatpush1.msra.mxu0 0.0
  %3473 = vmatprep.subr.mxu0 0.0
  %3474 = vmatpush1.msra.mxu0 0.0
  %3475 = vmatprep.subr.mxu0 0.0
  %3476 = vmatpush1.msra.mxu0 0.0
  %3477 = vmatprep.subr.mxu0 0.0
  %3478 = vmatpush1.msra.mxu0 0.0
  %3479 = vmatprep.subr.mxu0 0.0
  %3480 = vmatpush1.msra.mxu0 0.0
  %3481 = vmatprep.subr.mxu0 0.0
  %3482 = vmatpush1.msra.mxu0 0.0
  %3483 = vmatprep.subr.mxu0 0.0
  %3484 = vmatpush1.msra.mxu0 0.0
  %3485 = vmatprep.subr.mxu0 0.0
  %3486 = vmatpush1.msra.mxu0 0.0
  %3487 = vmatprep.subr.mxu0 0.0
  %3488 = vmatpush1.msra.mxu0 0.0
  %3489 = vmatprep.subr.mxu0 0.0
  %3490 = vmatpush1.msra.mxu0 0.0
  %3491 = vmatprep.subr.mxu0 0.0
  %3492 = vmatpush1.msra.mxu0 0.0
  %3493 = vmatprep.subr.mxu0 0.0
  %3494 = vmatpush1.msra.mxu0 0.0
  %3495 = vmatprep.subr.mxu0 0.0
  %3496 = vmatpush1.msra.mxu0 0.0
  %3497 = vmatprep.subr.mxu0 0.0
  %3498 = vmatpush1.msra.mxu0 0.0
  %3499 = vmatprep.subr.mxu0 0.0
  %3500 = vmatpush1.msra.mxu0 0.0
  %3501 = vmatprep.subr.mxu0 0.0
  %3502 = vmatpush1.msra.mxu0 0.0
  %3503 = vmatprep.subr.mxu0 0.0
  %3504 = vmatpush1.msra.mxu0 0.0
  %3505 = vmatprep.subr.mxu0 0.0
  %3506 = vmatpush1.msra.mxu0 0.0
  %3507 = vmatprep.subr.mxu0 0.0
  %3508 = vmatpush1.msra.mxu0 0.0
  %3509 = vmatprep.subr.mxu0 0.0
  %3510 = vmatpush1.msra.mxu0 0.0
  %3511 = vmatprep.subr.mxu0 0.0
  %3512 = vmatpush1.msra.mxu0 0.0
  %3513 = vmatprep.subr.mxu0 0.0
  %3514 = vmatpush1.msra.mxu0 0.0
  %3515 = vmatprep.subr.mxu0 0.0
  %3516 = vmatpush1.msra.mxu0 0.0
  %3517 = vmatprep.subr.mxu0 0.0
  %3518 = vmatpush1.msra.mxu0 0.0
  %3519 = vmatprep.subr.mxu0 0.0
  %3520 = vmatpush1.msra.mxu0 0.0
  %3521 = vmatprep.mubr.f32.mxu0 0.0
  %3522 = vmatmul.mubr.f32.gmra.mrb[0].mxu0 %v3225
  %v3523 = vpop.f32.mrb[0].mxu0
  %v3524 = vadd.f32 %v3454, %v3523
  %v3525 = vpop.f32.mrb[0].mxu0
  %3526 = vdwg.mxu0
  %v3527 = vadd.f32 %v3524, %v2024
  %3528 = vst [vmem:[%s12 + $0x8] sm:$0xff] %v3527
  // Predicated region
  $region50: #{rnn_machine_translate.1} parent=0 // pred_check
    _
  $region51: #{rnn_machine_translate.1} parent=0 // pred_check_branch
    %3530 = sbr.rel (0) target = $region53
  $region52: #{rnn_machine_translate.1} parent=0 // pred_region
    _
  $region53: #{rnn_machine_translate.1} parent=0 // pred_fallthru
    _
  // Predicated region
  $region54: #{rnn_machine_translate.1} parent=0 // pred_check
    _
  $region55: #{rnn_machine_translate.1} parent=0 // pred_check_branch
    %3532 = sbr.rel (0) target = $region57
  $region56: #{rnn_machine_translate.1} parent=0 // pred_region
    _
  $region57: #{rnn_machine_translate.1} parent=0 // pred_fallthru
    _

</llo_original>
